<compile_context>
chip_gen: v7x
topology: tpu7x:2x2x1
jax: 0.10.0
libtpu: 0.0.40
codegen_flags: <defaults>
</compile_context>

<pallas_src>
import functools

import numpy as np
import jax
import jax.numpy as jnp
from jax.experimental import pallas as pl
from jax.experimental.pallas import tpu as pltpu


def cnn_fused_kernel(scal_ref, x_ref, w1t_ref, bc1t_ref, w2t_ref, bc2t_ref,
                     w1m_ref, w1a_ref, b1_ref, w2_ref, b2_ref,
                     o_ref,
                     lhs1_ref, h1_ref, rowsa_ref, pooled_ref, *, n):
    TB, H, W = x_ref.shape                       # (tb, 16, 16)
    KH = w1t_ref.shape[0] // W                   # 3
    H1, W1 = H - KH + 1, W - KH + 1              # 14, 14
    H2, W2 = H1 - KH + 1, W1 - KH + 1            # 12, 12
    ph, pw = H2 // n, W2 // n                    # 3, 3 (uniform adaptive-pool windows)
    C = bc2t_ref.shape[-1] // W2                 # 32
    R = TB * H                                   # row space: H rows per image
    pad_rows = h1_ref.shape[0] - R               # shift slack for the kh-row shifts

    # ---------------- conv1 + ReLU : one MXU matmul over a Toeplitz-expanded weight ---
    # lhs1 rows are (b, i); K = (kh, w) with the raw 16 input columns per kh block.
    lhs1_ref[...] = jnp.zeros_like(lhs1_ref)
    for b in range(TB):
        for kh in range(KH):
            lhs1_ref[b * H:b * H + H1, kh * W:(kh + 1) * W] = x_ref[b, kh:kh + H1, :]
    h1 = jnp.dot(lhs1_ref[...], w1t_ref[...], preferred_element_type=jnp.float32)
    h1 = jnp.maximum(h1 + bc1t_ref[...], 0.0)    # (R, W1*C); rows i >= H1 are junk
    h1_ref[0:R, :] = h1
    h1_ref[R:R + pad_rows, :] = jnp.zeros((pad_rows, W1 * C), jnp.float32)

    # ---------------- conv2 + ReLU : KH row-shifted matmuls, K = W1*C = 448 each ------
    acc2 = jnp.zeros((R, W2 * C), jnp.float32)
    for kh in range(KH):
        acc2 = acc2 + jnp.dot(h1_ref[kh:kh + R, :], w2t_ref[kh],
                              preferred_element_type=jnp.float32)
    h2 = jnp.maximum(acc2 + bc2t_ref[...], 0.0)  # (R, W2*C); rows i >= H2 are junk

    # ---------------- AdaptiveMaxPool2d((n,n)) : element-wise maxima ------------------
    # Step A: max over the pw columns inside each window (lane-block maxima).
    for wj in range(n):
        s = wj * pw * C
        blk = h2[:, s:s + C]
        for dj in range(1, pw):
            blk = jnp.maximum(blk, h2[:, s + dj * C:s + (dj + 1) * C])
        rowsa_ref[:, wj * C:(wj + 1) * C] = blk          # lanes (wj, c)
    # Step B: max over the ph rows inside each window, assembled into (TB, n*n*C).
    for b in range(TB):
        for wi in range(n):
            r0 = b * H + wi * ph
            row = rowsa_ref[r0:r0 + 1, :]
            for di in range(1, ph):
                row = jnp.maximum(row, rowsa_ref[r0 + di:r0 + di + 1, :])
            pooled_ref[b:b + 1, wi * n * C:(wi + 1) * n * C] = row

    # ---------------- fc1 (single K = n*n*C matmul) + omega/N rank-1 bias + ReLU ------
    # (the torch forward applies activation after the pool; the 2nd pool is identity)
    omega = scal_ref[0]
    big_n = scal_ref[1]
    pooled = jnp.maximum(pooled_ref[...], 0.0)           # (TB, 512)
    hfc = jnp.dot(pooled, w1m_ref[...], preferred_element_type=jnp.float32)
    extra = omega * w1a_ref[0:1, :] + big_n * w1a_ref[1:2, :]    # (1, 128)
    hfc = jnp.maximum(hfc + b1_ref[...] + extra, 0.0)            # (TB, 128)

    # ---------------- fc2 : VPU multiply + lane reduction -----------------------------
    o_ref[...] = jnp.sum(hfc * w2_ref[...], axis=-1, keepdims=True) + b2_ref[...]


def cnn_forward(x_nchw, omega, N, kparams, n):
    """Full CNN.forward: x is NCHW (B,1,H,W); returns (B,1)."""
    B, cin, H, W = x_nchw.shape
    assert cin == 1, "first conv layer has a single input channel"
    x3 = x_nchw.reshape(B, H, W).astype(jnp.float32)     # Cin==1: layout-free drop

    w1t, bc1t, w2t, bc2t, w1m, w1a, b1, w2, b2 = kparams
    KH = w1t.shape[0] // W                               # 3
    H1, W1 = H - KH + 1, W - KH + 1
    H2, W2 = H1 - KH + 1, W1 - KH + 1
    C = bc1t.shape[-1] // W1                             # 32
    assert H2 % n == 0 and W2 % n == 0, "kernel assumes uniform adaptive-pool windows"

    tb = B if B <= 8 else 8
    assert B % tb == 0
    grid = (B // tb,)
    R = tb * H

    scal = jnp.asarray([omega, N], jnp.float32)

    def cspec(arr):
        shape = arr.shape
        return pl.BlockSpec(shape, lambda g: (0,) * len(shape))

    kernel = functools.partial(cnn_fused_kernel, n=n)
    return pl.pallas_call(
        kernel,
        out_shape=jax.ShapeDtypeStruct((B, 1), jnp.float32),
        grid=grid,
        in_specs=[
            pl.BlockSpec(memory_space=pltpu.MemorySpace.SMEM),   # omega, N scalars
            pl.BlockSpec((tb, H, W), lambda g: (g, 0, 0)),       # x, blocked over batch
            cspec(w1t), cspec(bc1t), cspec(w2t), cspec(bc2t),    # resident weights
            cspec(w1m), cspec(w1a), cspec(b1), cspec(w2), cspec(b2),
        ],
        out_specs=pl.BlockSpec((tb, 1), lambda g: (g, 0)),
        scratch_shapes=[
            pltpu.VMEM((R, KH * W), jnp.float32),        # conv1 Toeplitz LHS
            pltpu.VMEM((R + 8, W1 * C), jnp.float32),    # h1 (+ row-shift slack)
            pltpu.VMEM((R, n * C), jnp.float32),         # pool step-A rows
            pltpu.VMEM((tb, n * n * C), jnp.float32),    # pooled features (TB, 512)
        ],
        compiler_params=pltpu.CompilerParams(dimension_semantics=("parallel",)),
    )(scal, x3, w1t, bc1t, w2t, bc2t, w1m, w1a, b1, w2, b2)


# ---------------- parameter handling (torch layouts -> kernel layouts, one-time) ------
def init_torch_params(key, n, cnn_layer_num):
    """Random params in the exact torch layouts (OIHW convs, (out,in) linears)."""
    keys = jax.random.split(key, 2 * cnn_layer_num + 4)
    convs = []
    cin = 1
    for i in range(cnn_layer_num):
        w = jax.random.normal(keys[2 * i], (32, cin, 3, 3), jnp.float32) * 0.1
        b = jax.random.normal(keys[2 * i + 1], (32,), jnp.float32) * 0.1
        convs.append((w, b))
        cin = 32
    k = 2 * cnn_layer_num
    w1 = jax.random.normal(keys[k], (128, 32 * n * n + 2), jnp.float32) * 0.05
    b1 = jax.random.normal(keys[k + 1], (128,), jnp.float32) * 0.05
    w2 = jax.random.normal(keys[k + 2], (1, 128), jnp.float32) * 0.05
    b2 = jax.random.normal(keys[k + 3], (1,), jnp.float32) * 0.05
    return {"convs": convs, "fc1": (w1, b1), "fc2": (w2, b2)}


def prepare_kernel_params(tp, n, img_hw):
    """One-time host-side layout conversion (Toeplitz conv weights, permuted fc1 rows)."""
    assert len(tp["convs"]) == 2, "fused kernel is specialized to cnn_layer_num == 2"
    (wc1, bc1), (wc2, bc2) = tp["convs"]
    w1, b1 = tp["fc1"]
    w2, b2 = tp["fc2"]
    wc1 = np.asarray(wc1); bc1 = np.asarray(bc1)
    wc2 = np.asarray(wc2); bc2 = np.asarray(bc2)
    w1 = np.asarray(w1); b1 = np.asarray(b1)
    w2 = np.asarray(w2); b2 = np.asarray(b2)

    C = wc1.shape[0]                      # 32
    KH = wc1.shape[2]                     # 3
    assert wc1.shape == (C, 1, KH, KH) and wc2.shape == (C, C, KH, KH)
    H = W = img_hw
    W1 = W - KH + 1                       # 14
    W2 = W1 - KH + 1                      # 12

    # conv1 Toeplitz weight: (KH*W, W1*C); out[(b,i),(j,c)] = sum_{kh,w} x[b,i+kh,w]*w1t
    w1t = np.zeros((KH, W, W1, C), np.float32)
    for kh in range(KH):
        for j in range(W1):
            for kw in range(KH):
                w1t[kh, j + kw, j, :] = wc1[:, 0, kh, kw]
    w1t = w1t.reshape(KH * W, W1 * C)
    bc1t = np.tile(bc1, W1).reshape(1, W1 * C)

    # conv2 Toeplitz weight per kh: (KH, W1*C, W2*C)
    w2t = np.zeros((KH, W1, C, W2, C), np.float32)
    for kh in range(KH):
        for j2 in range(W2):
            for kw in range(KH):
                w2t[kh, j2 + kw, :, j2, :] = wc2[:, :, kh, kw].T     # (cin, cout)
    w2t = w2t.reshape(KH, W1 * C, W2 * C)
    bc2t = np.tile(bc2, W2).reshape(1, W2 * C)

    # fc1: torch flatten order on the pooled map is (c, wi, wj); permute rows to the
    # kernel's lane order (wi, wj, c).  Columns 512/513 (omega, N) become a rank-1 bias.
    w1_t = w1.T                                                # (32*n*n + 2, 128)
    w1m = (w1_t[:C * n * n].reshape(C, n, n, 128)
           .transpose(1, 2, 0, 3).reshape(C * n * n, 128))
    w1a = w1_t[C * n * n:]                                     # (2, 128)

    arrs = (w1t, bc1t, w2t, bc2t, w1m, w1a,
            b1.reshape(1, -1), w2.reshape(1, -1), b2.reshape(1, 1))
    return tuple(jnp.asarray(a, jnp.float32) for a in arrs)


# ---------------- pure-JAX reference (mirrors the torch forward exactly) --------------
def reference_forward(x_nchw, omega, N, tp, n):
    hp = jax.lax.Precision.HIGHEST
    x = x_nchw
    for (w, b) in tp["convs"]:
        x = jax.lax.conv_general_dilated(
            x, w, (1, 1), "VALID",
            dimension_numbers=("NCHW", "OIHW", "NCHW"),
            precision=hp) + b.reshape(1, -1, 1, 1)
        x = jnp.maximum(x, 0.0)
    B, C, H, W = x.shape
    x = x.reshape(B, C, n, H // n, n, W // n).max(axis=(3, 5))   # AdaptiveMaxPool2d((n,n))
    x = jnp.maximum(x, 0.0)                                      # activation(pool)
    feat = x.reshape(B, -1)                                      # torch .view (c, wi, wj)
    feat = jnp.concatenate([feat,
                            jnp.full((B, 1), omega, jnp.float32),
                            jnp.full((B, 1), N, jnp.float32)], axis=1)
    w1, b1 = tp["fc1"]
    w2, b2 = tp["fc2"]
    h = jnp.maximum(jnp.dot(feat, w1.T, precision=hp) + b1, 0.0)
    return jnp.dot(h, w2.T, precision=hp) + b2


if __name__ == "__main__":
    n = 4
    cnn_layer_num = 2
    key = jax.random.PRNGKey(0)
    pkey, xkey = jax.random.split(key)

    tparams = init_torch_params(pkey, n, cnn_layer_num)
    kparams = prepare_kernel_params(tparams, n, img_hw=16)

    x = jax.random.normal(xkey, (2, 1, 16, 16), jnp.float32)   # NCHW, like the torch module
    omega = 0.5
    N = 10.0

    y = jax.block_until_ready(cnn_forward(x, omega, N, kparams, n))
    y_ref = jax.block_until_ready(reference_forward(x, omega, N, tparams, n))

    assert y.shape == (2, 1) and y.dtype == jnp.float32
    assert jnp.allclose(y, y_ref, rtol=1e-4, atol=1e-5), (y, y_ref)
    print("KERNEL_OK")
</pallas_src>

<mosaic_0001>
module attributes {stable_mosaic.version = 11 : i64} {
  func.func @cnn_fused_kernel(%arg0: i32, %arg1: memref<2xf32, #tpu.memory_space<smem>>, %arg2: memref<2x16x16xf32, #tpu.memory_space<vmem>>, %arg3: memref<48x448xf32, #tpu.memory_space<vmem>>, %arg4: memref<1x448xf32, #tpu.memory_space<vmem>>, %arg5: memref<3x448x384xf32, #tpu.memory_space<vmem>>, %arg6: memref<1x384xf32, #tpu.memory_space<vmem>>, %arg7: memref<512x128xf32, #tpu.memory_space<vmem>>, %arg8: memref<2x128xf32, #tpu.memory_space<vmem>>, %arg9: memref<1x128xf32, #tpu.memory_space<vmem>>, %arg10: memref<1x128xf32, #tpu.memory_space<vmem>>, %arg11: memref<1x1xf32, #tpu.memory_space<vmem>>, %arg12: memref<2x1xf32, #tpu.memory_space<vmem>>, %arg13: memref<32x48xf32, #tpu.memory_space<vmem>>, %arg14: memref<40x448xf32, #tpu.memory_space<vmem>>, %arg15: memref<32x128xf32, #tpu.memory_space<vmem>>, %arg16: memref<2x512xf32, #tpu.memory_space<vmem>>) attributes {dimension_semantics = [#tpu.dimension_semantics<parallel>], iteration_bounds = array<i64: 1>, scalar_prefetch = 0 : i64, scratch_operands = 4 : i64, tpu.core_type = #tpu.core_type<tc>, window_params = [{transform_indices = @transform_0, window_bounds = array<i64: 2>}, {transform_indices = @transform_1, window_bounds = array<i64: 2, 16, 16>}, {pipeline_mode = #tpu.pipeline_mode<synchronous>, transform_indices = @transform_2, window_bounds = array<i64: 48, 448>}, {pipeline_mode = #tpu.pipeline_mode<synchronous>, transform_indices = @transform_3, window_bounds = array<i64: 1, 448>}, {pipeline_mode = #tpu.pipeline_mode<synchronous>, transform_indices = @transform_4, window_bounds = array<i64: 3, 448, 384>}, {pipeline_mode = #tpu.pipeline_mode<synchronous>, transform_indices = @transform_5, window_bounds = array<i64: 1, 384>}, {pipeline_mode = #tpu.pipeline_mode<synchronous>, transform_indices = @transform_6, window_bounds = array<i64: 512, 128>}, {pipeline_mode = #tpu.pipeline_mode<synchronous>, transform_indices = @transform_7, window_bounds = array<i64: 2, 128>}, {pipeline_mode = #tpu.pipeline_mode<synchronous>, transform_indices = @transform_8, window_bounds = array<i64: 1, 128>}, {pipeline_mode = #tpu.pipeline_mode<synchronous>, transform_indices = @transform_9, window_bounds = array<i64: 1, 128>}, {pipeline_mode = #tpu.pipeline_mode<synchronous>, transform_indices = @transform_10, window_bounds = array<i64: 1, 1>}, {transform_indices = @transform_11, window_bounds = array<i64: 2, 1>}]} {
    %cst = arith.constant 0.000000e+00 : f32
    %0 = vector.broadcast %cst : f32 to vector<32x48xf32>
    %c0 = arith.constant 0 : index
    %c0_0 = arith.constant 0 : index
    %1 = vector.load %arg13[%c0, %c0_0] : memref<32x48xf32, #tpu.memory_space<vmem>>, vector<32x48xf32>
    tpu.vector_store %arg13[%c0, %c0_0], %0 {strides = array<i32>} : memref<32x48xf32, #tpu.memory_space<vmem>>, vector<32x48xf32>,
    %c0_1 = arith.constant 0 : index
    %c0_2 = arith.constant 0 : index
    %c0_3 = arith.constant 0 : index
    %2 = vector.load %arg2[%c0_1, %c0_2, %c0_3] : memref<2x16x16xf32, #tpu.memory_space<vmem>>, vector<1x14x16xf32>
    %3 = vector.shape_cast %2 : vector<1x14x16xf32> to vector<14x16xf32>
    %c0_4 = arith.constant 0 : index
    %c0_5 = arith.constant 0 : index
    %4 = vector.load %arg13[%c0_4, %c0_5] : memref<32x48xf32, #tpu.memory_space<vmem>>, vector<14x16xf32>
    tpu.vector_store %arg13[%c0_4, %c0_5], %3 {strides = array<i32>} : memref<32x48xf32, #tpu.memory_space<vmem>>, vector<14x16xf32>,
    %c0_6 = arith.constant 0 : index
    %c1 = arith.constant 1 : index
    %c0_7 = arith.constant 0 : index
    %5 = vector.load %arg2[%c0_6, %c1, %c0_7] : memref<2x16x16xf32, #tpu.memory_space<vmem>>, vector<1x14x16xf32>
    %6 = vector.shape_cast %5 : vector<1x14x16xf32> to vector<14x16xf32>
    %c0_8 = arith.constant 0 : index
    %c16 = arith.constant 16 : index
    %7 = vector.load %arg13[%c0_8, %c16] : memref<32x48xf32, #tpu.memory_space<vmem>>, vector<14x16xf32>
    tpu.vector_store %arg13[%c0_8, %c16], %6 {strides = array<i32>} : memref<32x48xf32, #tpu.memory_space<vmem>>, vector<14x16xf32>,
    %c0_9 = arith.constant 0 : index
    %c2 = arith.constant 2 : index
    %c0_10 = arith.constant 0 : index
    %8 = vector.load %arg2[%c0_9, %c2, %c0_10] : memref<2x16x16xf32, #tpu.memory_space<vmem>>, vector<1x14x16xf32>
    %9 = vector.shape_cast %8 : vector<1x14x16xf32> to vector<14x16xf32>
    %c0_11 = arith.constant 0 : index
    %c32 = arith.constant 32 : index
    %10 = vector.load %arg13[%c0_11, %c32] : memref<32x48xf32, #tpu.memory_space<vmem>>, vector<14x16xf32>
    tpu.vector_store %arg13[%c0_11, %c32], %9 {strides = array<i32>} : memref<32x48xf32, #tpu.memory_space<vmem>>, vector<14x16xf32>,
    %c1_12 = arith.constant 1 : index
    %c0_13 = arith.constant 0 : index
    %c0_14 = arith.constant 0 : index
    %11 = vector.load %arg2[%c1_12, %c0_13, %c0_14] : memref<2x16x16xf32, #tpu.memory_space<vmem>>, vector<1x14x16xf32>
    %12 = vector.shape_cast %11 : vector<1x14x16xf32> to vector<14x16xf32>
    %c16_15 = arith.constant 16 : index
    %c0_16 = arith.constant 0 : index
    %13 = vector.load %arg13[%c16_15, %c0_16] : memref<32x48xf32, #tpu.memory_space<vmem>>, vector<14x16xf32>
    tpu.vector_store %arg13[%c16_15, %c0_16], %12 {strides = array<i32>} : memref<32x48xf32, #tpu.memory_space<vmem>>, vector<14x16xf32>,
    %c1_17 = arith.constant 1 : index
    %c1_18 = arith.constant 1 : index
    %c0_19 = arith.constant 0 : index
    %14 = vector.load %arg2[%c1_17, %c1_18, %c0_19] : memref<2x16x16xf32, #tpu.memory_space<vmem>>, vector<1x14x16xf32>
    %15 = vector.shape_cast %14 : vector<1x14x16xf32> to vector<14x16xf32>
    %c16_20 = arith.constant 16 : index
    %c16_21 = arith.constant 16 : index
    %16 = vector.load %arg13[%c16_20, %c16_21] : memref<32x48xf32, #tpu.memory_space<vmem>>, vector<14x16xf32>
    tpu.vector_store %arg13[%c16_20, %c16_21], %15 {strides = array<i32>} : memref<32x48xf32, #tpu.memory_space<vmem>>, vector<14x16xf32>,
    %c1_22 = arith.constant 1 : index
    %c2_23 = arith.constant 2 : index
    %c0_24 = arith.constant 0 : index
    %17 = vector.load %arg2[%c1_22, %c2_23, %c0_24] : memref<2x16x16xf32, #tpu.memory_space<vmem>>, vector<1x14x16xf32>
    %18 = vector.shape_cast %17 : vector<1x14x16xf32> to vector<14x16xf32>
    %c16_25 = arith.constant 16 : index
    %c32_26 = arith.constant 32 : index
    %19 = vector.load %arg13[%c16_25, %c32_26] : memref<32x48xf32, #tpu.memory_space<vmem>>, vector<14x16xf32>
    tpu.vector_store %arg13[%c16_25, %c32_26], %18 {strides = array<i32>} : memref<32x48xf32, #tpu.memory_space<vmem>>, vector<14x16xf32>,
    %c0_27 = arith.constant 0 : index
    %c0_28 = arith.constant 0 : index
    %20 = vector.load %arg13[%c0_27, %c0_28] : memref<32x48xf32, #tpu.memory_space<vmem>>, vector<32x48xf32>
    %c0_29 = arith.constant 0 : index
    %c0_30 = arith.constant 0 : index
    %21 = vector.load %arg3[%c0_29, %c0_30] : memref<48x448xf32, #tpu.memory_space<vmem>>, vector<48x448xf32>
    %cst_31 = arith.constant dense<0.000000e+00> : vector<32x448xf32>
    %22 = tpu.matmul %20, %21, %cst_31 {dimension_numbers = #tpu.dot_dimension_numbers<[1], [0], [0], [1], [0, 0, 1, 1], [], []>} : vector<32x48xf32>, vector<48x448xf32>, vector<32x448xf32> -> vector<32x448xf32>
    %c0_32 = arith.constant 0 : index
    %c0_33 = arith.constant 0 : index
    %23 = vector.load %arg4[%c0_32, %c0_33] : memref<1x448xf32, #tpu.memory_space<vmem>>, vector<1x448xf32>
    %24 = vector.broadcast %23 : vector<1x448xf32> to vector<32x448xf32>
    %25 = arith.addf %22, %24 : vector<32x448xf32>
    %cst_34 = arith.constant 0.000000e+00 : f32
    %26 = vector.broadcast %cst_34 : f32 to vector<32x448xf32>
    %27 = arith.maximumf %25, %26 : vector<32x448xf32>
    %c0_35 = arith.constant 0 : index
    %c0_36 = arith.constant 0 : index
    %28 = vector.load %arg14[%c0_35, %c0_36] : memref<40x448xf32, #tpu.memory_space<vmem>>, vector<32x448xf32>
    tpu.vector_store %arg14[%c0_35, %c0_36], %27 {strides = array<i32>} : memref<40x448xf32, #tpu.memory_space<vmem>>, vector<32x448xf32>,
    %cst_37 = arith.constant 0.000000e+00 : f32
    %29 = vector.broadcast %cst_37 : f32 to vector<8x448xf32>
    %c32_38 = arith.constant 32 : index
    %c0_39 = arith.constant 0 : index
    %30 = vector.load %arg14[%c32_38, %c0_39] : memref<40x448xf32, #tpu.memory_space<vmem>>, vector<8x448xf32>
    tpu.vector_store %arg14[%c32_38, %c0_39], %29 {strides = array<i32>} : memref<40x448xf32, #tpu.memory_space<vmem>>, vector<8x448xf32>,
    %cst_40 = arith.constant 0.000000e+00 : f32
    %31 = vector.broadcast %cst_40 : f32 to vector<32x384xf32>
    %c0_41 = arith.constant 0 : index
    %c0_42 = arith.constant 0 : index
    %32 = vector.load %arg14[%c0_41, %c0_42] : memref<40x448xf32, #tpu.memory_space<vmem>>, vector<32x448xf32>
    %c0_43 = arith.constant 0 : index
    %c0_44 = arith.constant 0 : index
    %c0_45 = arith.constant 0 : index
    %33 = vector.load %arg5[%c0_43, %c0_44, %c0_45] : memref<3x448x384xf32, #tpu.memory_space<vmem>>, vector<1x448x384xf32>
    %34 = vector.shape_cast %33 : vector<1x448x384xf32> to vector<448x384xf32>
    %cst_46 = arith.constant dense<0.000000e+00> : vector<32x384xf32>
    %35 = tpu.matmul %32, %34, %cst_46 {dimension_numbers = #tpu.dot_dimension_numbers<[1], [0], [0], [1], [0, 0, 1, 1], [], []>} : vector<32x448xf32>, vector<448x384xf32>, vector<32x384xf32> -> vector<32x384xf32>
    %36 = arith.addf %31, %35 : vector<32x384xf32>
    %c1_47 = arith.constant 1 : index
    %c0_48 = arith.constant 0 : index
    %37 = vector.load %arg14[%c1_47, %c0_48] : memref<40x448xf32, #tpu.memory_space<vmem>>, vector<32x448xf32>
    %c1_49 = arith.constant 1 : index
    %c0_50 = arith.constant 0 : index
    %c0_51 = arith.constant 0 : index
    %38 = vector.load %arg5[%c1_49, %c0_50, %c0_51] : memref<3x448x384xf32, #tpu.memory_space<vmem>>, vector<1x448x384xf32>
    %39 = vector.shape_cast %38 : vector<1x448x384xf32> to vector<448x384xf32>
    %cst_52 = arith.constant dense<0.000000e+00> : vector<32x384xf32>
    %40 = tpu.matmul %37, %39, %cst_52 {dimension_numbers = #tpu.dot_dimension_numbers<[1], [0], [0], [1], [0, 0, 1, 1], [], []>} : vector<32x448xf32>, vector<448x384xf32>, vector<32x384xf32> -> vector<32x384xf32>
    %41 = arith.addf %36, %40 : vector<32x384xf32>
    %c2_53 = arith.constant 2 : index
    %c0_54 = arith.constant 0 : index
    %42 = vector.load %arg14[%c2_53, %c0_54] : memref<40x448xf32, #tpu.memory_space<vmem>>, vector<32x448xf32>
    %c2_55 = arith.constant 2 : index
    %c0_56 = arith.constant 0 : index
    %c0_57 = arith.constant 0 : index
    %43 = vector.load %arg5[%c2_55, %c0_56, %c0_57] : memref<3x448x384xf32, #tpu.memory_space<vmem>>, vector<1x448x384xf32>
    %44 = vector.shape_cast %43 : vector<1x448x384xf32> to vector<448x384xf32>
    %cst_58 = arith.constant dense<0.000000e+00> : vector<32x384xf32>
    %45 = tpu.matmul %42, %44, %cst_58 {dimension_numbers = #tpu.dot_dimension_numbers<[1], [0], [0], [1], [0, 0, 1, 1], [], []>} : vector<32x448xf32>, vector<448x384xf32>, vector<32x384xf32> -> vector<32x384xf32>
    %46 = arith.addf %41, %45 : vector<32x384xf32>
    %c0_59 = arith.constant 0 : index
    %c0_60 = arith.constant 0 : index
    %47 = vector.load %arg6[%c0_59, %c0_60] : memref<1x384xf32, #tpu.memory_space<vmem>>, vector<1x384xf32>
    %48 = vector.broadcast %47 : vector<1x384xf32> to vector<32x384xf32>
    %49 = arith.addf %46, %48 : vector<32x384xf32>
    %cst_61 = arith.constant 0.000000e+00 : f32
    %50 = vector.broadcast %cst_61 : f32 to vector<32x384xf32>
    %51 = arith.maximumf %49, %50 : vector<32x384xf32>
    %52 = vector.extract_strided_slice %51 {offsets = [0, 0], sizes = [32, 32], strides = [1, 1]} : vector<32x384xf32> to vector<32x32xf32>
    %53 = vector.extract_strided_slice %51 {offsets = [0, 32], sizes = [32, 32], strides = [1, 1]} : vector<32x384xf32> to vector<32x32xf32>
    %54 = arith.maximumf %52, %53 : vector<32x32xf32>
    %55 = vector.extract_strided_slice %51 {offsets = [0, 64], sizes = [32, 32], strides = [1, 1]} : vector<32x384xf32> to vector<32x32xf32>
    %56 = arith.maximumf %54, %55 : vector<32x32xf32>
    %c0_62 = arith.constant 0 : index
    %c0_63 = arith.constant 0 : index
    %57 = vector.load %arg15[%c0_62, %c0_63] : memref<32x128xf32, #tpu.memory_space<vmem>>, vector<32x32xf32>
    tpu.vector_store %arg15[%c0_62, %c0_63], %56 {strides = array<i32>} : memref<32x128xf32, #tpu.memory_space<vmem>>, vector<32x32xf32>,
    %58 = vector.extract_strided_slice %51 {offsets = [0, 96], sizes = [32, 32], strides = [1, 1]} : vector<32x384xf32> to vector<32x32xf32>
    %59 = vector.extract_strided_slice %51 {offsets = [0, 128], sizes = [32, 32], strides = [1, 1]} : vector<32x384xf32> to vector<32x32xf32>
    %60 = arith.maximumf %58, %59 : vector<32x32xf32>
    %61 = vector.extract_strided_slice %51 {offsets = [0, 160], sizes = [32, 32], strides = [1, 1]} : vector<32x384xf32> to vector<32x32xf32>
    %62 = arith.maximumf %60, %61 : vector<32x32xf32>
    %c0_64 = arith.constant 0 : index
    %c32_65 = arith.constant 32 : index
    %63 = vector.load %arg15[%c0_64, %c32_65] : memref<32x128xf32, #tpu.memory_space<vmem>>, vector<32x32xf32>
    tpu.vector_store %arg15[%c0_64, %c32_65], %62 {strides = array<i32>} : memref<32x128xf32, #tpu.memory_space<vmem>>, vector<32x32xf32>,
    %64 = vector.extract_strided_slice %51 {offsets = [0, 192], sizes = [32, 32], strides = [1, 1]} : vector<32x384xf32> to vector<32x32xf32>
    %65 = vector.extract_strided_slice %51 {offsets = [0, 224], sizes = [32, 32], strides = [1, 1]} : vector<32x384xf32> to vector<32x32xf32>
    %66 = arith.maximumf %64, %65 : vector<32x32xf32>
    %67 = vector.extract_strided_slice %51 {offsets = [0, 256], sizes = [32, 32], strides = [1, 1]} : vector<32x384xf32> to vector<32x32xf32>
    %68 = arith.maximumf %66, %67 : vector<32x32xf32>
    %c0_66 = arith.constant 0 : index
    %c64 = arith.constant 64 : index
    %69 = vector.load %arg15[%c0_66, %c64] : memref<32x128xf32, #tpu.memory_space<vmem>>, vector<32x32xf32>
    tpu.vector_store %arg15[%c0_66, %c64], %68 {strides = array<i32>} : memref<32x128xf32, #tpu.memory_space<vmem>>, vector<32x32xf32>,
    %70 = vector.extract_strided_slice %51 {offsets = [0, 288], sizes = [32, 32], strides = [1, 1]} : vector<32x384xf32> to vector<32x32xf32>
    %71 = vector.extract_strided_slice %51 {offsets = [0, 320], sizes = [32, 32], strides = [1, 1]} : vector<32x384xf32> to vector<32x32xf32>
    %72 = arith.maximumf %70, %71 : vector<32x32xf32>
    %73 = vector.extract_strided_slice %51 {offsets = [0, 352], sizes = [32, 32], strides = [1, 1]} : vector<32x384xf32> to vector<32x32xf32>
    %74 = arith.maximumf %72, %73 : vector<32x32xf32>
    %c0_67 = arith.constant 0 : index
    %c96 = arith.constant 96 : index
    %75 = vector.load %arg15[%c0_67, %c96] : memref<32x128xf32, #tpu.memory_space<vmem>>, vector<32x32xf32>
    tpu.vector_store %arg15[%c0_67, %c96], %74 {strides = array<i32>} : memref<32x128xf32, #tpu.memory_space<vmem>>, vector<32x32xf32>,
    %c0_68 = arith.constant 0 : index
    %c0_69 = arith.constant 0 : index
    %76 = vector.load %arg15[%c0_68, %c0_69] : memref<32x128xf32, #tpu.memory_space<vmem>>, vector<1x128xf32>
    %c1_70 = arith.constant 1 : index
    %c0_71 = arith.constant 0 : index
    %77 = vector.load %arg15[%c1_70, %c0_71] : memref<32x128xf32, #tpu.memory_space<vmem>>, vector<1x128xf32>
    %78 = arith.maximumf %76, %77 : vector<1x128xf32>
    %c2_72 = arith.constant 2 : index
    %c0_73 = arith.constant 0 : index
    %79 = vector.load %arg15[%c2_72, %c0_73] : memref<32x128xf32, #tpu.memory_space<vmem>>, vector<1x128xf32>
    %80 = arith.maximumf %78, %79 : vector<1x128xf32>
    %c0_74 = arith.constant 0 : index
    %c0_75 = arith.constant 0 : index
    %81 = vector.load %arg16[%c0_74, %c0_75] : memref<2x512xf32, #tpu.memory_space<vmem>>, vector<1x128xf32>
    tpu.vector_store %arg16[%c0_74, %c0_75], %80 {strides = array<i32>} : memref<2x512xf32, #tpu.memory_space<vmem>>, vector<1x128xf32>,
    %c3 = arith.constant 3 : index
    %c0_76 = arith.constant 0 : index
    %82 = vector.load %arg15[%c3, %c0_76] : memref<32x128xf32, #tpu.memory_space<vmem>>, vector<1x128xf32>
    %c4 = arith.constant 4 : index
    %c0_77 = arith.constant 0 : index
    %83 = vector.load %arg15[%c4, %c0_77] : memref<32x128xf32, #tpu.memory_space<vmem>>, vector<1x128xf32>
    %84 = arith.maximumf %82, %83 : vector<1x128xf32>
    %c5 = arith.constant 5 : index
    %c0_78 = arith.constant 0 : index
    %85 = vector.load %arg15[%c5, %c0_78] : memref<32x128xf32, #tpu.memory_space<vmem>>, vector<1x128xf32>
    %86 = arith.maximumf %84, %85 : vector<1x128xf32>
    %c0_79 = arith.constant 0 : index
    %c128 = arith.constant 128 : index
    %87 = vector.load %arg16[%c0_79, %c128] : memref<2x512xf32, #tpu.memory_space<vmem>>, vector<1x128xf32>
    tpu.vector_store %arg16[%c0_79, %c128], %86 {strides = array<i32>} : memref<2x512xf32, #tpu.memory_space<vmem>>, vector<1x128xf32>,
    %c6 = arith.constant 6 : index
    %c0_80 = arith.constant 0 : index
    %88 = vector.load %arg15[%c6, %c0_80] : memref<32x128xf32, #tpu.memory_space<vmem>>, vector<1x128xf32>
    %c7 = arith.constant 7 : index
    %c0_81 = arith.constant 0 : index
    %89 = vector.load %arg15[%c7, %c0_81] : memref<32x128xf32, #tpu.memory_space<vmem>>, vector<1x128xf32>
    %90 = arith.maximumf %88, %89 : vector<1x128xf32>
    %c8 = arith.constant 8 : index
    %c0_82 = arith.constant 0 : index
    %91 = vector.load %arg15[%c8, %c0_82] : memref<32x128xf32, #tpu.memory_space<vmem>>, vector<1x128xf32>
    %92 = arith.maximumf %90, %91 : vector<1x128xf32>
    %c0_83 = arith.constant 0 : index
    %c256 = arith.constant 256 : index
    %93 = vector.load %arg16[%c0_83, %c256] : memref<2x512xf32, #tpu.memory_space<vmem>>, vector<1x128xf32>
    tpu.vector_store %arg16[%c0_83, %c256], %92 {strides = array<i32>} : memref<2x512xf32, #tpu.memory_space<vmem>>, vector<1x128xf32>,
    %c9 = arith.constant 9 : index
    %c0_84 = arith.constant 0 : index
    %94 = vector.load %arg15[%c9, %c0_84] : memref<32x128xf32, #tpu.memory_space<vmem>>, vector<1x128xf32>
    %c10 = arith.constant 10 : index
    %c0_85 = arith.constant 0 : index
    %95 = vector.load %arg15[%c10, %c0_85] : memref<32x128xf32, #tpu.memory_space<vmem>>, vector<1x128xf32>
    %96 = arith.maximumf %94, %95 : vector<1x128xf32>
    %c11 = arith.constant 11 : index
    %c0_86 = arith.constant 0 : index
    %97 = vector.load %arg15[%c11, %c0_86] : memref<32x128xf32, #tpu.memory_space<vmem>>, vector<1x128xf32>
    %98 = arith.maximumf %96, %97 : vector<1x128xf32>
    %c0_87 = arith.constant 0 : index
    %c384 = arith.constant 384 : index
    %99 = vector.load %arg16[%c0_87, %c384] : memref<2x512xf32, #tpu.memory_space<vmem>>, vector<1x128xf32>
    tpu.vector_store %arg16[%c0_87, %c384], %98 {strides = array<i32>} : memref<2x512xf32, #tpu.memory_space<vmem>>, vector<1x128xf32>,
    %c16_88 = arith.constant 16 : index
    %c0_89 = arith.constant 0 : index
    %100 = vector.load %arg15[%c16_88, %c0_89] : memref<32x128xf32, #tpu.memory_space<vmem>>, vector<1x128xf32>
    %c17 = arith.constant 17 : index
    %c0_90 = arith.constant 0 : index
    %101 = vector.load %arg15[%c17, %c0_90] : memref<32x128xf32, #tpu.memory_space<vmem>>, vector<1x128xf32>
    %102 = arith.maximumf %100, %101 : vector<1x128xf32>
    %c18 = arith.constant 18 : index
    %c0_91 = arith.constant 0 : index
    %103 = vector.load %arg15[%c18, %c0_91] : memref<32x128xf32, #tpu.memory_space<vmem>>, vector<1x128xf32>
    %104 = arith.maximumf %102, %103 : vector<1x128xf32>
    %c1_92 = arith.constant 1 : index
    %c0_93 = arith.constant 0 : index
    %105 = vector.load %arg16[%c1_92, %c0_93] : memref<2x512xf32, #tpu.memory_space<vmem>>, vector<1x128xf32>
    tpu.vector_store %arg16[%c1_92, %c0_93], %104 {strides = array<i32>} : memref<2x512xf32, #tpu.memory_space<vmem>>, vector<1x128xf32>,
    %c19 = arith.constant 19 : index
    %c0_94 = arith.constant 0 : index
    %106 = vector.load %arg15[%c19, %c0_94] : memref<32x128xf32, #tpu.memory_space<vmem>>, vector<1x128xf32>
    %c20 = arith.constant 20 : index
    %c0_95 = arith.constant 0 : index
    %107 = vector.load %arg15[%c20, %c0_95] : memref<32x128xf32, #tpu.memory_space<vmem>>, vector<1x128xf32>
    %108 = arith.maximumf %106, %107 : vector<1x128xf32>
    %c21 = arith.constant 21 : index
    %c0_96 = arith.constant 0 : index
    %109 = vector.load %arg15[%c21, %c0_96] : memref<32x128xf32, #tpu.memory_space<vmem>>, vector<1x128xf32>
    %110 = arith.maximumf %108, %109 : vector<1x128xf32>
    %c1_97 = arith.constant 1 : index
    %c128_98 = arith.constant 128 : index
    %111 = vector.load %arg16[%c1_97, %c128_98] : memref<2x512xf32, #tpu.memory_space<vmem>>, vector<1x128xf32>
    tpu.vector_store %arg16[%c1_97, %c128_98], %110 {strides = array<i32>} : memref<2x512xf32, #tpu.memory_space<vmem>>, vector<1x128xf32>,
    %c22 = arith.constant 22 : index
    %c0_99 = arith.constant 0 : index
    %112 = vector.load %arg15[%c22, %c0_99] : memref<32x128xf32, #tpu.memory_space<vmem>>, vector<1x128xf32>
    %c23 = arith.constant 23 : index
    %c0_100 = arith.constant 0 : index
    %113 = vector.load %arg15[%c23, %c0_100] : memref<32x128xf32, #tpu.memory_space<vmem>>, vector<1x128xf32>
    %114 = arith.maximumf %112, %113 : vector<1x128xf32>
    %c24 = arith.constant 24 : index
    %c0_101 = arith.constant 0 : index
    %115 = vector.load %arg15[%c24, %c0_101] : memref<32x128xf32, #tpu.memory_space<vmem>>, vector<1x128xf32>
    %116 = arith.maximumf %114, %115 : vector<1x128xf32>
    %c1_102 = arith.constant 1 : index
    %c256_103 = arith.constant 256 : index
    %117 = vector.load %arg16[%c1_102, %c256_103] : memref<2x512xf32, #tpu.memory_space<vmem>>, vector<1x128xf32>
    tpu.vector_store %arg16[%c1_102, %c256_103], %116 {strides = array<i32>} : memref<2x512xf32, #tpu.memory_space<vmem>>, vector<1x128xf32>,
    %c25 = arith.constant 25 : index
    %c0_104 = arith.constant 0 : index
    %118 = vector.load %arg15[%c25, %c0_104] : memref<32x128xf32, #tpu.memory_space<vmem>>, vector<1x128xf32>
    %c26 = arith.constant 26 : index
    %c0_105 = arith.constant 0 : index
    %119 = vector.load %arg15[%c26, %c0_105] : memref<32x128xf32, #tpu.memory_space<vmem>>, vector<1x128xf32>
    %120 = arith.maximumf %118, %119 : vector<1x128xf32>
    %c27 = arith.constant 27 : index
    %c0_106 = arith.constant 0 : index
    %121 = vector.load %arg15[%c27, %c0_106] : memref<32x128xf32, #tpu.memory_space<vmem>>, vector<1x128xf32>
    %122 = arith.maximumf %120, %121 : vector<1x128xf32>
    %c1_107 = arith.constant 1 : index
    %c384_108 = arith.constant 384 : index
    %123 = vector.load %arg16[%c1_107, %c384_108] : memref<2x512xf32, #tpu.memory_space<vmem>>, vector<1x128xf32>
    tpu.vector_store %arg16[%c1_107, %c384_108], %122 {strides = array<i32>} : memref<2x512xf32, #tpu.memory_space<vmem>>, vector<1x128xf32>,
    %c0_109 = arith.constant 0 : index
    %124 = memref.load %arg1[%c0_109] : memref<2xf32, #tpu.memory_space<smem>>
    %c1_110 = arith.constant 1 : index
    %125 = memref.load %arg1[%c1_110] : memref<2xf32, #tpu.memory_space<smem>>
    %c0_111 = arith.constant 0 : index
    %c0_112 = arith.constant 0 : index
    %126 = vector.load %arg16[%c0_111, %c0_112] : memref<2x512xf32, #tpu.memory_space<vmem>>, vector<2x512xf32>
    %cst_113 = arith.constant 0.000000e+00 : f32
    %127 = vector.broadcast %cst_113 : f32 to vector<2x512xf32>
    %128 = arith.maximumf %126, %127 : vector<2x512xf32>
    %c0_114 = arith.constant 0 : index
    %c0_115 = arith.constant 0 : index
    %129 = vector.load %arg7[%c0_114, %c0_115] : memref<512x128xf32, #tpu.memory_space<vmem>>, vector<512x128xf32>
    %cst_116 = arith.constant dense<0.000000e+00> : vector<2x128xf32>
    %130 = tpu.matmul %128, %129, %cst_116 {dimension_numbers = #tpu.dot_dimension_numbers<[1], [0], [0], [1], [0, 0, 1, 1], [], []>} : vector<2x512xf32>, vector<512x128xf32>, vector<2x128xf32> -> vector<2x128xf32>
    %c0_117 = arith.constant 0 : index
    %c0_118 = arith.constant 0 : index
    %131 = vector.load %arg8[%c0_117, %c0_118] : memref<2x128xf32, #tpu.memory_space<vmem>>, vector<1x128xf32>
    %132 = vector.broadcast %124 : f32 to vector<1x128xf32>
    %133 = arith.mulf %132, %131 : vector<1x128xf32>
    %c1_119 = arith.constant 1 : index
    %c0_120 = arith.constant 0 : index
    %134 = vector.load %arg8[%c1_119, %c0_120] : memref<2x128xf32, #tpu.memory_space<vmem>>, vector<1x128xf32>
    %135 = vector.broadcast %125 : f32 to vector<1x128xf32>
    %136 = arith.mulf %135, %134 : vector<1x128xf32>
    %137 = arith.addf %133, %136 : vector<1x128xf32>
    %c0_121 = arith.constant 0 : index
    %c0_122 = arith.constant 0 : index
    %138 = vector.load %arg9[%c0_121, %c0_122] : memref<1x128xf32, #tpu.memory_space<vmem>>, vector<1x128xf32>
    %139 = vector.broadcast %138 : vector<1x128xf32> to vector<2x128xf32>
    %140 = arith.addf %130, %139 : vector<2x128xf32>
    %141 = vector.broadcast %137 : vector<1x128xf32> to vector<2x128xf32>
    %142 = arith.addf %140, %141 : vector<2x128xf32>
    %cst_123 = arith.constant 0.000000e+00 : f32
    %143 = vector.broadcast %cst_123 : f32 to vector<2x128xf32>
    %144 = arith.maximumf %142, %143 : vector<2x128xf32>
    %c0_124 = arith.constant 0 : index
    %c0_125 = arith.constant 0 : index
    %145 = vector.load %arg10[%c0_124, %c0_125] : memref<1x128xf32, #tpu.memory_space<vmem>>, vector<1x128xf32>
    %146 = vector.broadcast %145 : vector<1x128xf32> to vector<2x128xf32>
    %147 = arith.mulf %144, %146 : vector<2x128xf32>
    %cst_126 = arith.constant dense<0.000000e+00> : vector<2xf32>
    %148 = vector.multi_reduction <add>, %147, %cst_126 [1] : vector<2x128xf32> to vector<2xf32>
    %149 = vector.shape_cast %148 : vector<2xf32> to vector<2x1xf32>
    %c0_127 = arith.constant 0 : index
    %c0_128 = arith.constant 0 : index
    %150 = vector.load %arg11[%c0_127, %c0_128] : memref<1x1xf32, #tpu.memory_space<vmem>>, vector<1x1xf32>
    %151 = vector.broadcast %150 : vector<1x1xf32> to vector<2x1xf32>
    %152 = arith.addf %149, %151 : vector<2x1xf32>
    %c0_129 = arith.constant 0 : index
    %c0_130 = arith.constant 0 : index
    %153 = vector.load %arg12[%c0_129, %c0_130] : memref<2x1xf32, #tpu.memory_space<vmem>>, vector<2x1xf32>
    tpu.vector_store %arg12[%c0_129, %c0_130], %152 {strides = array<i32>} : memref<2x1xf32, #tpu.memory_space<vmem>>, vector<2x1xf32>,
    return
  }
  func.func @transform_0(%arg0: i32) -> i32 {
    %c0_i32 = arith.constant 0 : i32
    %c0_i32_0 = arith.constant 0 : i32
    return %c0_i32 : i32
  }
  func.func @transform_1(%arg0: i32) -> (i32, i32, i32) {
    %c0_i32 = arith.constant 0 : i32
    %c0_i32_0 = arith.constant 0 : i32
    %c0_i32_1 = arith.constant 0 : i32
    return %arg0, %c0_i32, %c0_i32_0 : i32, i32, i32
  }
  func.func @transform_2(%arg0: i32) -> (i32, i32) {
    %c0_i32 = arith.constant 0 : i32
    %c0_i32_0 = arith.constant 0 : i32
    %c0_i32_1 = arith.constant 0 : i32
    return %c0_i32, %c0_i32_0 : i32, i32
  }
  func.func @transform_3(%arg0: i32) -> (i32, i32) {
    %c0_i32 = arith.constant 0 : i32
    %c0_i32_0 = arith.constant 0 : i32
    %c0_i32_1 = arith.constant 0 : i32
    return %c0_i32, %c0_i32_0 : i32, i32
  }
  func.func @transform_4(%arg0: i32) -> (i32, i32, i32) {
    %c0_i32 = arith.constant 0 : i32
    %c0_i32_0 = arith.constant 0 : i32
    %c0_i32_1 = arith.constant 0 : i32
    %c0_i32_2 = arith.constant 0 : i32
    return %c0_i32, %c0_i32_0, %c0_i32_1 : i32, i32, i32
  }
  func.func @transform_5(%arg0: i32) -> (i32, i32) {
    %c0_i32 = arith.constant 0 : i32
    %c0_i32_0 = arith.constant 0 : i32
    %c0_i32_1 = arith.constant 0 : i32
    return %c0_i32, %c0_i32_0 : i32, i32
  }
  func.func @transform_6(%arg0: i32) -> (i32, i32) {
    %c0_i32 = arith.constant 0 : i32
    %c0_i32_0 = arith.constant 0 : i32
    %c0_i32_1 = arith.constant 0 : i32
    return %c0_i32, %c0_i32_0 : i32, i32
  }
  func.func @transform_7(%arg0: i32) -> (i32, i32) {
    %c0_i32 = arith.constant 0 : i32
    %c0_i32_0 = arith.constant 0 : i32
    %c0_i32_1 = arith.constant 0 : i32
    return %c0_i32, %c0_i32_0 : i32, i32
  }
  func.func @transform_8(%arg0: i32) -> (i32, i32) {
    %c0_i32 = arith.constant 0 : i32
    %c0_i32_0 = arith.constant 0 : i32
    %c0_i32_1 = arith.constant 0 : i32
    return %c0_i32, %c0_i32_0 : i32, i32
  }
  func.func @transform_9(%arg0: i32) -> (i32, i32) {
    %c0_i32 = arith.constant 0 : i32
    %c0_i32_0 = arith.constant 0 : i32
    %c0_i32_1 = arith.constant 0 : i32
    return %c0_i32, %c0_i32_0 : i32, i32
  }
  func.func @transform_10(%arg0: i32) -> (i32, i32) {
    %c0_i32 = arith.constant 0 : i32
    %c0_i32_0 = arith.constant 0 : i32
    %c0_i32_1 = arith.constant 0 : i32
    return %c0_i32, %c0_i32_0 : i32, i32
  }
  func.func @transform_11(%arg0: i32) -> (i32, i32) {
    %c0_i32 = arith.constant 0 : i32
    %c0_i32_0 = arith.constant 0 : i32
    return %arg0, %c0_i32 : i32, i32
  }
}

</mosaic_0001>

<llo_original>
// kernel: tpu_custom_call.1
$region0: #{tpu_custom_call.1}
  #allocation0 [shape = 'u32[]', space=smem, size = 0x4, offset = 0x4, fixed_abs, tag = 'smem constant byte address 0x4 - core index']
  #allocation1 [shape = 'u32[144,128]{1,0:T(1,128)}', space=vmem, size = 0x12000, scoped, tag = 'internal scratch']
  #allocation2 [shape = 'f32[32,48]{1,0:T(8,128)}', space=vmem, size = 0x4000, scoped, tag = 'scratch operand']
  #allocation3 [shape = 'f32[40,448]{1,0:T(8,128)}', space=vmem, size = 0x14000, scoped, tag = 'scratch operand']
  #allocation4 [shape = 'f32[32,128]{1,0:T(8,128)}', space=vmem, size = 0x4000, scoped, tag = 'scratch operand']
  #allocation5 [shape = 'f32[2,512]{1,0:T(2,128)}', space=vmem, size = 0x1000, scoped, tag = 'scratch operand']
  #allocation6 [shape = 'f32[1,1]{1,0:T(1,128)S(1)}', space=vmem, size = 0x200, scoped, tag = 'scoped memory for tpu_custom_call.1']
  %s0 = inlined_call_operand.hbm [shape: f32[2], index: 0, kind: input, shape index: {}]
  %s1 = inlined_call_operand.hbm [shape: f32[2,16,16], index: 1, kind: input, shape index: {}]
  %s2 = inlined_call_operand.hbm [shape: f32[48,448], index: 2, kind: input, shape index: {}]
  %s3 = inlined_call_operand.hbm [shape: f32[1,448], index: 3, kind: input, shape index: {}]
  %s4 = inlined_call_operand.hbm [shape: f32[3,448,384], index: 4, kind: input, shape index: {}]
  %s5 = inlined_call_operand.hbm [shape: f32[1,384], index: 5, kind: input, shape index: {}]
  %s6 = inlined_call_operand.hbm [shape: f32[512,128], index: 6, kind: input, shape index: {}]
  %s7 = inlined_call_operand.hbm [shape: f32[2,128], index: 7, kind: input, shape index: {}]
  %s8 = inlined_call_operand.hbm [shape: f32[1,128], index: 8, kind: input, shape index: {}]
  %s9 = inlined_call_operand.hbm [shape: f32[1,128], index: 9, kind: input, shape index: {}]
  %s10 = inlined_call_operand.<no memory space> [shape: f32[1,1], index: 10, kind: input, shape index: {}]
  %s11 = inlined_call_operand.vmem [shape: f32[2,1], index: 11, kind: output, shape index: {}]
  %s12 = sld [smem:[#allocation0]]
  $region94: #{tpu_custom_call.1} parent=0
    _
  %s14 = ssub.s32 1, %s12
  %s15 = scalar_select 0, %s14, %s12
  %v16 = vstv %s10
  %17 = vst [vmem:[#allocation6] sm:$0x1] %v16
  $region1: #{tpu_custom_call.1} parent=0
    #allocation7 [shape = 'u8[512]{0}', space=smem, size = 0x200, scoped, tag = 'input window, operand 0, single buffered']
    #allocation8 [shape = 's32[1]{0}', space=sflag, size = 0x4, scoped, tag = 'scoped memory for tpu_custom_call.1']
    #allocation9 [shape = 's32[1]{0}', space=sflag, size = 0x4, scoped, tag = 'scoped memory for tpu_custom_call.1']
    #allocation10 [shape = 'u8[16384]{0}', space=vmem, size = 0x4000, scoped, tag = 'input window, operand 1, single buffered']
    #allocation11 [shape = 'u8[98304]{0}', space=vmem, size = 0x18000, scoped, tag = 'input window, operand 2, single buffered']
    #allocation12 [shape = 's32[1]{0}', space=sflag, size = 0x4, scoped, tag = 'scoped memory for tpu_custom_call.1']
    #allocation13 [shape = 'u8[2048]{0}', space=vmem, size = 0x800, scoped, tag = 'input window, operand 3, single buffered']
    #allocation14 [shape = 'u8[2064384]{0}', space=vmem, size = 0x1f8000, scoped, tag = 'input window, operand 4, single buffered']
    #allocation15 [shape = 's32[1]{0}', space=sflag, size = 0x4, scoped, tag = 'scoped memory for tpu_custom_call.1']
    #allocation16 [shape = 'u8[1536]{0}', space=vmem, size = 0x800, scoped, tag = 'input window, operand 5, single buffered']
    #allocation17 [shape = 'u8[262144]{0}', space=vmem, size = 0x40000, scoped, tag = 'input window, operand 6, single buffered']
    #allocation18 [shape = 's32[1]{0}', space=sflag, size = 0x4, scoped, tag = 'scoped memory for tpu_custom_call.1']
    #allocation19 [shape = 'u8[1024]{0}', space=vmem, size = 0x400, scoped, tag = 'input window, operand 7, single buffered']
    #allocation20 [shape = 'u8[512]{0}', space=vmem, size = 0x400, scoped, tag = 'input window, operand 8, single buffered']
    #allocation21 [shape = 's32[1]{0}', space=sflag, size = 0x4, scoped, tag = 'scoped memory for tpu_custom_call.1']
    #allocation22 [shape = 'u8[512]{0}', space=vmem, size = 0x400, scoped, tag = 'input window, operand 9, single buffered']
    %18 = vsyncpa [#allocation9], 0
    %19 = vsyncpa [#allocation8], 0
    %20 = vsyncpa [#allocation12], 0
    %21 = vsyncpa [#allocation15], 0
    %22 = vsyncpa [#allocation18], 0
    %23 = vsyncpa [#allocation21], 0
    // Predicated region
    $region2: #{tpu_custom_call.1} parent=1 // pred_check
      _
    $region3: #{tpu_custom_call.1} parent=1 // pred_check_branch
      %25 = sbr.rel (0) target = $region5
    $region4: #{tpu_custom_call.1} parent=1 // pred_region
      %s27 = ssub.s32 16, 16
      %28 = vsyncadd [#allocation9], %s27
      %31 = dma.hbm_to_smem %s0, 16, [#allocation7], [#allocation9]
    $region5: #{tpu_custom_call.1} parent=1 // pred_fallthru
      _
    // Predicated region
    $region6: #{tpu_custom_call.1} parent=1 // pred_check
      _
    $region7: #{tpu_custom_call.1} parent=1 // pred_check_branch
      %33 = sbr.rel (0) target = $region9
    $region8: #{tpu_custom_call.1} parent=1 // pred_region
      %s35 = ssub.s32 512, 512
      %36 = vsyncadd [#allocation8], %s35
      %s37 = sshll.u32 [#allocation10], 4
      %s38 = int_to_ptr.vmem [resolvable:$true] %s37
      %43 = dma.hbm_to_vmem [thread:$0]  %s1, 512, %s38, [#allocation8], 128, 128, 8
    $region9: #{tpu_custom_call.1} parent=1 // pred_fallthru
      _
    // Predicated region
    $region10: #{tpu_custom_call.1} parent=1 // pred_check
      _
    $region11: #{tpu_custom_call.1} parent=1 // pred_check_branch
      %45 = sbr.rel (0) target = $region13
    $region12: #{tpu_custom_call.1} parent=1 // pred_region
      %s47 = ssub.s32 3072, 3072
      %48 = vsyncadd [#allocation12], %s47
      %s49 = sshll.u32 [#allocation11], 4
      %s50 = int_to_ptr.vmem [resolvable:$true] %s49
      %55 = dma.hbm_to_vmem [thread:$0]  %s2, 3072, %s50, [#allocation12], 512, 512, 32
    $region13: #{tpu_custom_call.1} parent=1 // pred_fallthru
      _
    // Predicated region
    $region14: #{tpu_custom_call.1} parent=1 // pred_check
      _
    $region15: #{tpu_custom_call.1} parent=1 // pred_check_branch
      %57 = sbr.rel (0) target = $region17
    $region16: #{tpu_custom_call.1} parent=1 // pred_region
      %s59 = ssub.s32 64, 64
      %60 = vsyncadd [#allocation12], %s59
      %s62 = sshll.u32 [#allocation13], 4
      %s63 = int_to_ptr.vmem [resolvable:$true] %s62
      %65 = dma.hbm_to_vmem [thread:$0]  %s3, 64, %s63, [#allocation12]
    $region17: #{tpu_custom_call.1} parent=1 // pred_fallthru
      _
    // Predicated region
    $region18: #{tpu_custom_call.1} parent=1 // pred_check
      _
    $region19: #{tpu_custom_call.1} parent=1 // pred_check_branch
      %67 = sbr.rel (0) target = $region21
    $region20: #{tpu_custom_call.1} parent=1 // pred_region
      %s69 = ssub.s32 64512, 64512
      %70 = vsyncadd [#allocation15], %s69
      %s71 = sshll.u32 [#allocation14], 4
      %s72 = int_to_ptr.vmem [resolvable:$true] %s71
      %77 = dma.hbm_to_vmem [thread:$0]  %s4, 64512, %s72, [#allocation15], 384, 384, 24
    $region21: #{tpu_custom_call.1} parent=1 // pred_fallthru
      _
    // Predicated region
    $region22: #{tpu_custom_call.1} parent=1 // pred_check
      _
    $region23: #{tpu_custom_call.1} parent=1 // pred_check_branch
      %79 = sbr.rel (0) target = $region25
    $region24: #{tpu_custom_call.1} parent=1 // pred_region
      %s81 = ssub.s32 48, 48
      %82 = vsyncadd [#allocation15], %s81
      %s84 = sshll.u32 [#allocation16], 4
      %s85 = int_to_ptr.vmem [resolvable:$true] %s84
      %87 = dma.hbm_to_vmem [thread:$0]  %s5, 48, %s85, [#allocation15]
    $region25: #{tpu_custom_call.1} parent=1 // pred_fallthru
      _
    // Predicated region
    $region26: #{tpu_custom_call.1} parent=1 // pred_check
      _
    $region27: #{tpu_custom_call.1} parent=1 // pred_check_branch
      %89 = sbr.rel (0) target = $region29
    $region28: #{tpu_custom_call.1} parent=1 // pred_region
      %s91 = ssub.s32 8192, 8192
      %92 = vsyncadd [#allocation18], %s91
      %s93 = sshll.u32 [#allocation17], 4
      %s94 = int_to_ptr.vmem [resolvable:$true] %s93
      %99 = dma.hbm_to_vmem [thread:$0]  %s6, 8192, %s94, [#allocation18], 128, 128, 8
    $region29: #{tpu_custom_call.1} parent=1 // pred_fallthru
      _
    // Predicated region
    $region30: #{tpu_custom_call.1} parent=1 // pred_check
      _
    $region31: #{tpu_custom_call.1} parent=1 // pred_check_branch
      %101 = sbr.rel (0) target = $region33
    $region32: #{tpu_custom_call.1} parent=1 // pred_region
      %s103 = ssub.s32 32, 32
      %104 = vsyncadd [#allocation18], %s103
      %s106 = sshll.u32 [#allocation19], 4
      %s107 = int_to_ptr.vmem [resolvable:$true] %s106
      %109 = dma.hbm_to_vmem [thread:$0]  %s7, 32, %s107, [#allocation18]
    $region33: #{tpu_custom_call.1} parent=1 // pred_fallthru
      _
    // Predicated region
    $region34: #{tpu_custom_call.1} parent=1 // pred_check
      _
    $region35: #{tpu_custom_call.1} parent=1 // pred_check_branch
      %111 = sbr.rel (0) target = $region37
    $region36: #{tpu_custom_call.1} parent=1 // pred_region
      %s113 = ssub.s32 16, 16
      %114 = vsyncadd [#allocation21], %s113
      %s116 = sshll.u32 [#allocation20], 4
      %s117 = int_to_ptr.vmem [resolvable:$true] %s116
      %119 = dma.hbm_to_vmem [thread:$0]  %s8, 16, %s117, [#allocation21]
    $region37: #{tpu_custom_call.1} parent=1 // pred_fallthru
      _
    // Predicated region
    $region38: #{tpu_custom_call.1} parent=1 // pred_check
      _
    $region39: #{tpu_custom_call.1} parent=1 // pred_check_branch
      %121 = sbr.rel (0) target = $region41
    $region40: #{tpu_custom_call.1} parent=1 // pred_region
      %s123 = ssub.s32 16, 16
      %124 = vsyncadd [#allocation21], %s123
      %s126 = sshll.u32 [#allocation22], 4
      %s127 = int_to_ptr.vmem [resolvable:$true] %s126
      %129 = dma.hbm_to_vmem [thread:$0]  %s9, 16, %s127, [#allocation21]
    $region41: #{tpu_custom_call.1} parent=1 // pred_fallthru
      _
    // Predicated region
    $region42: #{tpu_custom_call.1} parent=1 // pred_check
      _
    $region43: #{tpu_custom_call.1} parent=1 // pred_check_branch
      %131 = sbr.rel (0) target = $region45
    $region44: #{tpu_custom_call.1} parent=1 // pred_region
      _
    $region45: #{tpu_custom_call.1} parent=1 // pred_fallthru
      _
    // Predicated region
    $region46: #{tpu_custom_call.1} parent=1 // pred_check
      _
    $region47: #{tpu_custom_call.1} parent=1 // pred_check_branch
      %133 = sbr.rel (0) target = $region49
    $region48: #{tpu_custom_call.1} parent=1 // pred_region
      %134 = dma.done [#allocation9], 16
    $region49: #{tpu_custom_call.1} parent=1 // pred_fallthru
      _
    // Predicated region
    $region50: #{tpu_custom_call.1} parent=1 // pred_check
      _
    $region51: #{tpu_custom_call.1} parent=1 // pred_check_branch
      %136 = sbr.rel (0) target = $region53
    $region52: #{tpu_custom_call.1} parent=1 // pred_region
      %137 = dma.done [#allocation8], 512
    $region53: #{tpu_custom_call.1} parent=1 // pred_fallthru
      _
    // Predicated region
    $region54: #{tpu_custom_call.1} parent=1 // pred_check
      _
    $region55: #{tpu_custom_call.1} parent=1 // pred_check_branch
      %139 = sbr.rel (0) target = $region57
    $region56: #{tpu_custom_call.1} parent=1 // pred_region
      %140 = dma.done [#allocation12], 3072
    $region57: #{tpu_custom_call.1} parent=1 // pred_fallthru
      _
    // Predicated region
    $region58: #{tpu_custom_call.1} parent=1 // pred_check
      _
    $region59: #{tpu_custom_call.1} parent=1 // pred_check_branch
      %142 = sbr.rel (0) target = $region61
    $region60: #{tpu_custom_call.1} parent=1 // pred_region
      %143 = dma.done [#allocation12], 64
    $region61: #{tpu_custom_call.1} parent=1 // pred_fallthru
      _
    // Predicated region
    $region62: #{tpu_custom_call.1} parent=1 // pred_check
      _
    $region63: #{tpu_custom_call.1} parent=1 // pred_check_branch
      %145 = sbr.rel (0) target = $region65
    $region64: #{tpu_custom_call.1} parent=1 // pred_region
      %146 = dma.done [#allocation15], 64512
    $region65: #{tpu_custom_call.1} parent=1 // pred_fallthru
      _
    // Predicated region
    $region66: #{tpu_custom_call.1} parent=1 // pred_check
      _
    $region67: #{tpu_custom_call.1} parent=1 // pred_check_branch
      %148 = sbr.rel (0) target = $region69
    $region68: #{tpu_custom_call.1} parent=1 // pred_region
      %149 = dma.done [#allocation15], 48
    $region69: #{tpu_custom_call.1} parent=1 // pred_fallthru
      _
    // Predicated region
    $region70: #{tpu_custom_call.1} parent=1 // pred_check
      _
    $region71: #{tpu_custom_call.1} parent=1 // pred_check_branch
      %151 = sbr.rel (0) target = $region73
    $region72: #{tpu_custom_call.1} parent=1 // pred_region
      %152 = dma.done [#allocation18], 8192
    $region73: #{tpu_custom_call.1} parent=1 // pred_fallthru
      _
    // Predicated region
    $region74: #{tpu_custom_call.1} parent=1 // pred_check
      _
    $region75: #{tpu_custom_call.1} parent=1 // pred_check_branch
      %154 = sbr.rel (0) target = $region77
    $region76: #{tpu_custom_call.1} parent=1 // pred_region
      %155 = dma.done [#allocation18], 32
    $region77: #{tpu_custom_call.1} parent=1 // pred_fallthru
      _
    // Predicated region
    $region78: #{tpu_custom_call.1} parent=1 // pred_check
      _
    $region79: #{tpu_custom_call.1} parent=1 // pred_check_branch
      %157 = sbr.rel (0) target = $region81
    $region80: #{tpu_custom_call.1} parent=1 // pred_region
      %158 = dma.done [#allocation21], 16
    $region81: #{tpu_custom_call.1} parent=1 // pred_fallthru
      _
    // Predicated region
    $region82: #{tpu_custom_call.1} parent=1 // pred_check
      _
    $region83: #{tpu_custom_call.1} parent=1 // pred_check_branch
      %160 = sbr.rel (0) target = $region85
    $region84: #{tpu_custom_call.1} parent=1 // pred_region
      %161 = dma.done [#allocation21], 16
    $region85: #{tpu_custom_call.1} parent=1 // pred_fallthru
      _
    %162 = sfence
    %vm163 = vcmask 392192
    %164 = vst.msk [vmem:[#allocation2] sm:$0xff] %vm163, 0.0
    %165 = vst.msk [vmem:[#allocation2 + $0x8] sm:$0xff] %vm163, 0.0
    %166 = vst.msk [vmem:[#allocation2 + $0x10] sm:$0xff] %vm163, 0.0
    %167 = vst.msk [vmem:[#allocation2 + $0x18] sm:$0xff] %vm163, 0.0
    %v168 = vld [vmem:[#allocation10] sm:$0xff]
    %v169 = vld [vmem:[#allocation10 + $0x8] sm:$0x3f]
    %vm170 = vcmask 130048
    %171 = vst.msk [vmem:[#allocation2] sm:$0xff] %vm170, %v168
    %vm172 = vcmask 128000
    %173 = vst.msk [vmem:[#allocation2 + $0x8] sm:$0x3f] %vm172, %v169
    %v174 = vld [vmem:[#allocation10 + $0x1] sm:$0xff]
    %v175 = vld [vmem:[#allocation10 + $0x9] sm:$0x3f]
    %178 = vrot.lane.b32.xlu0 %v174, 16
    %v179 = vpop.permute.xlu0 %178
    %180 = vrot.lane.b32.xlu0 %v175, 16
    %v181 = vpop.permute.xlu0 %180
    %vm184 = vcmask 261248
    %185 = vst.msk [vmem:[#allocation2] sm:$0xff] %vm184, %v179
    %vm186 = vcmask 259200
    %187 = vst.msk [vmem:[#allocation2 + $0x8] sm:$0x3f] %vm186, %v181
    %v188 = vld [vmem:[#allocation10 + $0x2] sm:$0xff]
    %v189 = vld [vmem:[#allocation10 + $0xa] sm:$0x3f]
    %192 = vrot.lane.b32.xlu0 %v188, 32
    %v193 = vpop.permute.xlu0 %192
    %194 = vrot.lane.b32.xlu0 %v189, 32
    %v195 = vpop.permute.xlu0 %194
    %vm198 = vcmask 392448
    %199 = vst.msk [vmem:[#allocation2] sm:$0xff] %vm198, %v193
    %vm200 = vcmask 390400
    %201 = vst.msk [vmem:[#allocation2 + $0x8] sm:$0x3f] %vm200, %v195
    %s202 = scalar_lea.vmem [#allocation10], 16
    %v203 = vld [vmem:[%s202] sm:$0xff]
    %v204 = vld [vmem:[%s202 + $0x8] sm:$0x3f]
    %205 = vst.msk [vmem:[#allocation2 + $0x10] sm:$0xff] %vm170, %v203
    %206 = vst.msk [vmem:[#allocation2 + $0x18] sm:$0x3f] %vm172, %v204
    %v207 = vld [vmem:[%s202 + $0x1] sm:$0xff]
    %v208 = vld [vmem:[%s202 + $0x9] sm:$0x3f]
    %211 = vrot.lane.b32.xlu0 %v207, 16
    %v212 = vpop.permute.xlu0 %211
    %213 = vrot.lane.b32.xlu0 %v208, 16
    %v214 = vpop.permute.xlu0 %213
    %217 = vst.msk [vmem:[#allocation2 + $0x10] sm:$0xff] %vm184, %v212
    %218 = vst.msk [vmem:[#allocation2 + $0x18] sm:$0x3f] %vm186, %v214
    %v219 = vld [vmem:[%s202 + $0x2] sm:$0xff]
    %v220 = vld [vmem:[%s202 + $0xa] sm:$0x3f]
    %223 = vrot.lane.b32.xlu0 %v219, 32
    %v224 = vpop.permute.xlu0 %223
    %225 = vrot.lane.b32.xlu0 %v220, 32
    %v226 = vpop.permute.xlu0 %225
    %229 = vst.msk [vmem:[#allocation2 + $0x10] sm:$0xff] %vm198, %v224
    %230 = vst.msk [vmem:[#allocation2 + $0x18] sm:$0x3f] %vm200, %v226
    %v231 = vld [vmem:[#allocation2] sm:$0xff]
    %v232 = vld [vmem:[#allocation2 + $0x8] sm:$0xff]
    %v233 = vld [vmem:[#allocation2 + $0x10] sm:$0xff]
    %v234 = vld [vmem:[#allocation2 + $0x18] sm:$0xff]
    %v235 = vld [vmem:[#allocation11] sm:$0xff]
    %v236 = vld [vmem:[#allocation11 + $0x8] sm:$0xff]
    %v237 = vld [vmem:[#allocation11 + $0x10] sm:$0xff]
    %v238 = vld [vmem:[#allocation11 + $0x18] sm:$0xff]
    %v239 = vld [vmem:[#allocation11 + $0x20] sm:$0xff]
    %v240 = vld [vmem:[#allocation11 + $0x28] sm:$0xff]
    %v241 = vld [vmem:[#allocation11 + $0x30] sm:$0xff]
    %v242 = vld [vmem:[#allocation11 + $0x38] sm:$0xff]
    %v243 = vld [vmem:[#allocation11 + $0x40] sm:$0xff]
    %v244 = vld [vmem:[#allocation11 + $0x48] sm:$0xff]
    %v245 = vld [vmem:[#allocation11 + $0x50] sm:$0xff]
    %v246 = vld [vmem:[#allocation11 + $0x58] sm:$0xff]
    %v247 = vld [vmem:[#allocation11 + $0x60] sm:$0xff]
    %v248 = vld [vmem:[#allocation11 + $0x68] sm:$0xff]
    %v249 = vld [vmem:[#allocation11 + $0x70] sm:$0xff]
    %v250 = vld [vmem:[#allocation11 + $0x78] sm:$0xff]
    %v251 = vld [vmem:[#allocation11 + $0x80] sm:$0xff]
    %v252 = vld [vmem:[#allocation11 + $0x88] sm:$0xff]
    %v253 = vld [vmem:[#allocation11 + $0x90] sm:$0xff]
    %v254 = vld [vmem:[#allocation11 + $0x98] sm:$0xff]
    %v255 = vld [vmem:[#allocation11 + $0xa0] sm:$0xff]
    %v256 = vld [vmem:[#allocation11 + $0xa8] sm:$0xff]
    %v257 = vld [vmem:[#allocation11 + $0xb0] sm:$0xff]
    %v258 = vld [vmem:[#allocation11 + $0xb8] sm:$0xff]
    %v259 = vld [vmem:[#allocation13] sm:$0xf]
    %v261 = vlaneseq
    %v262 = vshrl.u32 %v261, 7
    %v263 = vsub.s32 0, %v262
    %v264 = vrot.slane %v259, %v263
    %v265 = vlaneseq
    %v266 = vshrl.u32 %v265, 7
    %v267 = vsub.s32 1, %v266
    %v268 = vrot.slane %v259, %v267
    %v269 = vlaneseq
    %v270 = vshrl.u32 %v269, 7
    %v271 = vsub.s32 2, %v270
    %v272 = vrot.slane %v259, %v271
    %v273 = vlaneseq
    %v274 = vshrl.u32 %v273, 7
    %v275 = vsub.s32 3, %v274
    %v276 = vrot.slane %v259, %v275
    %v282 = vsel %vm163, %v231, 0
    %v285 = vsel %vm163, %v232, 0
    %v288 = vsel %vm163, %v233, 0
    %v291 = vsel %vm163, %v234, 0
    %293 = vmatprep.subr.mxu0 %v236
    %294 = vmatpush1.msra.mxu0 %v235
    %295 = vmatprep.subr.mxu0 %v240
    %296 = vmatpush1.msra.mxu0 %v239
    %297 = vmatprep.subr.mxu0 %v244
    %298 = vmatpush1.msra.mxu0 %v243
    %299 = vmatprep.subr.mxu0 %v248
    %300 = vmatpush1.msra.mxu0 %v247
    %301 = vmatprep.subr.mxu0 %v252
    %302 = vmatpush1.msra.mxu0 %v251
    %303 = vmatprep.subr.mxu0 %v256
    %304 = vmatpush1.msra.mxu0 %v255
    %305 = vmatprep.subr.mxu0 0.0
    %306 = vmatpush1.msra.mxu0 0.0
    %307 = vmatprep.subr.mxu0 0.0
    %308 = vmatpush1.msra.mxu0 0.0
    %309 = vmatprep.subr.mxu0 0.0
    %310 = vmatpush1.msra.mxu0 0.0
    %311 = vmatprep.subr.mxu0 0.0
    %312 = vmatpush1.msra.mxu0 0.0
    %313 = vmatprep.subr.mxu0 0.0
    %314 = vmatpush1.msra.mxu0 0.0
    %315 = vmatprep.subr.mxu0 0.0
    %316 = vmatpush1.msra.mxu0 0.0
    %317 = vmatprep.subr.mxu0 0.0
    %318 = vmatpush1.msra.mxu0 0.0
    %319 = vmatprep.subr.mxu0 0.0
    %320 = vmatpush1.msra.mxu0 0.0
    %321 = vmatprep.subr.mxu0 0.0
    %322 = vmatpush1.msra.mxu0 0.0
    %323 = vmatprep.subr.mxu0 0.0
    %324 = vmatpush1.msra.mxu0 0.0
    %325 = vmatprep.subr.mxu0 0.0
    %326 = vmatpush1.msra.mxu0 0.0
    %327 = vmatprep.subr.mxu0 0.0
    %328 = vmatpush1.msra.mxu0 0.0
    %329 = vmatprep.subr.mxu0 0.0
    %330 = vmatpush1.msra.mxu0 0.0
    %331 = vmatprep.subr.mxu0 0.0
    %332 = vmatpush1.msra.mxu0 0.0
    %333 = vmatprep.subr.mxu0 0.0
    %334 = vmatpush1.msra.mxu0 0.0
    %335 = vmatprep.subr.mxu0 0.0
    %336 = vmatpush1.msra.mxu0 0.0
    %337 = vmatprep.subr.mxu0 0.0
    %338 = vmatpush1.msra.mxu0 0.0
    %339 = vmatprep.subr.mxu0 0.0
    %340 = vmatpush1.msra.mxu0 0.0
    %341 = vmatprep.subr.mxu0 0.0
    %342 = vmatpush1.msra.mxu0 0.0
    %343 = vmatprep.subr.mxu0 0.0
    %344 = vmatpush1.msra.mxu0 0.0
    %345 = vmatprep.subr.mxu0 0.0
    %346 = vmatpush1.msra.mxu0 0.0
    %347 = vmatprep.subr.mxu0 0.0
    %348 = vmatpush1.msra.mxu0 0.0
    %349 = vmatprep.subr.mxu0 0.0
    %350 = vmatpush1.msra.mxu0 0.0
    %351 = vmatprep.subr.mxu0 0.0
    %352 = vmatpush1.msra.mxu0 0.0
    %353 = vmatprep.subr.mxu0 0.0
    %354 = vmatpush1.msra.mxu0 0.0
    %355 = vmatprep.subr.mxu0 0.0
    %356 = vmatpush1.msra.mxu0 0.0
    %357 = vmatprep.mubr.f32.mxu0 0.0
    %358 = vmatmul.mubr.f32.gmra.mrb[0].mxu0 %v282
    %v359 = vpop.f32.mrb[0].mxu0
    %v360 = vadd.f32 %v264, %v359
    %v361 = vpop.f32.mrb[0].mxu0
    %v362 = vadd.f32 %v268, %v361
    %363 = vmatprep.mubr.f32.mxu0 0.0
    %364 = vmatmul.mubr.f32.gmra.mrb[0].mxu0 %v285
    %v365 = vpop.f32.mrb[0].mxu0
    %v366 = vadd.f32 %v264, %v365
    %v367 = vpop.f32.mrb[0].mxu0
    %v368 = vadd.f32 %v268, %v367
    %369 = vmatprep.mubr.f32.mxu0 0.0
    %370 = vmatmul.mubr.f32.gmra.mrb[0].mxu0 %v288
    %v371 = vpop.f32.mrb[0].mxu0
    %v372 = vadd.f32 %v264, %v371
    %v373 = vpop.f32.mrb[0].mxu0
    %v374 = vadd.f32 %v268, %v373
    %375 = vmatprep.mubr.f32.mxu0 0.0
    %376 = vmatmul.mubr.f32.gmra.mrb[0].mxu0 %v291
    %v377 = vpop.f32.mrb[0].mxu0
    %v378 = vadd.f32 %v264, %v377
    %v379 = vpop.f32.mrb[0].mxu0
    %v380 = vadd.f32 %v268, %v379
    %381 = vdwg.mxu0
    %382 = vmatprep.subr.mxu0 %v238
    %383 = vmatpush1.msra.mxu0 %v237
    %384 = vmatprep.subr.mxu0 %v242
    %385 = vmatpush1.msra.mxu0 %v241
    %386 = vmatprep.subr.mxu0 %v246
    %387 = vmatpush1.msra.mxu0 %v245
    %388 = vmatprep.subr.mxu0 %v250
    %389 = vmatpush1.msra.mxu0 %v249
    %390 = vmatprep.subr.mxu0 %v254
    %391 = vmatpush1.msra.mxu0 %v253
    %392 = vmatprep.subr.mxu0 %v258
    %393 = vmatpush1.msra.mxu0 %v257
    %394 = vmatprep.subr.mxu0 0.0
    %395 = vmatpush1.msra.mxu0 0.0
    %396 = vmatprep.subr.mxu0 0.0
    %397 = vmatpush1.msra.mxu0 0.0
    %398 = vmatprep.subr.mxu0 0.0
    %399 = vmatpush1.msra.mxu0 0.0
    %400 = vmatprep.subr.mxu0 0.0
    %401 = vmatpush1.msra.mxu0 0.0
    %402 = vmatprep.subr.mxu0 0.0
    %403 = vmatpush1.msra.mxu0 0.0
    %404 = vmatprep.subr.mxu0 0.0
    %405 = vmatpush1.msra.mxu0 0.0
    %406 = vmatprep.subr.mxu0 0.0
    %407 = vmatpush1.msra.mxu0 0.0
    %408 = vmatprep.subr.mxu0 0.0
    %409 = vmatpush1.msra.mxu0 0.0
    %410 = vmatprep.subr.mxu0 0.0
    %411 = vmatpush1.msra.mxu0 0.0
    %412 = vmatprep.subr.mxu0 0.0
    %413 = vmatpush1.msra.mxu0 0.0
    %414 = vmatprep.subr.mxu0 0.0
    %415 = vmatpush1.msra.mxu0 0.0
    %416 = vmatprep.subr.mxu0 0.0
    %417 = vmatpush1.msra.mxu0 0.0
    %418 = vmatprep.subr.mxu0 0.0
    %419 = vmatpush1.msra.mxu0 0.0
    %420 = vmatprep.subr.mxu0 0.0
    %421 = vmatpush1.msra.mxu0 0.0
    %422 = vmatprep.subr.mxu0 0.0
    %423 = vmatpush1.msra.mxu0 0.0
    %424 = vmatprep.subr.mxu0 0.0
    %425 = vmatpush1.msra.mxu0 0.0
    %426 = vmatprep.subr.mxu0 0.0
    %427 = vmatpush1.msra.mxu0 0.0
    %428 = vmatprep.subr.mxu0 0.0
    %429 = vmatpush1.msra.mxu0 0.0
    %430 = vmatprep.subr.mxu0 0.0
    %431 = vmatpush1.msra.mxu0 0.0
    %432 = vmatprep.subr.mxu0 0.0
    %433 = vmatpush1.msra.mxu0 0.0
    %434 = vmatprep.subr.mxu0 0.0
    %435 = vmatpush1.msra.mxu0 0.0
    %436 = vmatprep.subr.mxu0 0.0
    %437 = vmatpush1.msra.mxu0 0.0
    %438 = vmatprep.subr.mxu0 0.0
    %439 = vmatpush1.msra.mxu0 0.0
    %440 = vmatprep.subr.mxu0 0.0
    %441 = vmatpush1.msra.mxu0 0.0
    %442 = vmatprep.subr.mxu0 0.0
    %443 = vmatpush1.msra.mxu0 0.0
    %444 = vmatprep.subr.mxu0 0.0
    %445 = vmatpush1.msra.mxu0 0.0
    %446 = vmatprep.mubr.f32.mxu0 0.0
    %447 = vmatmul.mubr.f32.gmra.mrb[0].mxu0 %v282
    %v448 = vpop.f32.mrb[0].mxu0
    %v449 = vadd.f32 %v272, %v448
    %v450 = vpop.f32.mrb[0].mxu0
    %v451 = vadd.f32 %v276, %v450
    %452 = vmatprep.mubr.f32.mxu0 0.0
    %453 = vmatmul.mubr.f32.gmra.mrb[0].mxu0 %v285
    %v454 = vpop.f32.mrb[0].mxu0
    %v455 = vadd.f32 %v272, %v454
    %v456 = vpop.f32.mrb[0].mxu0
    %v457 = vadd.f32 %v276, %v456
    %458 = vmatprep.mubr.f32.mxu0 0.0
    %459 = vmatmul.mubr.f32.gmra.mrb[0].mxu0 %v288
    %v460 = vpop.f32.mrb[0].mxu0
    %v461 = vadd.f32 %v272, %v460
    %v462 = vpop.f32.mrb[0].mxu0
    %v463 = vadd.f32 %v276, %v462
    %464 = vmatprep.mubr.f32.mxu0 0.0
    %465 = vmatmul.mubr.f32.gmra.mrb[0].mxu0 %v291
    %v466 = vpop.f32.mrb[0].mxu0
    %v467 = vadd.f32 %v272, %v466
    %v468 = vpop.f32.mrb[0].mxu0
    %v469 = vadd.f32 %v276, %v468
    %470 = vdwg.mxu0
    %v471 = vmax.f32 %v360, 0.0
    %v472 = vmax.f32 %v362, 0.0
    %v473 = vmax.f32 %v449, 0.0
    %v474 = vmax.f32 %v451, 0.0
    %v475 = vmax.f32 %v366, 0.0
    %v476 = vmax.f32 %v368, 0.0
    %v477 = vmax.f32 %v455, 0.0
    %v478 = vmax.f32 %v457, 0.0
    %v479 = vmax.f32 %v372, 0.0
    %v480 = vmax.f32 %v374, 0.0
    %v481 = vmax.f32 %v461, 0.0
    %v482 = vmax.f32 %v463, 0.0
    %v483 = vmax.f32 %v378, 0.0
    %v484 = vmax.f32 %v380, 0.0
    %v485 = vmax.f32 %v467, 0.0
    %v486 = vmax.f32 %v469, 0.0
    %487 = vst [vmem:[#allocation3] sm:$0xff] %v471
    %488 = vst [vmem:[#allocation3 + $0x8] sm:$0xff] %v472
    %489 = vst [vmem:[#allocation3 + $0x10] sm:$0xff] %v473
    %vm490 = vcmask 523264
    %491 = vst.msk [vmem:[#allocation3 + $0x18] sm:$0xff] %vm490, %v474
    %492 = vst [vmem:[#allocation3 + $0x20] sm:$0xff] %v475
    %493 = vst [vmem:[#allocation3 + $0x28] sm:$0xff] %v476
    %494 = vst [vmem:[#allocation3 + $0x30] sm:$0xff] %v477
    %495 = vst.msk [vmem:[#allocation3 + $0x38] sm:$0xff] %vm490, %v478
    %496 = vst [vmem:[#allocation3 + $0x40] sm:$0xff] %v479
    %497 = vst [vmem:[#allocation3 + $0x48] sm:$0xff] %v480
    %498 = vst [vmem:[#allocation3 + $0x50] sm:$0xff] %v481
    %499 = vst.msk [vmem:[#allocation3 + $0x58] sm:$0xff] %vm490, %v482
    %500 = vst [vmem:[#allocation3 + $0x60] sm:$0xff] %v483
    %501 = vst [vmem:[#allocation3 + $0x68] sm:$0xff] %v484
    %502 = vst [vmem:[#allocation3 + $0x70] sm:$0xff] %v485
    %503 = vst.msk [vmem:[#allocation3 + $0x78] sm:$0xff] %vm490, %v486
    %504 = vst [vmem:[#allocation3 + $0x80] sm:$0xff] 0.0
    %505 = vst [vmem:[#allocation3 + $0x88] sm:$0xff] 0.0
    %506 = vst [vmem:[#allocation3 + $0x90] sm:$0xff] 0.0
    %507 = vst.msk [vmem:[#allocation3 + $0x98] sm:$0xff] %vm490, 0.0
    %v508 = vld [vmem:[#allocation3] sm:$0xff]
    %v509 = vld [vmem:[#allocation3 + $0x8] sm:$0xff]
    %v510 = vld [vmem:[#allocation3 + $0x10] sm:$0xff]
    %v511 = vld [vmem:[#allocation3 + $0x18] sm:$0xff]
    %v512 = vld [vmem:[#allocation3 + $0x20] sm:$0xff]
    %v513 = vld [vmem:[#allocation3 + $0x28] sm:$0xff]
    %v514 = vld [vmem:[#allocation3 + $0x30] sm:$0xff]
    %v515 = vld [vmem:[#allocation3 + $0x38] sm:$0xff]
    %v516 = vld [vmem:[#allocation3 + $0x40] sm:$0xff]
    %v517 = vld [vmem:[#allocation3 + $0x48] sm:$0xff]
    %v518 = vld [vmem:[#allocation3 + $0x50] sm:$0xff]
    %v519 = vld [vmem:[#allocation3 + $0x58] sm:$0xff]
    %v520 = vld [vmem:[#allocation3 + $0x60] sm:$0xff]
    %v521 = vld [vmem:[#allocation3 + $0x68] sm:$0xff]
    %v522 = vld [vmem:[#allocation3 + $0x70] sm:$0xff]
    %v523 = vld [vmem:[#allocation3 + $0x78] sm:$0xff]
    %v524 = vld [vmem:[#allocation14] sm:$0xff]
    %v525 = vld [vmem:[#allocation14 + $0x8] sm:$0xff]
    %v526 = vld [vmem:[#allocation14 + $0x10] sm:$0xff]
    %v527 = vld [vmem:[#allocation14 + $0x18] sm:$0xff]
    %v528 = vld [vmem:[#allocation14 + $0x20] sm:$0xff]
    %v529 = vld [vmem:[#allocation14 + $0x28] sm:$0xff]
    %v530 = vld [vmem:[#allocation14 + $0x30] sm:$0xff]
    %v531 = vld [vmem:[#allocation14 + $0x38] sm:$0xff]
    %v532 = vld [vmem:[#allocation14 + $0x40] sm:$0xff]
    %v533 = vld [vmem:[#allocation14 + $0x48] sm:$0xff]
    %v534 = vld [vmem:[#allocation14 + $0x50] sm:$0xff]
    %v535 = vld [vmem:[#allocation14 + $0x58] sm:$0xff]
    %v536 = vld [vmem:[#allocation14 + $0x60] sm:$0xff]
    %v537 = vld [vmem:[#allocation14 + $0x68] sm:$0xff]
    %v538 = vld [vmem:[#allocation14 + $0x70] sm:$0xff]
    %v539 = vld [vmem:[#allocation14 + $0x78] sm:$0xff]
    %v540 = vld [vmem:[#allocation14 + $0x80] sm:$0xff]
    %v541 = vld [vmem:[#allocation14 + $0x88] sm:$0xff]
    %v542 = vld [vmem:[#allocation14 + $0x90] sm:$0xff]
    %v543 = vld [vmem:[#allocation14 + $0x98] sm:$0xff]
    %v544 = vld [vmem:[#allocation14 + $0xa0] sm:$0xff]
    %v545 = vld [vmem:[#allocation14 + $0xa8] sm:$0xff]
    %v546 = vld [vmem:[#allocation14 + $0xb0] sm:$0xff]
    %v547 = vld [vmem:[#allocation14 + $0xb8] sm:$0xff]
    %v548 = vld [vmem:[#allocation14 + $0xc0] sm:$0xff]
    %v549 = vld [vmem:[#allocation14 + $0xc8] sm:$0xff]
    %v550 = vld [vmem:[#allocation14 + $0xd0] sm:$0xff]
    %v551 = vld [vmem:[#allocation14 + $0xd8] sm:$0xff]
    %v552 = vld [vmem:[#allocation14 + $0xe0] sm:$0xff]
    %v553 = vld [vmem:[#allocation14 + $0xe8] sm:$0xff]
    %v554 = vld [vmem:[#allocation14 + $0xf0] sm:$0xff]
    %v555 = vld [vmem:[#allocation14 + $0xf8] sm:$0xff]
    %v556 = vld [vmem:[#allocation14 + $0x100] sm:$0xff]
    %v557 = vld [vmem:[#allocation14 + $0x108] sm:$0xff]
    %v558 = vld [vmem:[#allocation14 + $0x110] sm:$0xff]
    %v559 = vld [vmem:[#allocation14 + $0x118] sm:$0xff]
    %v560 = vld [vmem:[#allocation14 + $0x120] sm:$0xff]
    %v561 = vld [vmem:[#allocation14 + $0x128] sm:$0xff]
    %v562 = vld [vmem:[#allocation14 + $0x130] sm:$0xff]
    %v563 = vld [vmem:[#allocation14 + $0x138] sm:$0xff]
    %v564 = vld [vmem:[#allocation14 + $0x140] sm:$0xff]
    %v565 = vld [vmem:[#allocation14 + $0x148] sm:$0xff]
    %v566 = vld [vmem:[#allocation14 + $0x150] sm:$0xff]
    %v567 = vld [vmem:[#allocation14 + $0x158] sm:$0xff]
    %v568 = vld [vmem:[#allocation14 + $0x160] sm:$0xff]
    %v569 = vld [vmem:[#allocation14 + $0x168] sm:$0xff]
    %v570 = vld [vmem:[#allocation14 + $0x170] sm:$0xff]
    %v571 = vld [vmem:[#allocation14 + $0x178] sm:$0xff]
    %v572 = vld [vmem:[#allocation14 + $0x180] sm:$0xff]
    %v573 = vld [vmem:[#allocation14 + $0x188] sm:$0xff]
    %v574 = vld [vmem:[#allocation14 + $0x190] sm:$0xff]
    %v575 = vld [vmem:[#allocation14 + $0x198] sm:$0xff]
    %v576 = vld [vmem:[#allocation14 + $0x1a0] sm:$0xff]
    %v577 = vld [vmem:[#allocation14 + $0x1a8] sm:$0xff]
    %v578 = vld [vmem:[#allocation14 + $0x1b0] sm:$0xff]
    %v579 = vld [vmem:[#allocation14 + $0x1b8] sm:$0xff]
    %v580 = vld [vmem:[#allocation14 + $0x1c0] sm:$0xff]
    %v581 = vld [vmem:[#allocation14 + $0x1c8] sm:$0xff]
    %v582 = vld [vmem:[#allocation14 + $0x1d0] sm:$0xff]
    %v583 = vld [vmem:[#allocation14 + $0x1d8] sm:$0xff]
    %v584 = vld [vmem:[#allocation14 + $0x1e0] sm:$0xff]
    %v585 = vld [vmem:[#allocation14 + $0x1e8] sm:$0xff]
    %v586 = vld [vmem:[#allocation14 + $0x1f0] sm:$0xff]
    %v587 = vld [vmem:[#allocation14 + $0x1f8] sm:$0xff]
    %v588 = vld [vmem:[#allocation14 + $0x200] sm:$0xff]
    %v589 = vld [vmem:[#allocation14 + $0x208] sm:$0xff]
    %v590 = vld [vmem:[#allocation14 + $0x210] sm:$0xff]
    %v591 = vld [vmem:[#allocation14 + $0x218] sm:$0xff]
    %v592 = vld [vmem:[#allocation14 + $0x220] sm:$0xff]
    %v593 = vld [vmem:[#allocation14 + $0x228] sm:$0xff]
    %v594 = vld [vmem:[#allocation14 + $0x230] sm:$0xff]
    %v595 = vld [vmem:[#allocation14 + $0x238] sm:$0xff]
    %v596 = vld [vmem:[#allocation14 + $0x240] sm:$0xff]
    %v597 = vld [vmem:[#allocation14 + $0x248] sm:$0xff]
    %v598 = vld [vmem:[#allocation14 + $0x250] sm:$0xff]
    %v599 = vld [vmem:[#allocation14 + $0x258] sm:$0xff]
    %v600 = vld [vmem:[#allocation14 + $0x260] sm:$0xff]
    %v601 = vld [vmem:[#allocation14 + $0x268] sm:$0xff]
    %v602 = vld [vmem:[#allocation14 + $0x270] sm:$0xff]
    %v603 = vld [vmem:[#allocation14 + $0x278] sm:$0xff]
    %v604 = vld [vmem:[#allocation14 + $0x280] sm:$0xff]
    %v605 = vld [vmem:[#allocation14 + $0x288] sm:$0xff]
    %v606 = vld [vmem:[#allocation14 + $0x290] sm:$0xff]
    %v607 = vld [vmem:[#allocation14 + $0x298] sm:$0xff]
    %v608 = vld [vmem:[#allocation14 + $0x2a0] sm:$0xff]
    %v609 = vld [vmem:[#allocation14 + $0x2a8] sm:$0xff]
    %v610 = vld [vmem:[#allocation14 + $0x2b0] sm:$0xff]
    %v611 = vld [vmem:[#allocation14 + $0x2b8] sm:$0xff]
    %v612 = vld [vmem:[#allocation14 + $0x2c0] sm:$0xff]
    %v613 = vld [vmem:[#allocation14 + $0x2c8] sm:$0xff]
    %v614 = vld [vmem:[#allocation14 + $0x2d0] sm:$0xff]
    %v615 = vld [vmem:[#allocation14 + $0x2d8] sm:$0xff]
    %v616 = vld [vmem:[#allocation14 + $0x2e0] sm:$0xff]
    %v617 = vld [vmem:[#allocation14 + $0x2e8] sm:$0xff]
    %v618 = vld [vmem:[#allocation14 + $0x2f0] sm:$0xff]
    %v619 = vld [vmem:[#allocation14 + $0x2f8] sm:$0xff]
    %v620 = vld [vmem:[#allocation14 + $0x300] sm:$0xff]
    %v621 = vld [vmem:[#allocation14 + $0x308] sm:$0xff]
    %v622 = vld [vmem:[#allocation14 + $0x310] sm:$0xff]
    %v623 = vld [vmem:[#allocation14 + $0x318] sm:$0xff]
    %v624 = vld [vmem:[#allocation14 + $0x320] sm:$0xff]
    %v625 = vld [vmem:[#allocation14 + $0x328] sm:$0xff]
    %v626 = vld [vmem:[#allocation14 + $0x330] sm:$0xff]
    %v627 = vld [vmem:[#allocation14 + $0x338] sm:$0xff]
    %v628 = vld [vmem:[#allocation14 + $0x340] sm:$0xff]
    %v629 = vld [vmem:[#allocation14 + $0x348] sm:$0xff]
    %v630 = vld [vmem:[#allocation14 + $0x350] sm:$0xff]
    %v631 = vld [vmem:[#allocation14 + $0x358] sm:$0xff]
    %v632 = vld [vmem:[#allocation14 + $0x360] sm:$0xff]
    %v633 = vld [vmem:[#allocation14 + $0x368] sm:$0xff]
    %v634 = vld [vmem:[#allocation14 + $0x370] sm:$0xff]
    %v635 = vld [vmem:[#allocation14 + $0x378] sm:$0xff]
    %v636 = vld [vmem:[#allocation14 + $0x380] sm:$0xff]
    %v637 = vld [vmem:[#allocation14 + $0x388] sm:$0xff]
    %v638 = vld [vmem:[#allocation14 + $0x390] sm:$0xff]
    %v639 = vld [vmem:[#allocation14 + $0x398] sm:$0xff]
    %v640 = vld [vmem:[#allocation14 + $0x3a0] sm:$0xff]
    %v641 = vld [vmem:[#allocation14 + $0x3a8] sm:$0xff]
    %v642 = vld [vmem:[#allocation14 + $0x3b0] sm:$0xff]
    %v643 = vld [vmem:[#allocation14 + $0x3b8] sm:$0xff]
    %v644 = vld [vmem:[#allocation14 + $0x3c0] sm:$0xff]
    %v645 = vld [vmem:[#allocation14 + $0x3c8] sm:$0xff]
    %v646 = vld [vmem:[#allocation14 + $0x3d0] sm:$0xff]
    %v647 = vld [vmem:[#allocation14 + $0x3d8] sm:$0xff]
    %v648 = vld [vmem:[#allocation14 + $0x3e0] sm:$0xff]
    %v649 = vld [vmem:[#allocation14 + $0x3e8] sm:$0xff]
    %v650 = vld [vmem:[#allocation14 + $0x3f0] sm:$0xff]
    %v651 = vld [vmem:[#allocation14 + $0x3f8] sm:$0xff]
    %v652 = vld [vmem:[#allocation14 + $0x400] sm:$0xff]
    %v653 = vld [vmem:[#allocation14 + $0x408] sm:$0xff]
    %v654 = vld [vmem:[#allocation14 + $0x410] sm:$0xff]
    %v655 = vld [vmem:[#allocation14 + $0x418] sm:$0xff]
    %v656 = vld [vmem:[#allocation14 + $0x420] sm:$0xff]
    %v657 = vld [vmem:[#allocation14 + $0x428] sm:$0xff]
    %v658 = vld [vmem:[#allocation14 + $0x430] sm:$0xff]
    %v659 = vld [vmem:[#allocation14 + $0x438] sm:$0xff]
    %v660 = vld [vmem:[#allocation14 + $0x440] sm:$0xff]
    %v661 = vld [vmem:[#allocation14 + $0x448] sm:$0xff]
    %v662 = vld [vmem:[#allocation14 + $0x450] sm:$0xff]
    %v663 = vld [vmem:[#allocation14 + $0x458] sm:$0xff]
    %v664 = vld [vmem:[#allocation14 + $0x460] sm:$0xff]
    %v665 = vld [vmem:[#allocation14 + $0x468] sm:$0xff]
    %v666 = vld [vmem:[#allocation14 + $0x470] sm:$0xff]
    %v667 = vld [vmem:[#allocation14 + $0x478] sm:$0xff]
    %v668 = vld [vmem:[#allocation14 + $0x480] sm:$0xff]
    %v669 = vld [vmem:[#allocation14 + $0x488] sm:$0xff]
    %v670 = vld [vmem:[#allocation14 + $0x490] sm:$0xff]
    %v671 = vld [vmem:[#allocation14 + $0x498] sm:$0xff]
    %v672 = vld [vmem:[#allocation14 + $0x4a0] sm:$0xff]
    %v673 = vld [vmem:[#allocation14 + $0x4a8] sm:$0xff]
    %v674 = vld [vmem:[#allocation14 + $0x4b0] sm:$0xff]
    %v675 = vld [vmem:[#allocation14 + $0x4b8] sm:$0xff]
    %v676 = vld [vmem:[#allocation14 + $0x4c0] sm:$0xff]
    %v677 = vld [vmem:[#allocation14 + $0x4c8] sm:$0xff]
    %v678 = vld [vmem:[#allocation14 + $0x4d0] sm:$0xff]
    %v679 = vld [vmem:[#allocation14 + $0x4d8] sm:$0xff]
    %v680 = vld [vmem:[#allocation14 + $0x4e0] sm:$0xff]
    %v681 = vld [vmem:[#allocation14 + $0x4e8] sm:$0xff]
    %v682 = vld [vmem:[#allocation14 + $0x4f0] sm:$0xff]
    %v683 = vld [vmem:[#allocation14 + $0x4f8] sm:$0xff]
    %v684 = vld [vmem:[#allocation14 + $0x500] sm:$0xff]
    %v685 = vld [vmem:[#allocation14 + $0x508] sm:$0xff]
    %v686 = vld [vmem:[#allocation14 + $0x510] sm:$0xff]
    %v687 = vld [vmem:[#allocation14 + $0x518] sm:$0xff]
    %v688 = vld [vmem:[#allocation14 + $0x520] sm:$0xff]
    %v689 = vld [vmem:[#allocation14 + $0x528] sm:$0xff]
    %v690 = vld [vmem:[#allocation14 + $0x530] sm:$0xff]
    %v691 = vld [vmem:[#allocation14 + $0x538] sm:$0xff]
    %v692 = vld [vmem:[#allocation3] sm:$0xfe]
    %v693 = vld [vmem:[#allocation3 + $0x8] sm:$0xfe]
    %v694 = vld [vmem:[#allocation3 + $0x10] sm:$0xfe]
    %v695 = vld [vmem:[#allocation3 + $0x18] sm:$0xfe]
    %v696 = vld [vmem:[#allocation3 + $0x80] sm:$0x1]
    %v697 = vld [vmem:[#allocation3 + $0x88] sm:$0x1]
    %v698 = vld [vmem:[#allocation3 + $0x90] sm:$0x1]
    %v699 = vld [vmem:[#allocation3 + $0x98] sm:$0x1]
    %s700 = scalar_lea.vmem [#allocation14], 1344
    %v701 = vld [vmem:[%s700] sm:$0xff]
    %v702 = vld [vmem:[%s700 + $0x8] sm:$0xff]
    %v703 = vld [vmem:[%s700 + $0x10] sm:$0xff]
    %v704 = vld [vmem:[%s700 + $0x18] sm:$0xff]
    %v705 = vld [vmem:[%s700 + $0x20] sm:$0xff]
    %v706 = vld [vmem:[%s700 + $0x28] sm:$0xff]
    %v707 = vld [vmem:[%s700 + $0x30] sm:$0xff]
    %v708 = vld [vmem:[%s700 + $0x38] sm:$0xff]
    %v709 = vld [vmem:[%s700 + $0x40] sm:$0xff]
    %v710 = vld [vmem:[%s700 + $0x48] sm:$0xff]
    %v711 = vld [vmem:[%s700 + $0x50] sm:$0xff]
    %v712 = vld [vmem:[%s700 + $0x58] sm:$0xff]
    %v713 = vld [vmem:[%s700 + $0x60] sm:$0xff]
    %v714 = vld [vmem:[%s700 + $0x68] sm:$0xff]
    %v715 = vld [vmem:[%s700 + $0x70] sm:$0xff]
    %v716 = vld [vmem:[%s700 + $0x78] sm:$0xff]
    %v717 = vld [vmem:[%s700 + $0x80] sm:$0xff]
    %v718 = vld [vmem:[%s700 + $0x88] sm:$0xff]
    %v719 = vld [vmem:[%s700 + $0x90] sm:$0xff]
    %v720 = vld [vmem:[%s700 + $0x98] sm:$0xff]
    %v721 = vld [vmem:[%s700 + $0xa0] sm:$0xff]
    %v722 = vld [vmem:[%s700 + $0xa8] sm:$0xff]
    %v723 = vld [vmem:[%s700 + $0xb0] sm:$0xff]
    %v724 = vld [vmem:[%s700 + $0xb8] sm:$0xff]
    %v725 = vld [vmem:[%s700 + $0xc0] sm:$0xff]
    %v726 = vld [vmem:[%s700 + $0xc8] sm:$0xff]
    %v727 = vld [vmem:[%s700 + $0xd0] sm:$0xff]
    %v728 = vld [vmem:[%s700 + $0xd8] sm:$0xff]
    %v729 = vld [vmem:[%s700 + $0xe0] sm:$0xff]
    %v730 = vld [vmem:[%s700 + $0xe8] sm:$0xff]
    %v731 = vld [vmem:[%s700 + $0xf0] sm:$0xff]
    %v732 = vld [vmem:[%s700 + $0xf8] sm:$0xff]
    %v733 = vld [vmem:[%s700 + $0x100] sm:$0xff]
    %v734 = vld [vmem:[%s700 + $0x108] sm:$0xff]
    %v735 = vld [vmem:[%s700 + $0x110] sm:$0xff]
    %v736 = vld [vmem:[%s700 + $0x118] sm:$0xff]
    %v737 = vld [vmem:[%s700 + $0x120] sm:$0xff]
    %v738 = vld [vmem:[%s700 + $0x128] sm:$0xff]
    %v739 = vld [vmem:[%s700 + $0x130] sm:$0xff]
    %v740 = vld [vmem:[%s700 + $0x138] sm:$0xff]
    %v741 = vld [vmem:[%s700 + $0x140] sm:$0xff]
    %v742 = vld [vmem:[%s700 + $0x148] sm:$0xff]
    %v743 = vld [vmem:[%s700 + $0x150] sm:$0xff]
    %v744 = vld [vmem:[%s700 + $0x158] sm:$0xff]
    %v745 = vld [vmem:[%s700 + $0x160] sm:$0xff]
    %v746 = vld [vmem:[%s700 + $0x168] sm:$0xff]
    %v747 = vld [vmem:[%s700 + $0x170] sm:$0xff]
    %v748 = vld [vmem:[%s700 + $0x178] sm:$0xff]
    %v749 = vld [vmem:[%s700 + $0x180] sm:$0xff]
    %v750 = vld [vmem:[%s700 + $0x188] sm:$0xff]
    %v751 = vld [vmem:[%s700 + $0x190] sm:$0xff]
    %v752 = vld [vmem:[%s700 + $0x198] sm:$0xff]
    %v753 = vld [vmem:[%s700 + $0x1a0] sm:$0xff]
    %v754 = vld [vmem:[%s700 + $0x1a8] sm:$0xff]
    %v755 = vld [vmem:[%s700 + $0x1b0] sm:$0xff]
    %v756 = vld [vmem:[%s700 + $0x1b8] sm:$0xff]
    %v757 = vld [vmem:[%s700 + $0x1c0] sm:$0xff]
    %v758 = vld [vmem:[%s700 + $0x1c8] sm:$0xff]
    %v759 = vld [vmem:[%s700 + $0x1d0] sm:$0xff]
    %v760 = vld [vmem:[%s700 + $0x1d8] sm:$0xff]
    %v761 = vld [vmem:[%s700 + $0x1e0] sm:$0xff]
    %v762 = vld [vmem:[%s700 + $0x1e8] sm:$0xff]
    %v763 = vld [vmem:[%s700 + $0x1f0] sm:$0xff]
    %v764 = vld [vmem:[%s700 + $0x1f8] sm:$0xff]
    %v765 = vld [vmem:[%s700 + $0x200] sm:$0xff]
    %v766 = vld [vmem:[%s700 + $0x208] sm:$0xff]
    %v767 = vld [vmem:[%s700 + $0x210] sm:$0xff]
    %v768 = vld [vmem:[%s700 + $0x218] sm:$0xff]
    %v769 = vld [vmem:[%s700 + $0x220] sm:$0xff]
    %v770 = vld [vmem:[%s700 + $0x228] sm:$0xff]
    %v771 = vld [vmem:[%s700 + $0x230] sm:$0xff]
    %v772 = vld [vmem:[%s700 + $0x238] sm:$0xff]
    %v773 = vld [vmem:[%s700 + $0x240] sm:$0xff]
    %v774 = vld [vmem:[%s700 + $0x248] sm:$0xff]
    %v775 = vld [vmem:[%s700 + $0x250] sm:$0xff]
    %v776 = vld [vmem:[%s700 + $0x258] sm:$0xff]
    %v777 = vld [vmem:[%s700 + $0x260] sm:$0xff]
    %v778 = vld [vmem:[%s700 + $0x268] sm:$0xff]
    %v779 = vld [vmem:[%s700 + $0x270] sm:$0xff]
    %v780 = vld [vmem:[%s700 + $0x278] sm:$0xff]
    %v781 = vld [vmem:[%s700 + $0x280] sm:$0xff]
    %v782 = vld [vmem:[%s700 + $0x288] sm:$0xff]
    %v783 = vld [vmem:[%s700 + $0x290] sm:$0xff]
    %v784 = vld [vmem:[%s700 + $0x298] sm:$0xff]
    %v785 = vld [vmem:[%s700 + $0x2a0] sm:$0xff]
    %v786 = vld [vmem:[%s700 + $0x2a8] sm:$0xff]
    %v787 = vld [vmem:[%s700 + $0x2b0] sm:$0xff]
    %v788 = vld [vmem:[%s700 + $0x2b8] sm:$0xff]
    %v789 = vld [vmem:[%s700 + $0x2c0] sm:$0xff]
    %v790 = vld [vmem:[%s700 + $0x2c8] sm:$0xff]
    %v791 = vld [vmem:[%s700 + $0x2d0] sm:$0xff]
    %v792 = vld [vmem:[%s700 + $0x2d8] sm:$0xff]
    %v793 = vld [vmem:[%s700 + $0x2e0] sm:$0xff]
    %v794 = vld [vmem:[%s700 + $0x2e8] sm:$0xff]
    %v795 = vld [vmem:[%s700 + $0x2f0] sm:$0xff]
    %v796 = vld [vmem:[%s700 + $0x2f8] sm:$0xff]
    %v797 = vld [vmem:[%s700 + $0x300] sm:$0xff]
    %v798 = vld [vmem:[%s700 + $0x308] sm:$0xff]
    %v799 = vld [vmem:[%s700 + $0x310] sm:$0xff]
    %v800 = vld [vmem:[%s700 + $0x318] sm:$0xff]
    %v801 = vld [vmem:[%s700 + $0x320] sm:$0xff]
    %v802 = vld [vmem:[%s700 + $0x328] sm:$0xff]
    %v803 = vld [vmem:[%s700 + $0x330] sm:$0xff]
    %v804 = vld [vmem:[%s700 + $0x338] sm:$0xff]
    %v805 = vld [vmem:[%s700 + $0x340] sm:$0xff]
    %v806 = vld [vmem:[%s700 + $0x348] sm:$0xff]
    %v807 = vld [vmem:[%s700 + $0x350] sm:$0xff]
    %v808 = vld [vmem:[%s700 + $0x358] sm:$0xff]
    %v809 = vld [vmem:[%s700 + $0x360] sm:$0xff]
    %v810 = vld [vmem:[%s700 + $0x368] sm:$0xff]
    %v811 = vld [vmem:[%s700 + $0x370] sm:$0xff]
    %v812 = vld [vmem:[%s700 + $0x378] sm:$0xff]
    %v813 = vld [vmem:[%s700 + $0x380] sm:$0xff]
    %v814 = vld [vmem:[%s700 + $0x388] sm:$0xff]
    %v815 = vld [vmem:[%s700 + $0x390] sm:$0xff]
    %v816 = vld [vmem:[%s700 + $0x398] sm:$0xff]
    %v817 = vld [vmem:[%s700 + $0x3a0] sm:$0xff]
    %v818 = vld [vmem:[%s700 + $0x3a8] sm:$0xff]
    %v819 = vld [vmem:[%s700 + $0x3b0] sm:$0xff]
    %v820 = vld [vmem:[%s700 + $0x3b8] sm:$0xff]
    %v821 = vld [vmem:[%s700 + $0x3c0] sm:$0xff]
    %v822 = vld [vmem:[%s700 + $0x3c8] sm:$0xff]
    %v823 = vld [vmem:[%s700 + $0x3d0] sm:$0xff]
    %v824 = vld [vmem:[%s700 + $0x3d8] sm:$0xff]
    %v825 = vld [vmem:[%s700 + $0x3e0] sm:$0xff]
    %v826 = vld [vmem:[%s700 + $0x3e8] sm:$0xff]
    %v827 = vld [vmem:[%s700 + $0x3f0] sm:$0xff]
    %v828 = vld [vmem:[%s700 + $0x3f8] sm:$0xff]
    %v829 = vld [vmem:[%s700 + $0x400] sm:$0xff]
    %v830 = vld [vmem:[%s700 + $0x408] sm:$0xff]
    %v831 = vld [vmem:[%s700 + $0x410] sm:$0xff]
    %v832 = vld [vmem:[%s700 + $0x418] sm:$0xff]
    %v833 = vld [vmem:[%s700 + $0x420] sm:$0xff]
    %v834 = vld [vmem:[%s700 + $0x428] sm:$0xff]
    %v835 = vld [vmem:[%s700 + $0x430] sm:$0xff]
    %v836 = vld [vmem:[%s700 + $0x438] sm:$0xff]
    %v837 = vld [vmem:[%s700 + $0x440] sm:$0xff]
    %v838 = vld [vmem:[%s700 + $0x448] sm:$0xff]
    %v839 = vld [vmem:[%s700 + $0x450] sm:$0xff]
    %v840 = vld [vmem:[%s700 + $0x458] sm:$0xff]
    %v841 = vld [vmem:[%s700 + $0x460] sm:$0xff]
    %v842 = vld [vmem:[%s700 + $0x468] sm:$0xff]
    %v843 = vld [vmem:[%s700 + $0x470] sm:$0xff]
    %v844 = vld [vmem:[%s700 + $0x478] sm:$0xff]
    %v845 = vld [vmem:[%s700 + $0x480] sm:$0xff]
    %v846 = vld [vmem:[%s700 + $0x488] sm:$0xff]
    %v847 = vld [vmem:[%s700 + $0x490] sm:$0xff]
    %v848 = vld [vmem:[%s700 + $0x498] sm:$0xff]
    %v849 = vld [vmem:[%s700 + $0x4a0] sm:$0xff]
    %v850 = vld [vmem:[%s700 + $0x4a8] sm:$0xff]
    %v851 = vld [vmem:[%s700 + $0x4b0] sm:$0xff]
    %v852 = vld [vmem:[%s700 + $0x4b8] sm:$0xff]
    %v853 = vld [vmem:[%s700 + $0x4c0] sm:$0xff]
    %v854 = vld [vmem:[%s700 + $0x4c8] sm:$0xff]
    %v855 = vld [vmem:[%s700 + $0x4d0] sm:$0xff]
    %v856 = vld [vmem:[%s700 + $0x4d8] sm:$0xff]
    %v857 = vld [vmem:[%s700 + $0x4e0] sm:$0xff]
    %v858 = vld [vmem:[%s700 + $0x4e8] sm:$0xff]
    %v859 = vld [vmem:[%s700 + $0x4f0] sm:$0xff]
    %v860 = vld [vmem:[%s700 + $0x4f8] sm:$0xff]
    %v861 = vld [vmem:[%s700 + $0x500] sm:$0xff]
    %v862 = vld [vmem:[%s700 + $0x508] sm:$0xff]
    %v863 = vld [vmem:[%s700 + $0x510] sm:$0xff]
    %v864 = vld [vmem:[%s700 + $0x518] sm:$0xff]
    %v865 = vld [vmem:[%s700 + $0x520] sm:$0xff]
    %v866 = vld [vmem:[%s700 + $0x528] sm:$0xff]
    %v867 = vld [vmem:[%s700 + $0x530] sm:$0xff]
    %v868 = vld [vmem:[%s700 + $0x538] sm:$0xff]
    %vm889 = vcmask 1046528
    %v890 = vrot.slane %v692, 1
    %v891 = vrot.slane %v512, 1
    %v892 = vsel %vm889, %v890, %v891
    %v893 = vrot.slane %v693, 1
    %v894 = vrot.slane %v513, 1
    %v895 = vsel %vm889, %v893, %v894
    %v896 = vrot.slane %v694, 1
    %v897 = vrot.slane %v514, 1
    %v898 = vsel %vm889, %v896, %v897
    %v899 = vrot.slane %v695, 1
    %v900 = vrot.slane %v515, 1
    %v901 = vsel %vm889, %v899, %v900
    %v902 = vrot.slane %v516, 1
    %v903 = vsel %vm889, %v891, %v902
    %v904 = vrot.slane %v517, 1
    %v905 = vsel %vm889, %v894, %v904
    %v906 = vrot.slane %v518, 1
    %v907 = vsel %vm889, %v897, %v906
    %v908 = vrot.slane %v519, 1
    %v909 = vsel %vm889, %v900, %v908
    %v910 = vrot.slane %v520, 1
    %v911 = vsel %vm889, %v902, %v910
    %v912 = vrot.slane %v521, 1
    %v913 = vsel %vm889, %v904, %v912
    %v914 = vrot.slane %v522, 1
    %v915 = vsel %vm889, %v906, %v914
    %v916 = vrot.slane %v523, 1
    %v917 = vsel %vm889, %v908, %v916
    %v918 = vrot.slane %v696, 1
    %v919 = vsel %vm889, %v910, %v918
    %v920 = vrot.slane %v697, 1
    %v921 = vsel %vm889, %v912, %v920
    %v922 = vrot.slane %v698, 1
    %v923 = vsel %vm889, %v914, %v922
    %v924 = vrot.slane %v699, 1
    %v925 = vsel %vm889, %v916, %v924
    %v938 = vsel %vm490, %v901, 0
    %v940 = vsel %vm490, %v909, 0
    %v942 = vsel %vm490, %v917, 0
    %v944 = vsel %vm490, %v925, 0
    %946 = vmatprep.subr.mxu0 %v702
    %947 = vmatpush1.msra.mxu0 %v701
    %948 = vmatprep.subr.mxu0 %v705
    %949 = vmatpush1.msra.mxu0 %v704
    %950 = vmatprep.subr.mxu0 %v708
    %951 = vmatpush1.msra.mxu0 %v707
    %952 = vmatprep.subr.mxu0 %v711
    %953 = vmatpush1.msra.mxu0 %v710
    %954 = vmatprep.subr.mxu0 %v714
    %955 = vmatpush1.msra.mxu0 %v713
    %956 = vmatprep.subr.mxu0 %v717
    %957 = vmatpush1.msra.mxu0 %v716
    %958 = vmatprep.subr.mxu0 %v720
    %959 = vmatpush1.msra.mxu0 %v719
    %960 = vmatprep.subr.mxu0 %v723
    %961 = vmatpush1.msra.mxu0 %v722
    %962 = vmatprep.subr.mxu0 %v726
    %963 = vmatpush1.msra.mxu0 %v725
    %964 = vmatprep.subr.mxu0 %v729
    %965 = vmatpush1.msra.mxu0 %v728
    %966 = vmatprep.subr.mxu0 %v732
    %967 = vmatpush1.msra.mxu0 %v731
    %968 = vmatprep.subr.mxu0 %v735
    %969 = vmatpush1.msra.mxu0 %v734
    %970 = vmatprep.subr.mxu0 %v738
    %971 = vmatpush1.msra.mxu0 %v737
    %972 = vmatprep.subr.mxu0 %v741
    %973 = vmatpush1.msra.mxu0 %v740
    %974 = vmatprep.subr.mxu0 %v744
    %975 = vmatpush1.msra.mxu0 %v743
    %976 = vmatprep.subr.mxu0 %v747
    %977 = vmatpush1.msra.mxu0 %v746
    %978 = vmatprep.subr.mxu0 %v750
    %979 = vmatpush1.msra.mxu0 %v749
    %980 = vmatprep.subr.mxu0 %v753
    %981 = vmatpush1.msra.mxu0 %v752
    %982 = vmatprep.subr.mxu0 %v756
    %983 = vmatpush1.msra.mxu0 %v755
    %984 = vmatprep.subr.mxu0 %v759
    %985 = vmatpush1.msra.mxu0 %v758
    %986 = vmatprep.subr.mxu0 %v762
    %987 = vmatpush1.msra.mxu0 %v761
    %988 = vmatprep.subr.mxu0 %v765
    %989 = vmatpush1.msra.mxu0 %v764
    %990 = vmatprep.subr.mxu0 %v768
    %991 = vmatpush1.msra.mxu0 %v767
    %992 = vmatprep.subr.mxu0 %v771
    %993 = vmatpush1.msra.mxu0 %v770
    %994 = vmatprep.subr.mxu0 %v774
    %995 = vmatpush1.msra.mxu0 %v773
    %996 = vmatprep.subr.mxu0 %v777
    %997 = vmatpush1.msra.mxu0 %v776
    %998 = vmatprep.subr.mxu0 %v780
    %999 = vmatpush1.msra.mxu0 %v779
    %1000 = vmatprep.subr.mxu0 %v783
    %1001 = vmatpush1.msra.mxu0 %v782
    %1002 = vmatprep.subr.mxu0 %v786
    %1003 = vmatpush1.msra.mxu0 %v785
    %1004 = vmatprep.subr.mxu0 %v789
    %1005 = vmatpush1.msra.mxu0 %v788
    %1006 = vmatprep.subr.mxu0 %v792
    %1007 = vmatpush1.msra.mxu0 %v791
    %1008 = vmatprep.subr.mxu0 %v795
    %1009 = vmatpush1.msra.mxu0 %v794
    %1010 = vmatprep.mubr.f32.mxu0 %v895
    %1011 = vmatmul.mubr.f32.gmra.mrb[0].mxu0 %v892
    %v1012 = vpop.f32.mrb[0].mxu0
    %v1013 = vadd.f32 0.0, %v1012
    %v1014 = vpop.f32.mrb[0].mxu0
    %v1015 = vadd.f32 0.0, %v1014
    %1016 = vmatprep.mubr.f32.mxu0 %v905
    %1017 = vmatmul.mubr.f32.gmra.mrb[0].mxu0 %v903
    %v1018 = vpop.f32.mrb[0].mxu0
    %v1019 = vadd.f32 0.0, %v1018
    %v1020 = vpop.f32.mrb[0].mxu0
    %v1021 = vadd.f32 0.0, %v1020
    %1022 = vmatprep.mubr.f32.mxu0 %v913
    %1023 = vmatmul.mubr.f32.gmra.mrb[0].mxu0 %v911
    %v1024 = vpop.f32.mrb[0].mxu0
    %v1025 = vadd.f32 0.0, %v1024
    %v1026 = vpop.f32.mrb[0].mxu0
    %v1027 = vadd.f32 0.0, %v1026
    %1028 = vmatprep.mubr.f32.mxu0 %v921
    %1029 = vmatmul.mubr.f32.gmra.mrb[0].mxu0 %v919
    %v1030 = vpop.f32.mrb[0].mxu0
    %v1031 = vadd.f32 0.0, %v1030
    %v1032 = vpop.f32.mrb[0].mxu0
    %v1033 = vadd.f32 0.0, %v1032
    %1034 = vdwg.mxu0
    %1035 = vmatprep.subr.mxu0 %v798
    %1036 = vmatpush1.msra.mxu0 %v797
    %1037 = vmatprep.subr.mxu0 %v801
    %1038 = vmatpush1.msra.mxu0 %v800
    %1039 = vmatprep.subr.mxu0 %v804
    %1040 = vmatpush1.msra.mxu0 %v803
    %1041 = vmatprep.subr.mxu0 %v807
    %1042 = vmatpush1.msra.mxu0 %v806
    %1043 = vmatprep.subr.mxu0 %v810
    %1044 = vmatpush1.msra.mxu0 %v809
    %1045 = vmatprep.subr.mxu0 %v813
    %1046 = vmatpush1.msra.mxu0 %v812
    %1047 = vmatprep.subr.mxu0 %v816
    %1048 = vmatpush1.msra.mxu0 %v815
    %1049 = vmatprep.subr.mxu0 %v819
    %1050 = vmatpush1.msra.mxu0 %v818
    %1051 = vmatprep.subr.mxu0 %v822
    %1052 = vmatpush1.msra.mxu0 %v821
    %1053 = vmatprep.subr.mxu0 %v825
    %1054 = vmatpush1.msra.mxu0 %v824
    %1055 = vmatprep.subr.mxu0 %v828
    %1056 = vmatpush1.msra.mxu0 %v827
    %1057 = vmatprep.subr.mxu0 %v831
    %1058 = vmatpush1.msra.mxu0 %v830
    %1059 = vmatprep.subr.mxu0 %v834
    %1060 = vmatpush1.msra.mxu0 %v833
    %1061 = vmatprep.subr.mxu0 %v837
    %1062 = vmatpush1.msra.mxu0 %v836
    %1063 = vmatprep.subr.mxu0 %v840
    %1064 = vmatpush1.msra.mxu0 %v839
    %1065 = vmatprep.subr.mxu0 %v843
    %1066 = vmatpush1.msra.mxu0 %v842
    %1067 = vmatprep.subr.mxu0 %v846
    %1068 = vmatpush1.msra.mxu0 %v845
    %1069 = vmatprep.subr.mxu0 %v849
    %1070 = vmatpush1.msra.mxu0 %v848
    %1071 = vmatprep.subr.mxu0 %v852
    %1072 = vmatpush1.msra.mxu0 %v851
    %1073 = vmatprep.subr.mxu0 %v855
    %1074 = vmatpush1.msra.mxu0 %v854
    %1075 = vmatprep.subr.mxu0 %v858
    %1076 = vmatpush1.msra.mxu0 %v857
    %1077 = vmatprep.subr.mxu0 %v861
    %1078 = vmatpush1.msra.mxu0 %v860
    %1079 = vmatprep.subr.mxu0 %v864
    %1080 = vmatpush1.msra.mxu0 %v863
    %1081 = vmatprep.subr.mxu0 %v867
    %1082 = vmatpush1.msra.mxu0 %v866
    %1083 = vmatprep.subr.mxu0 0.0
    %1084 = vmatpush1.msra.mxu0 0.0
    %1085 = vmatprep.subr.mxu0 0.0
    %1086 = vmatpush1.msra.mxu0 0.0
    %1087 = vmatprep.subr.mxu0 0.0
    %1088 = vmatpush1.msra.mxu0 0.0
    %1089 = vmatprep.subr.mxu0 0.0
    %1090 = vmatpush1.msra.mxu0 0.0
    %1091 = vmatprep.subr.mxu0 0.0
    %1092 = vmatpush1.msra.mxu0 0.0
    %1093 = vmatprep.subr.mxu0 0.0
    %1094 = vmatpush1.msra.mxu0 0.0
    %1095 = vmatprep.subr.mxu0 0.0
    %1096 = vmatpush1.msra.mxu0 0.0
    %1097 = vmatprep.subr.mxu0 0.0
    %1098 = vmatpush1.msra.mxu0 0.0
    %1099 = vmatprep.mubr.f32.mxu0 %v938
    %1100 = vmatmul.mubr.f32.gmra.mrb[0].mxu0 %v898
    %v1101 = vpop.f32.mrb[0].mxu0
    %v1102 = vadd.f32 %v1013, %v1101
    %v1103 = vpop.f32.mrb[0].mxu0
    %v1104 = vadd.f32 %v1015, %v1103
    %1105 = vmatprep.mubr.f32.mxu0 %v940
    %1106 = vmatmul.mubr.f32.gmra.mrb[0].mxu0 %v907
    %v1107 = vpop.f32.mrb[0].mxu0
    %v1108 = vadd.f32 %v1019, %v1107
    %v1109 = vpop.f32.mrb[0].mxu0
    %v1110 = vadd.f32 %v1021, %v1109
    %1111 = vmatprep.mubr.f32.mxu0 %v942
    %1112 = vmatmul.mubr.f32.gmra.mrb[0].mxu0 %v915
    %v1113 = vpop.f32.mrb[0].mxu0
    %v1114 = vadd.f32 %v1025, %v1113
    %v1115 = vpop.f32.mrb[0].mxu0
    %v1116 = vadd.f32 %v1027, %v1115
    %1117 = vmatprep.mubr.f32.mxu0 %v944
    %1118 = vmatmul.mubr.f32.gmra.mrb[0].mxu0 %v923
    %v1119 = vpop.f32.mrb[0].mxu0
    %v1120 = vadd.f32 %v1031, %v1119
    %v1121 = vpop.f32.mrb[0].mxu0
    %v1122 = vadd.f32 %v1033, %v1121
    %1123 = vdwg.mxu0
    %1124 = vmatprep.subr.mxu0 0.0
    %1125 = vmatpush1.msra.mxu0 %v703
    %1126 = vmatprep.subr.mxu0 0.0
    %1127 = vmatpush1.msra.mxu0 %v706
    %1128 = vmatprep.subr.mxu0 0.0
    %1129 = vmatpush1.msra.mxu0 %v709
    %1130 = vmatprep.subr.mxu0 0.0
    %1131 = vmatpush1.msra.mxu0 %v712
    %1132 = vmatprep.subr.mxu0 0.0
    %1133 = vmatpush1.msra.mxu0 %v715
    %1134 = vmatprep.subr.mxu0 0.0
    %1135 = vmatpush1.msra.mxu0 %v718
    %1136 = vmatprep.subr.mxu0 0.0
    %1137 = vmatpush1.msra.mxu0 %v721
    %1138 = vmatprep.subr.mxu0 0.0
    %1139 = vmatpush1.msra.mxu0 %v724
    %1140 = vmatprep.subr.mxu0 0.0
    %1141 = vmatpush1.msra.mxu0 %v727
    %1142 = vmatprep.subr.mxu0 0.0
    %1143 = vmatpush1.msra.mxu0 %v730
    %1144 = vmatprep.subr.mxu0 0.0
    %1145 = vmatpush1.msra.mxu0 %v733
    %1146 = vmatprep.subr.mxu0 0.0
    %1147 = vmatpush1.msra.mxu0 %v736
    %1148 = vmatprep.subr.mxu0 0.0
    %1149 = vmatpush1.msra.mxu0 %v739
    %1150 = vmatprep.subr.mxu0 0.0
    %1151 = vmatpush1.msra.mxu0 %v742
    %1152 = vmatprep.subr.mxu0 0.0
    %1153 = vmatpush1.msra.mxu0 %v745
    %1154 = vmatprep.subr.mxu0 0.0
    %1155 = vmatpush1.msra.mxu0 %v748
    %1156 = vmatprep.subr.mxu0 0.0
    %1157 = vmatpush1.msra.mxu0 %v751
    %1158 = vmatprep.subr.mxu0 0.0
    %1159 = vmatpush1.msra.mxu0 %v754
    %1160 = vmatprep.subr.mxu0 0.0
    %1161 = vmatpush1.msra.mxu0 %v757
    %1162 = vmatprep.subr.mxu0 0.0
    %1163 = vmatpush1.msra.mxu0 %v760
    %1164 = vmatprep.subr.mxu0 0.0
    %1165 = vmatpush1.msra.mxu0 %v763
    %1166 = vmatprep.subr.mxu0 0.0
    %1167 = vmatpush1.msra.mxu0 %v766
    %1168 = vmatprep.subr.mxu0 0.0
    %1169 = vmatpush1.msra.mxu0 %v769
    %1170 = vmatprep.subr.mxu0 0.0
    %1171 = vmatpush1.msra.mxu0 %v772
    %1172 = vmatprep.subr.mxu0 0.0
    %1173 = vmatpush1.msra.mxu0 %v775
    %1174 = vmatprep.subr.mxu0 0.0
    %1175 = vmatpush1.msra.mxu0 %v778
    %1176 = vmatprep.subr.mxu0 0.0
    %1177 = vmatpush1.msra.mxu0 %v781
    %1178 = vmatprep.subr.mxu0 0.0
    %1179 = vmatpush1.msra.mxu0 %v784
    %1180 = vmatprep.subr.mxu0 0.0
    %1181 = vmatpush1.msra.mxu0 %v787
    %1182 = vmatprep.subr.mxu0 0.0
    %1183 = vmatpush1.msra.mxu0 %v790
    %1184 = vmatprep.subr.mxu0 0.0
    %1185 = vmatpush1.msra.mxu0 %v793
    %1186 = vmatprep.subr.mxu0 0.0
    %1187 = vmatpush1.msra.mxu0 %v796
    %1188 = vmatprep.mubr.f32.mxu0 %v895
    %1189 = vmatmul.mubr.f32.gmra.mrb[0].mxu0 %v892
    %v1190 = vpop.f32.mrb[0].mxu0
    %v1191 = vadd.f32 0.0, %v1190
    %v1192 = vpop.f32.mrb[0].mxu0
    %1193 = vmatprep.mubr.f32.mxu0 %v905
    %1194 = vmatmul.mubr.f32.gmra.mrb[0].mxu0 %v903
    %v1195 = vpop.f32.mrb[0].mxu0
    %v1196 = vadd.f32 0.0, %v1195
    %v1197 = vpop.f32.mrb[0].mxu0
    %1198 = vmatprep.mubr.f32.mxu0 %v913
    %1199 = vmatmul.mubr.f32.gmra.mrb[0].mxu0 %v911
    %v1200 = vpop.f32.mrb[0].mxu0
    %v1201 = vadd.f32 0.0, %v1200
    %v1202 = vpop.f32.mrb[0].mxu0
    %1203 = vmatprep.mubr.f32.mxu0 %v921
    %1204 = vmatmul.mubr.f32.gmra.mrb[0].mxu0 %v919
    %v1205 = vpop.f32.mrb[0].mxu0
    %v1206 = vadd.f32 0.0, %v1205
    %v1207 = vpop.f32.mrb[0].mxu0
    %1208 = vdwg.mxu0
    %1209 = vmatprep.subr.mxu0 0.0
    %1210 = vmatpush1.msra.mxu0 %v799
    %1211 = vmatprep.subr.mxu0 0.0
    %1212 = vmatpush1.msra.mxu0 %v802
    %1213 = vmatprep.subr.mxu0 0.0
    %1214 = vmatpush1.msra.mxu0 %v805
    %1215 = vmatprep.subr.mxu0 0.0
    %1216 = vmatpush1.msra.mxu0 %v808
    %1217 = vmatprep.subr.mxu0 0.0
    %1218 = vmatpush1.msra.mxu0 %v811
    %1219 = vmatprep.subr.mxu0 0.0
    %1220 = vmatpush1.msra.mxu0 %v814
    %1221 = vmatprep.subr.mxu0 0.0
    %1222 = vmatpush1.msra.mxu0 %v817
    %1223 = vmatprep.subr.mxu0 0.0
    %1224 = vmatpush1.msra.mxu0 %v820
    %1225 = vmatprep.subr.mxu0 0.0
    %1226 = vmatpush1.msra.mxu0 %v823
    %1227 = vmatprep.subr.mxu0 0.0
    %1228 = vmatpush1.msra.mxu0 %v826
    %1229 = vmatprep.subr.mxu0 0.0
    %1230 = vmatpush1.msra.mxu0 %v829
    %1231 = vmatprep.subr.mxu0 0.0
    %1232 = vmatpush1.msra.mxu0 %v832
    %1233 = vmatprep.subr.mxu0 0.0
    %1234 = vmatpush1.msra.mxu0 %v835
    %1235 = vmatprep.subr.mxu0 0.0
    %1236 = vmatpush1.msra.mxu0 %v838
    %1237 = vmatprep.subr.mxu0 0.0
    %1238 = vmatpush1.msra.mxu0 %v841
    %1239 = vmatprep.subr.mxu0 0.0
    %1240 = vmatpush1.msra.mxu0 %v844
    %1241 = vmatprep.subr.mxu0 0.0
    %1242 = vmatpush1.msra.mxu0 %v847
    %1243 = vmatprep.subr.mxu0 0.0
    %1244 = vmatpush1.msra.mxu0 %v850
    %1245 = vmatprep.subr.mxu0 0.0
    %1246 = vmatpush1.msra.mxu0 %v853
    %1247 = vmatprep.subr.mxu0 0.0
    %1248 = vmatpush1.msra.mxu0 %v856
    %1249 = vmatprep.subr.mxu0 0.0
    %1250 = vmatpush1.msra.mxu0 %v859
    %1251 = vmatprep.subr.mxu0 0.0
    %1252 = vmatpush1.msra.mxu0 %v862
    %1253 = vmatprep.subr.mxu0 0.0
    %1254 = vmatpush1.msra.mxu0 %v865
    %1255 = vmatprep.subr.mxu0 0.0
    %1256 = vmatpush1.msra.mxu0 %v868
    %1257 = vmatprep.subr.mxu0 0.0
    %1258 = vmatpush1.msra.mxu0 0.0
    %1259 = vmatprep.subr.mxu0 0.0
    %1260 = vmatpush1.msra.mxu0 0.0
    %1261 = vmatprep.subr.mxu0 0.0
    %1262 = vmatpush1.msra.mxu0 0.0
    %1263 = vmatprep.subr.mxu0 0.0
    %1264 = vmatpush1.msra.mxu0 0.0
    %1265 = vmatprep.subr.mxu0 0.0
    %1266 = vmatpush1.msra.mxu0 0.0
    %1267 = vmatprep.subr.mxu0 0.0
    %1268 = vmatpush1.msra.mxu0 0.0
    %1269 = vmatprep.subr.mxu0 0.0
    %1270 = vmatpush1.msra.mxu0 0.0
    %1271 = vmatprep.subr.mxu0 0.0
    %1272 = vmatpush1.msra.mxu0 0.0
    %1273 = vmatprep.mubr.f32.mxu0 %v938
    %1274 = vmatmul.mubr.f32.gmra.mrb[0].mxu0 %v898
    %v1275 = vpop.f32.mrb[0].mxu0
    %v1276 = vadd.f32 %v1191, %v1275
    %v1277 = vpop.f32.mrb[0].mxu0
    %1278 = vmatprep.mubr.f32.mxu0 %v940
    %1279 = vmatmul.mubr.f32.gmra.mrb[0].mxu0 %v907
    %v1280 = vpop.f32.mrb[0].mxu0
    %v1281 = vadd.f32 %v1196, %v1280
    %v1282 = vpop.f32.mrb[0].mxu0
    %1283 = vmatprep.mubr.f32.mxu0 %v942
    %1284 = vmatmul.mubr.f32.gmra.mrb[0].mxu0 %v915
    %v1285 = vpop.f32.mrb[0].mxu0
    %v1286 = vadd.f32 %v1201, %v1285
    %v1287 = vpop.f32.mrb[0].mxu0
    %1288 = vmatprep.mubr.f32.mxu0 %v944
    %1289 = vmatmul.mubr.f32.gmra.mrb[0].mxu0 %v923
    %v1290 = vpop.f32.mrb[0].mxu0
    %v1291 = vadd.f32 %v1206, %v1290
    %v1292 = vpop.f32.mrb[0].mxu0
    %1293 = vdwg.mxu0
    %v1295 = vsel %vm490, %v511, 0
    %v1297 = vsel %vm490, %v515, 0
    %v1299 = vsel %vm490, %v519, 0
    %v1301 = vsel %vm490, %v523, 0
    %1303 = vmatprep.subr.mxu0 %v525
    %1304 = vmatpush1.msra.mxu0 %v524
    %1305 = vmatprep.subr.mxu0 %v528
    %1306 = vmatpush1.msra.mxu0 %v527
    %1307 = vmatprep.subr.mxu0 %v531
    %1308 = vmatpush1.msra.mxu0 %v530
    %1309 = vmatprep.subr.mxu0 %v534
    %1310 = vmatpush1.msra.mxu0 %v533
    %1311 = vmatprep.subr.mxu0 %v537
    %1312 = vmatpush1.msra.mxu0 %v536
    %1313 = vmatprep.subr.mxu0 %v540
    %1314 = vmatpush1.msra.mxu0 %v539
    %1315 = vmatprep.subr.mxu0 %v543
    %1316 = vmatpush1.msra.mxu0 %v542
    %1317 = vmatprep.subr.mxu0 %v546
    %1318 = vmatpush1.msra.mxu0 %v545
    %1319 = vmatprep.subr.mxu0 %v549
    %1320 = vmatpush1.msra.mxu0 %v548
    %1321 = vmatprep.subr.mxu0 %v552
    %1322 = vmatpush1.msra.mxu0 %v551
    %1323 = vmatprep.subr.mxu0 %v555
    %1324 = vmatpush1.msra.mxu0 %v554
    %1325 = vmatprep.subr.mxu0 %v558
    %1326 = vmatpush1.msra.mxu0 %v557
    %1327 = vmatprep.subr.mxu0 %v561
    %1328 = vmatpush1.msra.mxu0 %v560
    %1329 = vmatprep.subr.mxu0 %v564
    %1330 = vmatpush1.msra.mxu0 %v563
    %1331 = vmatprep.subr.mxu0 %v567
    %1332 = vmatpush1.msra.mxu0 %v566
    %1333 = vmatprep.subr.mxu0 %v570
    %1334 = vmatpush1.msra.mxu0 %v569
    %1335 = vmatprep.subr.mxu0 %v573
    %1336 = vmatpush1.msra.mxu0 %v572
    %1337 = vmatprep.subr.mxu0 %v576
    %1338 = vmatpush1.msra.mxu0 %v575
    %1339 = vmatprep.subr.mxu0 %v579
    %1340 = vmatpush1.msra.mxu0 %v578
    %1341 = vmatprep.subr.mxu0 %v582
    %1342 = vmatpush1.msra.mxu0 %v581
    %1343 = vmatprep.subr.mxu0 %v585
    %1344 = vmatpush1.msra.mxu0 %v584
    %1345 = vmatprep.subr.mxu0 %v588
    %1346 = vmatpush1.msra.mxu0 %v587
    %1347 = vmatprep.subr.mxu0 %v591
    %1348 = vmatpush1.msra.mxu0 %v590
    %1349 = vmatprep.subr.mxu0 %v594
    %1350 = vmatpush1.msra.mxu0 %v593
    %1351 = vmatprep.subr.mxu0 %v597
    %1352 = vmatpush1.msra.mxu0 %v596
    %1353 = vmatprep.subr.mxu0 %v600
    %1354 = vmatpush1.msra.mxu0 %v599
    %1355 = vmatprep.subr.mxu0 %v603
    %1356 = vmatpush1.msra.mxu0 %v602
    %1357 = vmatprep.subr.mxu0 %v606
    %1358 = vmatpush1.msra.mxu0 %v605
    %1359 = vmatprep.subr.mxu0 %v609
    %1360 = vmatpush1.msra.mxu0 %v608
    %1361 = vmatprep.subr.mxu0 %v612
    %1362 = vmatpush1.msra.mxu0 %v611
    %1363 = vmatprep.subr.mxu0 %v615
    %1364 = vmatpush1.msra.mxu0 %v614
    %1365 = vmatprep.subr.mxu0 %v618
    %1366 = vmatpush1.msra.mxu0 %v617
    %1367 = vmatprep.mubr.f32.mxu0 %v509
    %1368 = vmatmul.mubr.f32.gmra.mrb[0].mxu0 %v508
    %v1369 = vpop.f32.mrb[0].mxu0
    %v1370 = vadd.f32 %v1102, %v1369
    %v1371 = vpop.f32.mrb[0].mxu0
    %v1372 = vadd.f32 %v1104, %v1371
    %1373 = vmatprep.mubr.f32.mxu0 %v513
    %1374 = vmatmul.mubr.f32.gmra.mrb[0].mxu0 %v512
    %v1375 = vpop.f32.mrb[0].mxu0
    %v1376 = vadd.f32 %v1108, %v1375
    %v1377 = vpop.f32.mrb[0].mxu0
    %v1378 = vadd.f32 %v1110, %v1377
    %1379 = vmatprep.mubr.f32.mxu0 %v517
    %1380 = vmatmul.mubr.f32.gmra.mrb[0].mxu0 %v516
    %v1381 = vpop.f32.mrb[0].mxu0
    %v1382 = vadd.f32 %v1114, %v1381
    %v1383 = vpop.f32.mrb[0].mxu0
    %v1384 = vadd.f32 %v1116, %v1383
    %1385 = vmatprep.mubr.f32.mxu0 %v521
    %1386 = vmatmul.mubr.f32.gmra.mrb[0].mxu0 %v520
    %v1387 = vpop.f32.mrb[0].mxu0
    %v1388 = vadd.f32 %v1120, %v1387
    %v1389 = vpop.f32.mrb[0].mxu0
    %v1390 = vadd.f32 %v1122, %v1389
    %1391 = vdwg.mxu0
    %1392 = vmatprep.subr.mxu0 %v621
    %1393 = vmatpush1.msra.mxu0 %v620
    %1394 = vmatprep.subr.mxu0 %v624
    %1395 = vmatpush1.msra.mxu0 %v623
    %1396 = vmatprep.subr.mxu0 %v627
    %1397 = vmatpush1.msra.mxu0 %v626
    %1398 = vmatprep.subr.mxu0 %v630
    %1399 = vmatpush1.msra.mxu0 %v629
    %1400 = vmatprep.subr.mxu0 %v633
    %1401 = vmatpush1.msra.mxu0 %v632
    %1402 = vmatprep.subr.mxu0 %v636
    %1403 = vmatpush1.msra.mxu0 %v635
    %1404 = vmatprep.subr.mxu0 %v639
    %1405 = vmatpush1.msra.mxu0 %v638
    %1406 = vmatprep.subr.mxu0 %v642
    %1407 = vmatpush1.msra.mxu0 %v641
    %1408 = vmatprep.subr.mxu0 %v645
    %1409 = vmatpush1.msra.mxu0 %v644
    %1410 = vmatprep.subr.mxu0 %v648
    %1411 = vmatpush1.msra.mxu0 %v647
    %1412 = vmatprep.subr.mxu0 %v651
    %1413 = vmatpush1.msra.mxu0 %v650
    %1414 = vmatprep.subr.mxu0 %v654
    %1415 = vmatpush1.msra.mxu0 %v653
    %1416 = vmatprep.subr.mxu0 %v657
    %1417 = vmatpush1.msra.mxu0 %v656
    %1418 = vmatprep.subr.mxu0 %v660
    %1419 = vmatpush1.msra.mxu0 %v659
    %1420 = vmatprep.subr.mxu0 %v663
    %1421 = vmatpush1.msra.mxu0 %v662
    %1422 = vmatprep.subr.mxu0 %v666
    %1423 = vmatpush1.msra.mxu0 %v665
    %1424 = vmatprep.subr.mxu0 %v669
    %1425 = vmatpush1.msra.mxu0 %v668
    %1426 = vmatprep.subr.mxu0 %v672
    %1427 = vmatpush1.msra.mxu0 %v671
    %1428 = vmatprep.subr.mxu0 %v675
    %1429 = vmatpush1.msra.mxu0 %v674
    %1430 = vmatprep.subr.mxu0 %v678
    %1431 = vmatpush1.msra.mxu0 %v677
    %1432 = vmatprep.subr.mxu0 %v681
    %1433 = vmatpush1.msra.mxu0 %v680
    %1434 = vmatprep.subr.mxu0 %v684
    %1435 = vmatpush1.msra.mxu0 %v683
    %1436 = vmatprep.subr.mxu0 %v687
    %1437 = vmatpush1.msra.mxu0 %v686
    %1438 = vmatprep.subr.mxu0 %v690
    %1439 = vmatpush1.msra.mxu0 %v689
    %1440 = vmatprep.subr.mxu0 0.0
    %1441 = vmatpush1.msra.mxu0 0.0
    %1442 = vmatprep.subr.mxu0 0.0
    %1443 = vmatpush1.msra.mxu0 0.0
    %1444 = vmatprep.subr.mxu0 0.0
    %1445 = vmatpush1.msra.mxu0 0.0
    %1446 = vmatprep.subr.mxu0 0.0
    %1447 = vmatpush1.msra.mxu0 0.0
    %1448 = vmatprep.subr.mxu0 0.0
    %1449 = vmatpush1.msra.mxu0 0.0
    %1450 = vmatprep.subr.mxu0 0.0
    %1451 = vmatpush1.msra.mxu0 0.0
    %1452 = vmatprep.subr.mxu0 0.0
    %1453 = vmatpush1.msra.mxu0 0.0
    %1454 = vmatprep.subr.mxu0 0.0
    %1455 = vmatpush1.msra.mxu0 0.0
    %1456 = vmatprep.mubr.f32.mxu0 %v1295
    %1457 = vmatmul.mubr.f32.gmra.mrb[0].mxu0 %v510
    %v1458 = vpop.f32.mrb[0].mxu0
    %v1459 = vadd.f32 %v1370, %v1458
    %v1460 = vpop.f32.mrb[0].mxu0
    %v1461 = vadd.f32 %v1372, %v1460
    %1462 = vmatprep.mubr.f32.mxu0 %v1297
    %1463 = vmatmul.mubr.f32.gmra.mrb[0].mxu0 %v514
    %v1464 = vpop.f32.mrb[0].mxu0
    %v1465 = vadd.f32 %v1376, %v1464
    %v1466 = vpop.f32.mrb[0].mxu0
    %v1467 = vadd.f32 %v1378, %v1466
    %1468 = vmatprep.mubr.f32.mxu0 %v1299
    %1469 = vmatmul.mubr.f32.gmra.mrb[0].mxu0 %v518
    %v1470 = vpop.f32.mrb[0].mxu0
    %v1471 = vadd.f32 %v1382, %v1470
    %v1472 = vpop.f32.mrb[0].mxu0
    %v1473 = vadd.f32 %v1384, %v1472
    %1474 = vmatprep.mubr.f32.mxu0 %v1301
    %1475 = vmatmul.mubr.f32.gmra.mrb[0].mxu0 %v522
    %v1476 = vpop.f32.mrb[0].mxu0
    %v1477 = vadd.f32 %v1388, %v1476
    %v1478 = vpop.f32.mrb[0].mxu0
    %v1479 = vadd.f32 %v1390, %v1478
    %1480 = vdwg.mxu0
    %1481 = vmatprep.subr.mxu0 0.0
    %1482 = vmatpush1.msra.mxu0 %v526
    %1483 = vmatprep.subr.mxu0 0.0
    %1484 = vmatpush1.msra.mxu0 %v529
    %1485 = vmatprep.subr.mxu0 0.0
    %1486 = vmatpush1.msra.mxu0 %v532
    %1487 = vmatprep.subr.mxu0 0.0
    %1488 = vmatpush1.msra.mxu0 %v535
    %1489 = vmatprep.subr.mxu0 0.0
    %1490 = vmatpush1.msra.mxu0 %v538
    %1491 = vmatprep.subr.mxu0 0.0
    %1492 = vmatpush1.msra.mxu0 %v541
    %1493 = vmatprep.subr.mxu0 0.0
    %1494 = vmatpush1.msra.mxu0 %v544
    %1495 = vmatprep.subr.mxu0 0.0
    %1496 = vmatpush1.msra.mxu0 %v547
    %1497 = vmatprep.subr.mxu0 0.0
    %1498 = vmatpush1.msra.mxu0 %v550
    %1499 = vmatprep.subr.mxu0 0.0
    %1500 = vmatpush1.msra.mxu0 %v553
    %1501 = vmatprep.subr.mxu0 0.0
    %1502 = vmatpush1.msra.mxu0 %v556
    %1503 = vmatprep.subr.mxu0 0.0
    %1504 = vmatpush1.msra.mxu0 %v559
    %1505 = vmatprep.subr.mxu0 0.0
    %1506 = vmatpush1.msra.mxu0 %v562
    %1507 = vmatprep.subr.mxu0 0.0
    %1508 = vmatpush1.msra.mxu0 %v565
    %1509 = vmatprep.subr.mxu0 0.0
    %1510 = vmatpush1.msra.mxu0 %v568
    %1511 = vmatprep.subr.mxu0 0.0
    %1512 = vmatpush1.msra.mxu0 %v571
    %1513 = vmatprep.subr.mxu0 0.0
    %1514 = vmatpush1.msra.mxu0 %v574
    %1515 = vmatprep.subr.mxu0 0.0
    %1516 = vmatpush1.msra.mxu0 %v577
    %1517 = vmatprep.subr.mxu0 0.0
    %1518 = vmatpush1.msra.mxu0 %v580
    %1519 = vmatprep.subr.mxu0 0.0
    %1520 = vmatpush1.msra.mxu0 %v583
    %1521 = vmatprep.subr.mxu0 0.0
    %1522 = vmatpush1.msra.mxu0 %v586
    %1523 = vmatprep.subr.mxu0 0.0
    %1524 = vmatpush1.msra.mxu0 %v589
    %1525 = vmatprep.subr.mxu0 0.0
    %1526 = vmatpush1.msra.mxu0 %v592
    %1527 = vmatprep.subr.mxu0 0.0
    %1528 = vmatpush1.msra.mxu0 %v595
    %1529 = vmatprep.subr.mxu0 0.0
    %1530 = vmatpush1.msra.mxu0 %v598
    %1531 = vmatprep.subr.mxu0 0.0
    %1532 = vmatpush1.msra.mxu0 %v601
    %1533 = vmatprep.subr.mxu0 0.0
    %1534 = vmatpush1.msra.mxu0 %v604
    %1535 = vmatprep.subr.mxu0 0.0
    %1536 = vmatpush1.msra.mxu0 %v607
    %1537 = vmatprep.subr.mxu0 0.0
    %1538 = vmatpush1.msra.mxu0 %v610
    %1539 = vmatprep.subr.mxu0 0.0
    %1540 = vmatpush1.msra.mxu0 %v613
    %1541 = vmatprep.subr.mxu0 0.0
    %1542 = vmatpush1.msra.mxu0 %v616
    %1543 = vmatprep.subr.mxu0 0.0
    %1544 = vmatpush1.msra.mxu0 %v619
    %1545 = vmatprep.mubr.f32.mxu0 %v509
    %1546 = vmatmul.mubr.f32.gmra.mrb[0].mxu0 %v508
    %v1547 = vpop.f32.mrb[0].mxu0
    %v1548 = vadd.f32 %v1276, %v1547
    %v1549 = vpop.f32.mrb[0].mxu0
    %1550 = vmatprep.mubr.f32.mxu0 %v513
    %1551 = vmatmul.mubr.f32.gmra.mrb[0].mxu0 %v512
    %v1552 = vpop.f32.mrb[0].mxu0
    %v1553 = vadd.f32 %v1281, %v1552
    %v1554 = vpop.f32.mrb[0].mxu0
    %1555 = vmatprep.mubr.f32.mxu0 %v517
    %1556 = vmatmul.mubr.f32.gmra.mrb[0].mxu0 %v516
    %v1557 = vpop.f32.mrb[0].mxu0
    %v1558 = vadd.f32 %v1286, %v1557
    %v1559 = vpop.f32.mrb[0].mxu0
    %1560 = vmatprep.mubr.f32.mxu0 %v521
    %1561 = vmatmul.mubr.f32.gmra.mrb[0].mxu0 %v520
    %v1562 = vpop.f32.mrb[0].mxu0
    %v1563 = vadd.f32 %v1291, %v1562
    %v1564 = vpop.f32.mrb[0].mxu0
    %1565 = vdwg.mxu0
    %1566 = vmatprep.subr.mxu0 0.0
    %1567 = vmatpush1.msra.mxu0 %v622
    %1568 = vmatprep.subr.mxu0 0.0
    %1569 = vmatpush1.msra.mxu0 %v625
    %1570 = vmatprep.subr.mxu0 0.0
    %1571 = vmatpush1.msra.mxu0 %v628
    %1572 = vmatprep.subr.mxu0 0.0
    %1573 = vmatpush1.msra.mxu0 %v631
    %1574 = vmatprep.subr.mxu0 0.0
    %1575 = vmatpush1.msra.mxu0 %v634
    %1576 = vmatprep.subr.mxu0 0.0
    %1577 = vmatpush1.msra.mxu0 %v637
    %1578 = vmatprep.subr.mxu0 0.0
    %1579 = vmatpush1.msra.mxu0 %v640
    %1580 = vmatprep.subr.mxu0 0.0
    %1581 = vmatpush1.msra.mxu0 %v643
    %1582 = vmatprep.subr.mxu0 0.0
    %1583 = vmatpush1.msra.mxu0 %v646
    %1584 = vmatprep.subr.mxu0 0.0
    %1585 = vmatpush1.msra.mxu0 %v649
    %1586 = vmatprep.subr.mxu0 0.0
    %1587 = vmatpush1.msra.mxu0 %v652
    %1588 = vmatprep.subr.mxu0 0.0
    %1589 = vmatpush1.msra.mxu0 %v655
    %1590 = vmatprep.subr.mxu0 0.0
    %1591 = vmatpush1.msra.mxu0 %v658
    %1592 = vmatprep.subr.mxu0 0.0
    %1593 = vmatpush1.msra.mxu0 %v661
    %1594 = vmatprep.subr.mxu0 0.0
    %1595 = vmatpush1.msra.mxu0 %v664
    %1596 = vmatprep.subr.mxu0 0.0
    %1597 = vmatpush1.msra.mxu0 %v667
    %1598 = vmatprep.subr.mxu0 0.0
    %1599 = vmatpush1.msra.mxu0 %v670
    %1600 = vmatprep.subr.mxu0 0.0
    %1601 = vmatpush1.msra.mxu0 %v673
    %1602 = vmatprep.subr.mxu0 0.0
    %1603 = vmatpush1.msra.mxu0 %v676
    %1604 = vmatprep.subr.mxu0 0.0
    %1605 = vmatpush1.msra.mxu0 %v679
    %1606 = vmatprep.subr.mxu0 0.0
    %1607 = vmatpush1.msra.mxu0 %v682
    %1608 = vmatprep.subr.mxu0 0.0
    %1609 = vmatpush1.msra.mxu0 %v685
    %1610 = vmatprep.subr.mxu0 0.0
    %1611 = vmatpush1.msra.mxu0 %v688
    %1612 = vmatprep.subr.mxu0 0.0
    %1613 = vmatpush1.msra.mxu0 %v691
    %1614 = vmatprep.subr.mxu0 0.0
    %1615 = vmatpush1.msra.mxu0 0.0
    %1616 = vmatprep.subr.mxu0 0.0
    %1617 = vmatpush1.msra.mxu0 0.0
    %1618 = vmatprep.subr.mxu0 0.0
    %1619 = vmatpush1.msra.mxu0 0.0
    %1620 = vmatprep.subr.mxu0 0.0
    %1621 = vmatpush1.msra.mxu0 0.0
    %1622 = vmatprep.subr.mxu0 0.0
    %1623 = vmatpush1.msra.mxu0 0.0
    %1624 = vmatprep.subr.mxu0 0.0
    %1625 = vmatpush1.msra.mxu0 0.0
    %1626 = vmatprep.subr.mxu0 0.0
    %1627 = vmatpush1.msra.mxu0 0.0
    %1628 = vmatprep.subr.mxu0 0.0
    %1629 = vmatpush1.msra.mxu0 0.0
    %1630 = vmatprep.mubr.f32.mxu0 %v1295
    %1631 = vmatmul.mubr.f32.gmra.mrb[0].mxu0 %v510
    %v1632 = vpop.f32.mrb[0].mxu0
    %v1633 = vadd.f32 %v1548, %v1632
    %v1634 = vpop.f32.mrb[0].mxu0
    %1635 = vmatprep.mubr.f32.mxu0 %v1297
    %1636 = vmatmul.mubr.f32.gmra.mrb[0].mxu0 %v514
    %v1637 = vpop.f32.mrb[0].mxu0
    %v1638 = vadd.f32 %v1553, %v1637
    %v1639 = vpop.f32.mrb[0].mxu0
    %1640 = vmatprep.mubr.f32.mxu0 %v1299
    %1641 = vmatmul.mubr.f32.gmra.mrb[0].mxu0 %v518
    %v1642 = vpop.f32.mrb[0].mxu0
    %v1643 = vadd.f32 %v1558, %v1642
    %v1644 = vpop.f32.mrb[0].mxu0
    %1645 = vmatprep.mubr.f32.mxu0 %v1301
    %1646 = vmatmul.mubr.f32.gmra.mrb[0].mxu0 %v522
    %v1647 = vpop.f32.mrb[0].mxu0
    %v1648 = vadd.f32 %v1563, %v1647
    %v1649 = vpop.f32.mrb[0].mxu0
    %1650 = vdwg.mxu0
    %v1651 = vld [vmem:[#allocation3] sm:$0xfc]
    %v1652 = vld [vmem:[#allocation3 + $0x8] sm:$0xfc]
    %v1653 = vld [vmem:[#allocation3 + $0x10] sm:$0xfc]
    %v1654 = vld [vmem:[#allocation3 + $0x18] sm:$0xfc]
    %v1655 = vld [vmem:[#allocation3 + $0x80] sm:$0x3]
    %v1656 = vld [vmem:[#allocation3 + $0x88] sm:$0x3]
    %v1657 = vld [vmem:[#allocation3 + $0x90] sm:$0x3]
    %v1658 = vld [vmem:[#allocation3 + $0x98] sm:$0x3]
    %s1659 = scalar_lea.vmem [#allocation14], 2688
    %v1660 = vld [vmem:[%s1659] sm:$0xff]
    %v1661 = vld [vmem:[%s1659 + $0x8] sm:$0xff]
    %v1662 = vld [vmem:[%s1659 + $0x10] sm:$0xff]
    %v1663 = vld [vmem:[%s1659 + $0x18] sm:$0xff]
    %v1664 = vld [vmem:[%s1659 + $0x20] sm:$0xff]
    %v1665 = vld [vmem:[%s1659 + $0x28] sm:$0xff]
    %v1666 = vld [vmem:[%s1659 + $0x30] sm:$0xff]
    %v1667 = vld [vmem:[%s1659 + $0x38] sm:$0xff]
    %v1668 = vld [vmem:[%s1659 + $0x40] sm:$0xff]
    %v1669 = vld [vmem:[%s1659 + $0x48] sm:$0xff]
    %v1670 = vld [vmem:[%s1659 + $0x50] sm:$0xff]
    %v1671 = vld [vmem:[%s1659 + $0x58] sm:$0xff]
    %v1672 = vld [vmem:[%s1659 + $0x60] sm:$0xff]
    %v1673 = vld [vmem:[%s1659 + $0x68] sm:$0xff]
    %v1674 = vld [vmem:[%s1659 + $0x70] sm:$0xff]
    %v1675 = vld [vmem:[%s1659 + $0x78] sm:$0xff]
    %v1676 = vld [vmem:[%s1659 + $0x80] sm:$0xff]
    %v1677 = vld [vmem:[%s1659 + $0x88] sm:$0xff]
    %v1678 = vld [vmem:[%s1659 + $0x90] sm:$0xff]
    %v1679 = vld [vmem:[%s1659 + $0x98] sm:$0xff]
    %v1680 = vld [vmem:[%s1659 + $0xa0] sm:$0xff]
    %v1681 = vld [vmem:[%s1659 + $0xa8] sm:$0xff]
    %v1682 = vld [vmem:[%s1659 + $0xb0] sm:$0xff]
    %v1683 = vld [vmem:[%s1659 + $0xb8] sm:$0xff]
    %v1684 = vld [vmem:[%s1659 + $0xc0] sm:$0xff]
    %v1685 = vld [vmem:[%s1659 + $0xc8] sm:$0xff]
    %v1686 = vld [vmem:[%s1659 + $0xd0] sm:$0xff]
    %v1687 = vld [vmem:[%s1659 + $0xd8] sm:$0xff]
    %v1688 = vld [vmem:[%s1659 + $0xe0] sm:$0xff]
    %v1689 = vld [vmem:[%s1659 + $0xe8] sm:$0xff]
    %v1690 = vld [vmem:[%s1659 + $0xf0] sm:$0xff]
    %v1691 = vld [vmem:[%s1659 + $0xf8] sm:$0xff]
    %v1692 = vld [vmem:[%s1659 + $0x100] sm:$0xff]
    %v1693 = vld [vmem:[%s1659 + $0x108] sm:$0xff]
    %v1694 = vld [vmem:[%s1659 + $0x110] sm:$0xff]
    %v1695 = vld [vmem:[%s1659 + $0x118] sm:$0xff]
    %v1696 = vld [vmem:[%s1659 + $0x120] sm:$0xff]
    %v1697 = vld [vmem:[%s1659 + $0x128] sm:$0xff]
    %v1698 = vld [vmem:[%s1659 + $0x130] sm:$0xff]
    %v1699 = vld [vmem:[%s1659 + $0x138] sm:$0xff]
    %v1700 = vld [vmem:[%s1659 + $0x140] sm:$0xff]
    %v1701 = vld [vmem:[%s1659 + $0x148] sm:$0xff]
    %v1702 = vld [vmem:[%s1659 + $0x150] sm:$0xff]
    %v1703 = vld [vmem:[%s1659 + $0x158] sm:$0xff]
    %v1704 = vld [vmem:[%s1659 + $0x160] sm:$0xff]
    %v1705 = vld [vmem:[%s1659 + $0x168] sm:$0xff]
    %v1706 = vld [vmem:[%s1659 + $0x170] sm:$0xff]
    %v1707 = vld [vmem:[%s1659 + $0x178] sm:$0xff]
    %v1708 = vld [vmem:[%s1659 + $0x180] sm:$0xff]
    %v1709 = vld [vmem:[%s1659 + $0x188] sm:$0xff]
    %v1710 = vld [vmem:[%s1659 + $0x190] sm:$0xff]
    %v1711 = vld [vmem:[%s1659 + $0x198] sm:$0xff]
    %v1712 = vld [vmem:[%s1659 + $0x1a0] sm:$0xff]
    %v1713 = vld [vmem:[%s1659 + $0x1a8] sm:$0xff]
    %v1714 = vld [vmem:[%s1659 + $0x1b0] sm:$0xff]
    %v1715 = vld [vmem:[%s1659 + $0x1b8] sm:$0xff]
    %v1716 = vld [vmem:[%s1659 + $0x1c0] sm:$0xff]
    %v1717 = vld [vmem:[%s1659 + $0x1c8] sm:$0xff]
    %v1718 = vld [vmem:[%s1659 + $0x1d0] sm:$0xff]
    %v1719 = vld [vmem:[%s1659 + $0x1d8] sm:$0xff]
    %v1720 = vld [vmem:[%s1659 + $0x1e0] sm:$0xff]
    %v1721 = vld [vmem:[%s1659 + $0x1e8] sm:$0xff]
    %v1722 = vld [vmem:[%s1659 + $0x1f0] sm:$0xff]
    %v1723 = vld [vmem:[%s1659 + $0x1f8] sm:$0xff]
    %v1724 = vld [vmem:[%s1659 + $0x200] sm:$0xff]
    %v1725 = vld [vmem:[%s1659 + $0x208] sm:$0xff]
    %v1726 = vld [vmem:[%s1659 + $0x210] sm:$0xff]
    %v1727 = vld [vmem:[%s1659 + $0x218] sm:$0xff]
    %v1728 = vld [vmem:[%s1659 + $0x220] sm:$0xff]
    %v1729 = vld [vmem:[%s1659 + $0x228] sm:$0xff]
    %v1730 = vld [vmem:[%s1659 + $0x230] sm:$0xff]
    %v1731 = vld [vmem:[%s1659 + $0x238] sm:$0xff]
    %v1732 = vld [vmem:[%s1659 + $0x240] sm:$0xff]
    %v1733 = vld [vmem:[%s1659 + $0x248] sm:$0xff]
    %v1734 = vld [vmem:[%s1659 + $0x250] sm:$0xff]
    %v1735 = vld [vmem:[%s1659 + $0x258] sm:$0xff]
    %v1736 = vld [vmem:[%s1659 + $0x260] sm:$0xff]
    %v1737 = vld [vmem:[%s1659 + $0x268] sm:$0xff]
    %v1738 = vld [vmem:[%s1659 + $0x270] sm:$0xff]
    %v1739 = vld [vmem:[%s1659 + $0x278] sm:$0xff]
    %v1740 = vld [vmem:[%s1659 + $0x280] sm:$0xff]
    %v1741 = vld [vmem:[%s1659 + $0x288] sm:$0xff]
    %v1742 = vld [vmem:[%s1659 + $0x290] sm:$0xff]
    %v1743 = vld [vmem:[%s1659 + $0x298] sm:$0xff]
    %v1744 = vld [vmem:[%s1659 + $0x2a0] sm:$0xff]
    %v1745 = vld [vmem:[%s1659 + $0x2a8] sm:$0xff]
    %v1746 = vld [vmem:[%s1659 + $0x2b0] sm:$0xff]
    %v1747 = vld [vmem:[%s1659 + $0x2b8] sm:$0xff]
    %v1748 = vld [vmem:[%s1659 + $0x2c0] sm:$0xff]
    %v1749 = vld [vmem:[%s1659 + $0x2c8] sm:$0xff]
    %v1750 = vld [vmem:[%s1659 + $0x2d0] sm:$0xff]
    %v1751 = vld [vmem:[%s1659 + $0x2d8] sm:$0xff]
    %v1752 = vld [vmem:[%s1659 + $0x2e0] sm:$0xff]
    %v1753 = vld [vmem:[%s1659 + $0x2e8] sm:$0xff]
    %v1754 = vld [vmem:[%s1659 + $0x2f0] sm:$0xff]
    %v1755 = vld [vmem:[%s1659 + $0x2f8] sm:$0xff]
    %v1756 = vld [vmem:[%s1659 + $0x300] sm:$0xff]
    %v1757 = vld [vmem:[%s1659 + $0x308] sm:$0xff]
    %v1758 = vld [vmem:[%s1659 + $0x310] sm:$0xff]
    %v1759 = vld [vmem:[%s1659 + $0x318] sm:$0xff]
    %v1760 = vld [vmem:[%s1659 + $0x320] sm:$0xff]
    %v1761 = vld [vmem:[%s1659 + $0x328] sm:$0xff]
    %v1762 = vld [vmem:[%s1659 + $0x330] sm:$0xff]
    %v1763 = vld [vmem:[%s1659 + $0x338] sm:$0xff]
    %v1764 = vld [vmem:[%s1659 + $0x340] sm:$0xff]
    %v1765 = vld [vmem:[%s1659 + $0x348] sm:$0xff]
    %v1766 = vld [vmem:[%s1659 + $0x350] sm:$0xff]
    %v1767 = vld [vmem:[%s1659 + $0x358] sm:$0xff]
    %v1768 = vld [vmem:[%s1659 + $0x360] sm:$0xff]
    %v1769 = vld [vmem:[%s1659 + $0x368] sm:$0xff]
    %v1770 = vld [vmem:[%s1659 + $0x370] sm:$0xff]
    %v1771 = vld [vmem:[%s1659 + $0x378] sm:$0xff]
    %v1772 = vld [vmem:[%s1659 + $0x380] sm:$0xff]
    %v1773 = vld [vmem:[%s1659 + $0x388] sm:$0xff]
    %v1774 = vld [vmem:[%s1659 + $0x390] sm:$0xff]
    %v1775 = vld [vmem:[%s1659 + $0x398] sm:$0xff]
    %v1776 = vld [vmem:[%s1659 + $0x3a0] sm:$0xff]
    %v1777 = vld [vmem:[%s1659 + $0x3a8] sm:$0xff]
    %v1778 = vld [vmem:[%s1659 + $0x3b0] sm:$0xff]
    %v1779 = vld [vmem:[%s1659 + $0x3b8] sm:$0xff]
    %v1780 = vld [vmem:[%s1659 + $0x3c0] sm:$0xff]
    %v1781 = vld [vmem:[%s1659 + $0x3c8] sm:$0xff]
    %v1782 = vld [vmem:[%s1659 + $0x3d0] sm:$0xff]
    %v1783 = vld [vmem:[%s1659 + $0x3d8] sm:$0xff]
    %v1784 = vld [vmem:[%s1659 + $0x3e0] sm:$0xff]
    %v1785 = vld [vmem:[%s1659 + $0x3e8] sm:$0xff]
    %v1786 = vld [vmem:[%s1659 + $0x3f0] sm:$0xff]
    %v1787 = vld [vmem:[%s1659 + $0x3f8] sm:$0xff]
    %v1788 = vld [vmem:[%s1659 + $0x400] sm:$0xff]
    %v1789 = vld [vmem:[%s1659 + $0x408] sm:$0xff]
    %v1790 = vld [vmem:[%s1659 + $0x410] sm:$0xff]
    %v1791 = vld [vmem:[%s1659 + $0x418] sm:$0xff]
    %v1792 = vld [vmem:[%s1659 + $0x420] sm:$0xff]
    %v1793 = vld [vmem:[%s1659 + $0x428] sm:$0xff]
    %v1794 = vld [vmem:[%s1659 + $0x430] sm:$0xff]
    %v1795 = vld [vmem:[%s1659 + $0x438] sm:$0xff]
    %v1796 = vld [vmem:[%s1659 + $0x440] sm:$0xff]
    %v1797 = vld [vmem:[%s1659 + $0x448] sm:$0xff]
    %v1798 = vld [vmem:[%s1659 + $0x450] sm:$0xff]
    %v1799 = vld [vmem:[%s1659 + $0x458] sm:$0xff]
    %v1800 = vld [vmem:[%s1659 + $0x460] sm:$0xff]
    %v1801 = vld [vmem:[%s1659 + $0x468] sm:$0xff]
    %v1802 = vld [vmem:[%s1659 + $0x470] sm:$0xff]
    %v1803 = vld [vmem:[%s1659 + $0x478] sm:$0xff]
    %v1804 = vld [vmem:[%s1659 + $0x480] sm:$0xff]
    %v1805 = vld [vmem:[%s1659 + $0x488] sm:$0xff]
    %v1806 = vld [vmem:[%s1659 + $0x490] sm:$0xff]
    %v1807 = vld [vmem:[%s1659 + $0x498] sm:$0xff]
    %v1808 = vld [vmem:[%s1659 + $0x4a0] sm:$0xff]
    %v1809 = vld [vmem:[%s1659 + $0x4a8] sm:$0xff]
    %v1810 = vld [vmem:[%s1659 + $0x4b0] sm:$0xff]
    %v1811 = vld [vmem:[%s1659 + $0x4b8] sm:$0xff]
    %v1812 = vld [vmem:[%s1659 + $0x4c0] sm:$0xff]
    %v1813 = vld [vmem:[%s1659 + $0x4c8] sm:$0xff]
    %v1814 = vld [vmem:[%s1659 + $0x4d0] sm:$0xff]
    %v1815 = vld [vmem:[%s1659 + $0x4d8] sm:$0xff]
    %v1816 = vld [vmem:[%s1659 + $0x4e0] sm:$0xff]
    %v1817 = vld [vmem:[%s1659 + $0x4e8] sm:$0xff]
    %v1818 = vld [vmem:[%s1659 + $0x4f0] sm:$0xff]
    %v1819 = vld [vmem:[%s1659 + $0x4f8] sm:$0xff]
    %v1820 = vld [vmem:[%s1659 + $0x500] sm:$0xff]
    %v1821 = vld [vmem:[%s1659 + $0x508] sm:$0xff]
    %v1822 = vld [vmem:[%s1659 + $0x510] sm:$0xff]
    %v1823 = vld [vmem:[%s1659 + $0x518] sm:$0xff]
    %v1824 = vld [vmem:[%s1659 + $0x520] sm:$0xff]
    %v1825 = vld [vmem:[%s1659 + $0x528] sm:$0xff]
    %v1826 = vld [vmem:[%s1659 + $0x530] sm:$0xff]
    %v1827 = vld [vmem:[%s1659 + $0x538] sm:$0xff]
    %vm1836 = vcmask 1045504
    %v1837 = vrot.slane %v1651, 2
    %v1838 = vrot.slane %v512, 2
    %v1839 = vsel %vm1836, %v1837, %v1838
    %v1840 = vrot.slane %v1652, 2
    %v1841 = vrot.slane %v513, 2
    %v1842 = vsel %vm1836, %v1840, %v1841
    %v1843 = vrot.slane %v1653, 2
    %v1844 = vrot.slane %v514, 2
    %v1845 = vsel %vm1836, %v1843, %v1844
    %v1846 = vrot.slane %v1654, 2
    %v1847 = vrot.slane %v515, 2
    %v1848 = vsel %vm1836, %v1846, %v1847
    %v1849 = vrot.slane %v516, 2
    %v1850 = vsel %vm1836, %v1838, %v1849
    %v1851 = vrot.slane %v517, 2
    %v1852 = vsel %vm1836, %v1841, %v1851
    %v1853 = vrot.slane %v518, 2
    %v1854 = vsel %vm1836, %v1844, %v1853
    %v1855 = vrot.slane %v519, 2
    %v1856 = vsel %vm1836, %v1847, %v1855
    %v1857 = vrot.slane %v520, 2
    %v1858 = vsel %vm1836, %v1849, %v1857
    %v1859 = vrot.slane %v521, 2
    %v1860 = vsel %vm1836, %v1851, %v1859
    %v1861 = vrot.slane %v522, 2
    %v1862 = vsel %vm1836, %v1853, %v1861
    %v1863 = vrot.slane %v523, 2
    %v1864 = vsel %vm1836, %v1855, %v1863
    %v1865 = vrot.slane %v1655, 2
    %v1866 = vsel %vm1836, %v1857, %v1865
    %v1867 = vrot.slane %v1656, 2
    %v1868 = vsel %vm1836, %v1859, %v1867
    %v1869 = vrot.slane %v1657, 2
    %v1870 = vsel %vm1836, %v1861, %v1869
    %v1871 = vrot.slane %v1658, 2
    %v1872 = vsel %vm1836, %v1863, %v1871
    %v1885 = vsel %vm490, %v1848, 0
    %v1887 = vsel %vm490, %v1856, 0
    %v1889 = vsel %vm490, %v1864, 0
    %v1891 = vsel %vm490, %v1872, 0
    %1893 = vmatprep.subr.mxu0 %v1661
    %1894 = vmatpush1.msra.mxu0 %v1660
    %1895 = vmatprep.subr.mxu0 %v1664
    %1896 = vmatpush1.msra.mxu0 %v1663
    %1897 = vmatprep.subr.mxu0 %v1667
    %1898 = vmatpush1.msra.mxu0 %v1666
    %1899 = vmatprep.subr.mxu0 %v1670
    %1900 = vmatpush1.msra.mxu0 %v1669
    %1901 = vmatprep.subr.mxu0 %v1673
    %1902 = vmatpush1.msra.mxu0 %v1672
    %1903 = vmatprep.subr.mxu0 %v1676
    %1904 = vmatpush1.msra.mxu0 %v1675
    %1905 = vmatprep.subr.mxu0 %v1679
    %1906 = vmatpush1.msra.mxu0 %v1678
    %1907 = vmatprep.subr.mxu0 %v1682
    %1908 = vmatpush1.msra.mxu0 %v1681
    %1909 = vmatprep.subr.mxu0 %v1685
    %1910 = vmatpush1.msra.mxu0 %v1684
    %1911 = vmatprep.subr.mxu0 %v1688
    %1912 = vmatpush1.msra.mxu0 %v1687
    %1913 = vmatprep.subr.mxu0 %v1691
    %1914 = vmatpush1.msra.mxu0 %v1690
    %1915 = vmatprep.subr.mxu0 %v1694
    %1916 = vmatpush1.msra.mxu0 %v1693
    %1917 = vmatprep.subr.mxu0 %v1697
    %1918 = vmatpush1.msra.mxu0 %v1696
    %1919 = vmatprep.subr.mxu0 %v1700
    %1920 = vmatpush1.msra.mxu0 %v1699
    %1921 = vmatprep.subr.mxu0 %v1703
    %1922 = vmatpush1.msra.mxu0 %v1702
    %1923 = vmatprep.subr.mxu0 %v1706
    %1924 = vmatpush1.msra.mxu0 %v1705
    %1925 = vmatprep.subr.mxu0 %v1709
    %1926 = vmatpush1.msra.mxu0 %v1708
    %1927 = vmatprep.subr.mxu0 %v1712
    %1928 = vmatpush1.msra.mxu0 %v1711
    %1929 = vmatprep.subr.mxu0 %v1715
    %1930 = vmatpush1.msra.mxu0 %v1714
    %1931 = vmatprep.subr.mxu0 %v1718
    %1932 = vmatpush1.msra.mxu0 %v1717
    %1933 = vmatprep.subr.mxu0 %v1721
    %1934 = vmatpush1.msra.mxu0 %v1720
    %1935 = vmatprep.subr.mxu0 %v1724
    %1936 = vmatpush1.msra.mxu0 %v1723
    %1937 = vmatprep.subr.mxu0 %v1727
    %1938 = vmatpush1.msra.mxu0 %v1726
    %1939 = vmatprep.subr.mxu0 %v1730
    %1940 = vmatpush1.msra.mxu0 %v1729
    %1941 = vmatprep.subr.mxu0 %v1733
    %1942 = vmatpush1.msra.mxu0 %v1732
    %1943 = vmatprep.subr.mxu0 %v1736
    %1944 = vmatpush1.msra.mxu0 %v1735
    %1945 = vmatprep.subr.mxu0 %v1739
    %1946 = vmatpush1.msra.mxu0 %v1738
    %1947 = vmatprep.subr.mxu0 %v1742
    %1948 = vmatpush1.msra.mxu0 %v1741
    %1949 = vmatprep.subr.mxu0 %v1745
    %1950 = vmatpush1.msra.mxu0 %v1744
    %1951 = vmatprep.subr.mxu0 %v1748
    %1952 = vmatpush1.msra.mxu0 %v1747
    %1953 = vmatprep.subr.mxu0 %v1751
    %1954 = vmatpush1.msra.mxu0 %v1750
    %1955 = vmatprep.subr.mxu0 %v1754
    %1956 = vmatpush1.msra.mxu0 %v1753
    %1957 = vmatprep.mubr.f32.mxu0 %v1842
    %1958 = vmatmul.mubr.f32.gmra.mrb[0].mxu0 %v1839
    %v1959 = vpop.f32.mrb[0].mxu0
    %v1960 = vadd.f32 0.0, %v1959
    %v1961 = vpop.f32.mrb[0].mxu0
    %v1962 = vadd.f32 0.0, %v1961
    %1963 = vmatprep.mubr.f32.mxu0 %v1852
    %1964 = vmatmul.mubr.f32.gmra.mrb[0].mxu0 %v1850
    %v1965 = vpop.f32.mrb[0].mxu0
    %v1966 = vadd.f32 0.0, %v1965
    %v1967 = vpop.f32.mrb[0].mxu0
    %v1968 = vadd.f32 0.0, %v1967
    %1969 = vmatprep.mubr.f32.mxu0 %v1860
    %1970 = vmatmul.mubr.f32.gmra.mrb[0].mxu0 %v1858
    %v1971 = vpop.f32.mrb[0].mxu0
    %v1972 = vadd.f32 0.0, %v1971
    %v1973 = vpop.f32.mrb[0].mxu0
    %v1974 = vadd.f32 0.0, %v1973
    %1975 = vmatprep.mubr.f32.mxu0 %v1868
    %1976 = vmatmul.mubr.f32.gmra.mrb[0].mxu0 %v1866
    %v1977 = vpop.f32.mrb[0].mxu0
    %v1978 = vadd.f32 0.0, %v1977
    %v1979 = vpop.f32.mrb[0].mxu0
    %v1980 = vadd.f32 0.0, %v1979
    %1981 = vdwg.mxu0
    %1982 = vmatprep.subr.mxu0 %v1757
    %1983 = vmatpush1.msra.mxu0 %v1756
    %1984 = vmatprep.subr.mxu0 %v1760
    %1985 = vmatpush1.msra.mxu0 %v1759
    %1986 = vmatprep.subr.mxu0 %v1763
    %1987 = vmatpush1.msra.mxu0 %v1762
    %1988 = vmatprep.subr.mxu0 %v1766
    %1989 = vmatpush1.msra.mxu0 %v1765
    %1990 = vmatprep.subr.mxu0 %v1769
    %1991 = vmatpush1.msra.mxu0 %v1768
    %1992 = vmatprep.subr.mxu0 %v1772
    %1993 = vmatpush1.msra.mxu0 %v1771
    %1994 = vmatprep.subr.mxu0 %v1775
    %1995 = vmatpush1.msra.mxu0 %v1774
    %1996 = vmatprep.subr.mxu0 %v1778
    %1997 = vmatpush1.msra.mxu0 %v1777
    %1998 = vmatprep.subr.mxu0 %v1781
    %1999 = vmatpush1.msra.mxu0 %v1780
    %2000 = vmatprep.subr.mxu0 %v1784
    %2001 = vmatpush1.msra.mxu0 %v1783
    %2002 = vmatprep.subr.mxu0 %v1787
    %2003 = vmatpush1.msra.mxu0 %v1786
    %2004 = vmatprep.subr.mxu0 %v1790
    %2005 = vmatpush1.msra.mxu0 %v1789
    %2006 = vmatprep.subr.mxu0 %v1793
    %2007 = vmatpush1.msra.mxu0 %v1792
    %2008 = vmatprep.subr.mxu0 %v1796
    %2009 = vmatpush1.msra.mxu0 %v1795
    %2010 = vmatprep.subr.mxu0 %v1799
    %2011 = vmatpush1.msra.mxu0 %v1798
    %2012 = vmatprep.subr.mxu0 %v1802
    %2013 = vmatpush1.msra.mxu0 %v1801
    %2014 = vmatprep.subr.mxu0 %v1805
    %2015 = vmatpush1.msra.mxu0 %v1804
    %2016 = vmatprep.subr.mxu0 %v1808
    %2017 = vmatpush1.msra.mxu0 %v1807
    %2018 = vmatprep.subr.mxu0 %v1811
    %2019 = vmatpush1.msra.mxu0 %v1810
    %2020 = vmatprep.subr.mxu0 %v1814
    %2021 = vmatpush1.msra.mxu0 %v1813
    %2022 = vmatprep.subr.mxu0 %v1817
    %2023 = vmatpush1.msra.mxu0 %v1816
    %2024 = vmatprep.subr.mxu0 %v1820
    %2025 = vmatpush1.msra.mxu0 %v1819
    %2026 = vmatprep.subr.mxu0 %v1823
    %2027 = vmatpush1.msra.mxu0 %v1822
    %2028 = vmatprep.subr.mxu0 %v1826
    %2029 = vmatpush1.msra.mxu0 %v1825
    %2030 = vmatprep.subr.mxu0 0.0
    %2031 = vmatpush1.msra.mxu0 0.0
    %2032 = vmatprep.subr.mxu0 0.0
    %2033 = vmatpush1.msra.mxu0 0.0
    %2034 = vmatprep.subr.mxu0 0.0
    %2035 = vmatpush1.msra.mxu0 0.0
    %2036 = vmatprep.subr.mxu0 0.0
    %2037 = vmatpush1.msra.mxu0 0.0
    %2038 = vmatprep.subr.mxu0 0.0
    %2039 = vmatpush1.msra.mxu0 0.0
    %2040 = vmatprep.subr.mxu0 0.0
    %2041 = vmatpush1.msra.mxu0 0.0
    %2042 = vmatprep.subr.mxu0 0.0
    %2043 = vmatpush1.msra.mxu0 0.0
    %2044 = vmatprep.subr.mxu0 0.0
    %2045 = vmatpush1.msra.mxu0 0.0
    %2046 = vmatprep.mubr.f32.mxu0 %v1885
    %2047 = vmatmul.mubr.f32.gmra.mrb[0].mxu0 %v1845
    %v2048 = vpop.f32.mrb[0].mxu0
    %v2049 = vadd.f32 %v1960, %v2048
    %v2050 = vpop.f32.mrb[0].mxu0
    %v2051 = vadd.f32 %v1962, %v2050
    %2052 = vmatprep.mubr.f32.mxu0 %v1887
    %2053 = vmatmul.mubr.f32.gmra.mrb[0].mxu0 %v1854
    %v2054 = vpop.f32.mrb[0].mxu0
    %v2055 = vadd.f32 %v1966, %v2054
    %v2056 = vpop.f32.mrb[0].mxu0
    %v2057 = vadd.f32 %v1968, %v2056
    %2058 = vmatprep.mubr.f32.mxu0 %v1889
    %2059 = vmatmul.mubr.f32.gmra.mrb[0].mxu0 %v1862
    %v2060 = vpop.f32.mrb[0].mxu0
    %v2061 = vadd.f32 %v1972, %v2060
    %v2062 = vpop.f32.mrb[0].mxu0
    %v2063 = vadd.f32 %v1974, %v2062
    %2064 = vmatprep.mubr.f32.mxu0 %v1891
    %2065 = vmatmul.mubr.f32.gmra.mrb[0].mxu0 %v1870
    %v2066 = vpop.f32.mrb[0].mxu0
    %v2067 = vadd.f32 %v1978, %v2066
    %v2068 = vpop.f32.mrb[0].mxu0
    %v2069 = vadd.f32 %v1980, %v2068
    %2070 = vdwg.mxu0
    %2071 = vmatprep.subr.mxu0 0.0
    %2072 = vmatpush1.msra.mxu0 %v1662
    %2073 = vmatprep.subr.mxu0 0.0
    %2074 = vmatpush1.msra.mxu0 %v1665
    %2075 = vmatprep.subr.mxu0 0.0
    %2076 = vmatpush1.msra.mxu0 %v1668
    %2077 = vmatprep.subr.mxu0 0.0
    %2078 = vmatpush1.msra.mxu0 %v1671
    %2079 = vmatprep.subr.mxu0 0.0
    %2080 = vmatpush1.msra.mxu0 %v1674
    %2081 = vmatprep.subr.mxu0 0.0
    %2082 = vmatpush1.msra.mxu0 %v1677
    %2083 = vmatprep.subr.mxu0 0.0
    %2084 = vmatpush1.msra.mxu0 %v1680
    %2085 = vmatprep.subr.mxu0 0.0
    %2086 = vmatpush1.msra.mxu0 %v1683
    %2087 = vmatprep.subr.mxu0 0.0
    %2088 = vmatpush1.msra.mxu0 %v1686
    %2089 = vmatprep.subr.mxu0 0.0
    %2090 = vmatpush1.msra.mxu0 %v1689
    %2091 = vmatprep.subr.mxu0 0.0
    %2092 = vmatpush1.msra.mxu0 %v1692
    %2093 = vmatprep.subr.mxu0 0.0
    %2094 = vmatpush1.msra.mxu0 %v1695
    %2095 = vmatprep.subr.mxu0 0.0
    %2096 = vmatpush1.msra.mxu0 %v1698
    %2097 = vmatprep.subr.mxu0 0.0
    %2098 = vmatpush1.msra.mxu0 %v1701
    %2099 = vmatprep.subr.mxu0 0.0
    %2100 = vmatpush1.msra.mxu0 %v1704
    %2101 = vmatprep.subr.mxu0 0.0
    %2102 = vmatpush1.msra.mxu0 %v1707
    %2103 = vmatprep.subr.mxu0 0.0
    %2104 = vmatpush1.msra.mxu0 %v1710
    %2105 = vmatprep.subr.mxu0 0.0
    %2106 = vmatpush1.msra.mxu0 %v1713
    %2107 = vmatprep.subr.mxu0 0.0
    %2108 = vmatpush1.msra.mxu0 %v1716
    %2109 = vmatprep.subr.mxu0 0.0
    %2110 = vmatpush1.msra.mxu0 %v1719
    %2111 = vmatprep.subr.mxu0 0.0
    %2112 = vmatpush1.msra.mxu0 %v1722
    %2113 = vmatprep.subr.mxu0 0.0
    %2114 = vmatpush1.msra.mxu0 %v1725
    %2115 = vmatprep.subr.mxu0 0.0
    %2116 = vmatpush1.msra.mxu0 %v1728
    %2117 = vmatprep.subr.mxu0 0.0
    %2118 = vmatpush1.msra.mxu0 %v1731
    %2119 = vmatprep.subr.mxu0 0.0
    %2120 = vmatpush1.msra.mxu0 %v1734
    %2121 = vmatprep.subr.mxu0 0.0
    %2122 = vmatpush1.msra.mxu0 %v1737
    %2123 = vmatprep.subr.mxu0 0.0
    %2124 = vmatpush1.msra.mxu0 %v1740
    %2125 = vmatprep.subr.mxu0 0.0
    %2126 = vmatpush1.msra.mxu0 %v1743
    %2127 = vmatprep.subr.mxu0 0.0
    %2128 = vmatpush1.msra.mxu0 %v1746
    %2129 = vmatprep.subr.mxu0 0.0
    %2130 = vmatpush1.msra.mxu0 %v1749
    %2131 = vmatprep.subr.mxu0 0.0
    %2132 = vmatpush1.msra.mxu0 %v1752
    %2133 = vmatprep.subr.mxu0 0.0
    %2134 = vmatpush1.msra.mxu0 %v1755
    %2135 = vmatprep.mubr.f32.mxu0 %v1842
    %2136 = vmatmul.mubr.f32.gmra.mrb[0].mxu0 %v1839
    %v2137 = vpop.f32.mrb[0].mxu0
    %v2138 = vadd.f32 0.0, %v2137
    %v2139 = vpop.f32.mrb[0].mxu0
    %2140 = vmatprep.mubr.f32.mxu0 %v1852
    %2141 = vmatmul.mubr.f32.gmra.mrb[0].mxu0 %v1850
    %v2142 = vpop.f32.mrb[0].mxu0
    %v2143 = vadd.f32 0.0, %v2142
    %v2144 = vpop.f32.mrb[0].mxu0
    %2145 = vmatprep.mubr.f32.mxu0 %v1860
    %2146 = vmatmul.mubr.f32.gmra.mrb[0].mxu0 %v1858
    %v2147 = vpop.f32.mrb[0].mxu0
    %v2148 = vadd.f32 0.0, %v2147
    %v2149 = vpop.f32.mrb[0].mxu0
    %2150 = vmatprep.mubr.f32.mxu0 %v1868
    %2151 = vmatmul.mubr.f32.gmra.mrb[0].mxu0 %v1866
    %v2152 = vpop.f32.mrb[0].mxu0
    %v2153 = vadd.f32 0.0, %v2152
    %v2154 = vpop.f32.mrb[0].mxu0
    %2155 = vdwg.mxu0
    %2156 = vmatprep.subr.mxu0 0.0
    %2157 = vmatpush1.msra.mxu0 %v1758
    %2158 = vmatprep.subr.mxu0 0.0
    %2159 = vmatpush1.msra.mxu0 %v1761
    %2160 = vmatprep.subr.mxu0 0.0
    %2161 = vmatpush1.msra.mxu0 %v1764
    %2162 = vmatprep.subr.mxu0 0.0
    %2163 = vmatpush1.msra.mxu0 %v1767
    %2164 = vmatprep.subr.mxu0 0.0
    %2165 = vmatpush1.msra.mxu0 %v1770
    %2166 = vmatprep.subr.mxu0 0.0
    %2167 = vmatpush1.msra.mxu0 %v1773
    %2168 = vmatprep.subr.mxu0 0.0
    %2169 = vmatpush1.msra.mxu0 %v1776
    %2170 = vmatprep.subr.mxu0 0.0
    %2171 = vmatpush1.msra.mxu0 %v1779
    %2172 = vmatprep.subr.mxu0 0.0
    %2173 = vmatpush1.msra.mxu0 %v1782
    %2174 = vmatprep.subr.mxu0 0.0
    %2175 = vmatpush1.msra.mxu0 %v1785
    %2176 = vmatprep.subr.mxu0 0.0
    %2177 = vmatpush1.msra.mxu0 %v1788
    %2178 = vmatprep.subr.mxu0 0.0
    %2179 = vmatpush1.msra.mxu0 %v1791
    %2180 = vmatprep.subr.mxu0 0.0
    %2181 = vmatpush1.msra.mxu0 %v1794
    %2182 = vmatprep.subr.mxu0 0.0
    %2183 = vmatpush1.msra.mxu0 %v1797
    %2184 = vmatprep.subr.mxu0 0.0
    %2185 = vmatpush1.msra.mxu0 %v1800
    %2186 = vmatprep.subr.mxu0 0.0
    %2187 = vmatpush1.msra.mxu0 %v1803
    %2188 = vmatprep.subr.mxu0 0.0
    %2189 = vmatpush1.msra.mxu0 %v1806
    %2190 = vmatprep.subr.mxu0 0.0
    %2191 = vmatpush1.msra.mxu0 %v1809
    %2192 = vmatprep.subr.mxu0 0.0
    %2193 = vmatpush1.msra.mxu0 %v1812
    %2194 = vmatprep.subr.mxu0 0.0
    %2195 = vmatpush1.msra.mxu0 %v1815
    %2196 = vmatprep.subr.mxu0 0.0
    %2197 = vmatpush1.msra.mxu0 %v1818
    %2198 = vmatprep.subr.mxu0 0.0
    %2199 = vmatpush1.msra.mxu0 %v1821
    %2200 = vmatprep.subr.mxu0 0.0
    %2201 = vmatpush1.msra.mxu0 %v1824
    %2202 = vmatprep.subr.mxu0 0.0
    %2203 = vmatpush1.msra.mxu0 %v1827
    %2204 = vmatprep.subr.mxu0 0.0
    %2205 = vmatpush1.msra.mxu0 0.0
    %2206 = vmatprep.subr.mxu0 0.0
    %2207 = vmatpush1.msra.mxu0 0.0
    %2208 = vmatprep.subr.mxu0 0.0
    %2209 = vmatpush1.msra.mxu0 0.0
    %2210 = vmatprep.subr.mxu0 0.0
    %2211 = vmatpush1.msra.mxu0 0.0
    %2212 = vmatprep.subr.mxu0 0.0
    %2213 = vmatpush1.msra.mxu0 0.0
    %2214 = vmatprep.subr.mxu0 0.0
    %2215 = vmatpush1.msra.mxu0 0.0
    %2216 = vmatprep.subr.mxu0 0.0
    %2217 = vmatpush1.msra.mxu0 0.0
    %2218 = vmatprep.subr.mxu0 0.0
    %2219 = vmatpush1.msra.mxu0 0.0
    %2220 = vmatprep.mubr.f32.mxu0 %v1885
    %2221 = vmatmul.mubr.f32.gmra.mrb[0].mxu0 %v1845
    %v2222 = vpop.f32.mrb[0].mxu0
    %v2223 = vadd.f32 %v2138, %v2222
    %v2224 = vpop.f32.mrb[0].mxu0
    %2225 = vmatprep.mubr.f32.mxu0 %v1887
    %2226 = vmatmul.mubr.f32.gmra.mrb[0].mxu0 %v1854
    %v2227 = vpop.f32.mrb[0].mxu0
    %v2228 = vadd.f32 %v2143, %v2227
    %v2229 = vpop.f32.mrb[0].mxu0
    %2230 = vmatprep.mubr.f32.mxu0 %v1889
    %2231 = vmatmul.mubr.f32.gmra.mrb[0].mxu0 %v1862
    %v2232 = vpop.f32.mrb[0].mxu0
    %v2233 = vadd.f32 %v2148, %v2232
    %v2234 = vpop.f32.mrb[0].mxu0
    %2235 = vmatprep.mubr.f32.mxu0 %v1891
    %2236 = vmatmul.mubr.f32.gmra.mrb[0].mxu0 %v1870
    %v2237 = vpop.f32.mrb[0].mxu0
    %v2238 = vadd.f32 %v2153, %v2237
    %v2239 = vpop.f32.mrb[0].mxu0
    %2240 = vdwg.mxu0
    %v2241 = vadd.f32 %v1459, %v2049
    %v2242 = vadd.f32 %v1461, %v2051
    %v2243 = vadd.f32 %v1633, %v2223
    %v2244 = vadd.f32 %v1465, %v2055
    %v2245 = vadd.f32 %v1467, %v2057
    %v2246 = vadd.f32 %v1638, %v2228
    %v2247 = vadd.f32 %v1471, %v2061
    %v2248 = vadd.f32 %v1473, %v2063
    %v2249 = vadd.f32 %v1643, %v2233
    %v2250 = vadd.f32 %v1477, %v2067
    %v2251 = vadd.f32 %v1479, %v2069
    %v2252 = vadd.f32 %v1648, %v2238
    %v2253 = vld [vmem:[#allocation16] sm:$0x7]
    %v2255 = vlaneseq
    %v2256 = vshrl.u32 %v2255, 7
    %v2257 = vsub.s32 0, %v2256
    %v2258 = vrot.slane %v2253, %v2257
    %v2259 = vlaneseq
    %v2260 = vshrl.u32 %v2259, 7
    %v2261 = vsub.s32 1, %v2260
    %v2262 = vrot.slane %v2253, %v2261
    %v2263 = vlaneseq
    %v2264 = vshrl.u32 %v2263, 7
    %v2265 = vsub.s32 2, %v2264
    %v2266 = vrot.slane %v2253, %v2265
    %v2270 = vadd.f32 %v2241, %v2258
    %v2271 = vadd.f32 %v2242, %v2262
    %v2272 = vadd.f32 %v2243, %v2266
    %v2273 = vadd.f32 %v2244, %v2258
    %v2274 = vadd.f32 %v2245, %v2262
    %v2275 = vadd.f32 %v2246, %v2266
    %v2276 = vadd.f32 %v2247, %v2258
    %v2277 = vadd.f32 %v2248, %v2262
    %v2278 = vadd.f32 %v2249, %v2266
    %v2279 = vadd.f32 %v2250, %v2258
    %v2280 = vadd.f32 %v2251, %v2262
    %v2281 = vadd.f32 %v2252, %v2266
    %v2282 = vmax.f32 %v2270, 0.0
    %v2283 = vmax.f32 %v2271, 0.0
    %v2284 = vmax.f32 %v2272, 0.0
    %v2285 = vmax.f32 %v2273, 0.0
    %v2286 = vmax.f32 %v2274, 0.0
    %v2287 = vmax.f32 %v2275, 0.0
    %v2288 = vmax.f32 %v2276, 0.0
    %v2289 = vmax.f32 %v2277, 0.0
    %v2290 = vmax.f32 %v2278, 0.0
    %v2291 = vmax.f32 %v2279, 0.0
    %v2292 = vmax.f32 %v2280, 0.0
    %v2293 = vmax.f32 %v2281, 0.0
    %2298 = vrot.lane.b32.xlu0 %v2282, 96
    %v2299 = vpop.permute.xlu0 %2298
    %2300 = vrot.lane.b32.xlu0 %v2285, 96
    %v2301 = vpop.permute.xlu0 %2300
    %2302 = vrot.lane.b32.xlu0 %v2288, 96
    %v2303 = vpop.permute.xlu0 %2302
    %2304 = vrot.lane.b32.xlu0 %v2291, 96
    %v2305 = vpop.permute.xlu0 %2304
    %v2310 = vmax.f32 %v2282, %v2299
    %v2311 = vmax.f32 %v2285, %v2301
    %v2312 = vmax.f32 %v2288, %v2303
    %v2313 = vmax.f32 %v2291, %v2305
    %2314 = vrot.lane.b32.xlu0 %v2282, 64
    %v2315 = vpop.permute.xlu0 %2314
    %2316 = vrot.lane.b32.xlu0 %v2285, 64
    %v2317 = vpop.permute.xlu0 %2316
    %2318 = vrot.lane.b32.xlu0 %v2288, 64
    %v2319 = vpop.permute.xlu0 %2318
    %2320 = vrot.lane.b32.xlu0 %v2291, 64
    %v2321 = vpop.permute.xlu0 %2320
    %v2326 = vmax.f32 %v2310, %v2315
    %v2327 = vmax.f32 %v2311, %v2317
    %v2328 = vmax.f32 %v2312, %v2319
    %v2329 = vmax.f32 %v2313, %v2321
    %vm2330 = vcmask 261120
    %2331 = vst.msk [vmem:[#allocation4] sm:$0xff] %vm2330, %v2326
    %2332 = vst.msk [vmem:[#allocation4 + $0x8] sm:$0xff] %vm2330, %v2327
    %2333 = vst.msk [vmem:[#allocation4 + $0x10] sm:$0xff] %vm2330, %v2328
    %2334 = vst.msk [vmem:[#allocation4 + $0x18] sm:$0xff] %vm2330, %v2329
    %2339 = vrot.lane.b32.xlu0 %v2283, 96
    %v2340 = vpop.permute.xlu0 %2339
    %2341 = vrot.lane.b32.xlu0 %v2286, 96
    %v2342 = vpop.permute.xlu0 %2341
    %2343 = vrot.lane.b32.xlu0 %v2289, 96
    %v2344 = vpop.permute.xlu0 %2343
    %2345 = vrot.lane.b32.xlu0 %v2292, 96
    %v2346 = vpop.permute.xlu0 %2345
    %v2351 = vmax.f32 %v2282, %v2340
    %v2352 = vmax.f32 %v2285, %v2342
    %v2353 = vmax.f32 %v2288, %v2344
    %v2354 = vmax.f32 %v2291, %v2346
    %2355 = vrot.lane.b32.xlu0 %v2283, 64
    %v2356 = vpop.permute.xlu0 %2355
    %2357 = vrot.lane.b32.xlu0 %v2286, 64
    %v2358 = vpop.permute.xlu0 %2357
    %2359 = vrot.lane.b32.xlu0 %v2289, 64
    %v2360 = vpop.permute.xlu0 %2359
    %2361 = vrot.lane.b32.xlu0 %v2292, 64
    %v2362 = vpop.permute.xlu0 %2361
    %v2367 = vmax.f32 %v2351, %v2356
    %v2368 = vmax.f32 %v2352, %v2358
    %v2369 = vmax.f32 %v2353, %v2360
    %v2370 = vmax.f32 %v2354, %v2362
    %2375 = vrot.lane.b32.xlu0 %v2367, 64
    %v2376 = vpop.permute.xlu0 %2375
    %2377 = vrot.lane.b32.xlu0 %v2368, 64
    %v2378 = vpop.permute.xlu0 %2377
    %2379 = vrot.lane.b32.xlu0 %v2369, 64
    %v2380 = vpop.permute.xlu0 %2379
    %2381 = vrot.lane.b32.xlu0 %v2370, 64
    %v2382 = vpop.permute.xlu0 %2381
    %vm2387 = vcmask 523520
    %2388 = vst.msk [vmem:[#allocation4] sm:$0xff] %vm2387, %v2376
    %2389 = vst.msk [vmem:[#allocation4 + $0x8] sm:$0xff] %vm2387, %v2378
    %2390 = vst.msk [vmem:[#allocation4 + $0x10] sm:$0xff] %vm2387, %v2380
    %2391 = vst.msk [vmem:[#allocation4 + $0x18] sm:$0xff] %vm2387, %v2382
    %v2392 = vmax.f32 %v2283, %v2340
    %v2393 = vmax.f32 %v2286, %v2342
    %v2394 = vmax.f32 %v2289, %v2344
    %v2395 = vmax.f32 %v2292, %v2346
    %2400 = vrot.lane.b32.xlu0 %v2284, 64
    %v2401 = vpop.permute.xlu0 %2400
    %2402 = vrot.lane.b32.xlu0 %v2287, 64
    %v2403 = vpop.permute.xlu0 %2402
    %2404 = vrot.lane.b32.xlu0 %v2290, 64
    %v2405 = vpop.permute.xlu0 %2404
    %2406 = vrot.lane.b32.xlu0 %v2293, 64
    %v2407 = vpop.permute.xlu0 %2406
    %v2412 = vmax.f32 %v2392, %v2401
    %v2413 = vmax.f32 %v2393, %v2403
    %v2414 = vmax.f32 %v2394, %v2405
    %v2415 = vmax.f32 %v2395, %v2407
    %vm2416 = vcmask 785920
    %2417 = vst.msk [vmem:[#allocation4] sm:$0xff] %vm2416, %v2412
    %2418 = vst.msk [vmem:[#allocation4 + $0x8] sm:$0xff] %vm2416, %v2413
    %2419 = vst.msk [vmem:[#allocation4 + $0x10] sm:$0xff] %vm2416, %v2414
    %2420 = vst.msk [vmem:[#allocation4 + $0x18] sm:$0xff] %vm2416, %v2415
    %2421 = vrot.lane.b32.xlu0 %v2284, 96
    %v2422 = vpop.permute.xlu0 %2421
    %2423 = vrot.lane.b32.xlu0 %v2287, 96
    %v2424 = vpop.permute.xlu0 %2423
    %2425 = vrot.lane.b32.xlu0 %v2290, 96
    %v2426 = vpop.permute.xlu0 %2425
    %2427 = vrot.lane.b32.xlu0 %v2293, 96
    %v2428 = vpop.permute.xlu0 %2427
    %v2433 = vmax.f32 %v2284, %v2422
    %v2434 = vmax.f32 %v2287, %v2424
    %v2435 = vmax.f32 %v2290, %v2426
    %v2436 = vmax.f32 %v2293, %v2428
    %v2437 = vmax.f32 %v2433, %v2401
    %v2438 = vmax.f32 %v2434, %v2403
    %v2439 = vmax.f32 %v2435, %v2405
    %v2440 = vmax.f32 %v2436, %v2407
    %2445 = vrot.lane.b32.xlu0 %v2437, 64
    %v2446 = vpop.permute.xlu0 %2445
    %2447 = vrot.lane.b32.xlu0 %v2438, 64
    %v2448 = vpop.permute.xlu0 %2447
    %2449 = vrot.lane.b32.xlu0 %v2439, 64
    %v2450 = vpop.permute.xlu0 %2449
    %2451 = vrot.lane.b32.xlu0 %v2440, 64
    %v2452 = vpop.permute.xlu0 %2451
    %vm2457 = vcmask 1048320
    %2458 = vst.msk [vmem:[#allocation4] sm:$0xff] %vm2457, %v2446
    %2459 = vst.msk [vmem:[#allocation4 + $0x8] sm:$0xff] %vm2457, %v2448
    %2460 = vst.msk [vmem:[#allocation4 + $0x10] sm:$0xff] %vm2457, %v2450
    %2461 = vst.msk [vmem:[#allocation4 + $0x18] sm:$0xff] %vm2457, %v2452
    %v2462 = vld [vmem:[#allocation4] sm:$0x1]
    %v2463 = vld [vmem:[#allocation4 + $0x1] sm:$0x1]
    %v2464 = vmax.f32 %v2462, %v2463
    %v2465 = vld [vmem:[#allocation4 + $0x2] sm:$0x1]
    %v2466 = vmax.f32 %v2464, %v2465
    %2467 = vst [vmem:[#allocation5] sm:$0x1] %v2466
    %v2468 = vld [vmem:[#allocation4 + $0x3] sm:$0x1]
    %v2469 = vld [vmem:[#allocation4 + $0x4] sm:$0x1]
    %v2470 = vmax.f32 %v2468, %v2469
    %v2471 = vld [vmem:[#allocation4 + $0x5] sm:$0x1]
    %v2472 = vmax.f32 %v2470, %v2471
    %2473 = vst [vmem:[#allocation5 + $0x2] sm:$0x1] %v2472
    %v2474 = vld [vmem:[#allocation4 + $0x6] sm:$0x1]
    %v2475 = vld [vmem:[#allocation4 + $0x7] sm:$0x1]
    %v2476 = vmax.f32 %v2474, %v2475
    %v2477 = vld [vmem:[#allocation4 + $0x8] sm:$0x1]
    %v2478 = vmax.f32 %v2476, %v2477
    %2479 = vst [vmem:[#allocation5 + $0x4] sm:$0x1] %v2478
    %v2480 = vld [vmem:[#allocation4 + $0x9] sm:$0x1]
    %v2481 = vld [vmem:[#allocation4 + $0xa] sm:$0x1]
    %v2482 = vmax.f32 %v2480, %v2481
    %v2483 = vld [vmem:[#allocation4 + $0xb] sm:$0x1]
    %v2484 = vmax.f32 %v2482, %v2483
    %2485 = vst [vmem:[#allocation5 + $0x6] sm:$0x1] %v2484
    %v2486 = vld [vmem:[#allocation4 + $0x10] sm:$0x1]
    %v2487 = vld [vmem:[#allocation4 + $0x11] sm:$0x1]
    %v2488 = vmax.f32 %v2486, %v2487
    %v2489 = vld [vmem:[#allocation4 + $0x12] sm:$0x1]
    %v2490 = vmax.f32 %v2488, %v2489
    %2491 = vst [vmem:[#allocation5 + $0x1] sm:$0x1] %v2490
    %v2492 = vld [vmem:[#allocation4 + $0x13] sm:$0x1]
    %v2493 = vld [vmem:[#allocation4 + $0x14] sm:$0x1]
    %v2494 = vmax.f32 %v2492, %v2493
    %v2495 = vld [vmem:[#allocation4 + $0x15] sm:$0x1]
    %v2496 = vmax.f32 %v2494, %v2495
    %2497 = vst [vmem:[#allocation5 + $0x3] sm:$0x1] %v2496
    %v2498 = vld [vmem:[#allocation4 + $0x16] sm:$0x1]
    %v2499 = vld [vmem:[#allocation4 + $0x17] sm:$0x1]
    %v2500 = vmax.f32 %v2498, %v2499
    %v2501 = vld [vmem:[#allocation4 + $0x18] sm:$0x1]
    %v2502 = vmax.f32 %v2500, %v2501
    %2503 = vst [vmem:[#allocation5 + $0x5] sm:$0x1] %v2502
    %v2504 = vld [vmem:[#allocation4 + $0x19] sm:$0x1]
    %v2505 = vld [vmem:[#allocation4 + $0x1a] sm:$0x1]
    %v2506 = vmax.f32 %v2504, %v2505
    %v2507 = vld [vmem:[#allocation4 + $0x1b] sm:$0x1]
    %v2508 = vmax.f32 %v2506, %v2507
    %2509 = vst [vmem:[#allocation5 + $0x7] sm:$0x1] %v2508
    %s2510 = sld [smem:[#allocation7]]
    %s2511 = sld [smem:[#allocation7 + $0x1]]
    %v2512 = vld [vmem:[#allocation5] sm:$0xff]
    %v2513 = vmax.f32 %v2512, 0.0
    %v2514 = vld [vmem:[#allocation17] sm:$0xff]
    %v2515 = vld [vmem:[#allocation17 + $0x8] sm:$0xff]
    %v2516 = vld [vmem:[#allocation17 + $0x10] sm:$0xff]
    %v2517 = vld [vmem:[#allocation17 + $0x18] sm:$0xff]
    %v2518 = vld [vmem:[#allocation17 + $0x20] sm:$0xff]
    %v2519 = vld [vmem:[#allocation17 + $0x28] sm:$0xff]
    %v2520 = vld [vmem:[#allocation17 + $0x30] sm:$0xff]
    %v2521 = vld [vmem:[#allocation17 + $0x38] sm:$0xff]
    %v2522 = vld [vmem:[#allocation17 + $0x40] sm:$0xff]
    %v2523 = vld [vmem:[#allocation17 + $0x48] sm:$0xff]
    %v2524 = vld [vmem:[#allocation17 + $0x50] sm:$0xff]
    %v2525 = vld [vmem:[#allocation17 + $0x58] sm:$0xff]
    %v2526 = vld [vmem:[#allocation17 + $0x60] sm:$0xff]
    %v2527 = vld [vmem:[#allocation17 + $0x68] sm:$0xff]
    %v2528 = vld [vmem:[#allocation17 + $0x70] sm:$0xff]
    %v2529 = vld [vmem:[#allocation17 + $0x78] sm:$0xff]
    %v2530 = vld [vmem:[#allocation17 + $0x80] sm:$0xff]
    %v2531 = vld [vmem:[#allocation17 + $0x88] sm:$0xff]
    %v2532 = vld [vmem:[#allocation17 + $0x90] sm:$0xff]
    %v2533 = vld [vmem:[#allocation17 + $0x98] sm:$0xff]
    %v2534 = vld [vmem:[#allocation17 + $0xa0] sm:$0xff]
    %v2535 = vld [vmem:[#allocation17 + $0xa8] sm:$0xff]
    %v2536 = vld [vmem:[#allocation17 + $0xb0] sm:$0xff]
    %v2537 = vld [vmem:[#allocation17 + $0xb8] sm:$0xff]
    %v2538 = vld [vmem:[#allocation17 + $0xc0] sm:$0xff]
    %v2539 = vld [vmem:[#allocation17 + $0xc8] sm:$0xff]
    %v2540 = vld [vmem:[#allocation17 + $0xd0] sm:$0xff]
    %v2541 = vld [vmem:[#allocation17 + $0xd8] sm:$0xff]
    %v2542 = vld [vmem:[#allocation17 + $0xe0] sm:$0xff]
    %v2543 = vld [vmem:[#allocation17 + $0xe8] sm:$0xff]
    %v2544 = vld [vmem:[#allocation17 + $0xf0] sm:$0xff]
    %v2545 = vld [vmem:[#allocation17 + $0xf8] sm:$0xff]
    %v2546 = vld [vmem:[#allocation17 + $0x100] sm:$0xff]
    %v2547 = vld [vmem:[#allocation17 + $0x108] sm:$0xff]
    %v2548 = vld [vmem:[#allocation17 + $0x110] sm:$0xff]
    %v2549 = vld [vmem:[#allocation17 + $0x118] sm:$0xff]
    %v2550 = vld [vmem:[#allocation17 + $0x120] sm:$0xff]
    %v2551 = vld [vmem:[#allocation17 + $0x128] sm:$0xff]
    %v2552 = vld [vmem:[#allocation17 + $0x130] sm:$0xff]
    %v2553 = vld [vmem:[#allocation17 + $0x138] sm:$0xff]
    %v2554 = vld [vmem:[#allocation17 + $0x140] sm:$0xff]
    %v2555 = vld [vmem:[#allocation17 + $0x148] sm:$0xff]
    %v2556 = vld [vmem:[#allocation17 + $0x150] sm:$0xff]
    %v2557 = vld [vmem:[#allocation17 + $0x158] sm:$0xff]
    %v2558 = vld [vmem:[#allocation17 + $0x160] sm:$0xff]
    %v2559 = vld [vmem:[#allocation17 + $0x168] sm:$0xff]
    %v2560 = vld [vmem:[#allocation17 + $0x170] sm:$0xff]
    %v2561 = vld [vmem:[#allocation17 + $0x178] sm:$0xff]
    %v2562 = vld [vmem:[#allocation17 + $0x180] sm:$0xff]
    %v2563 = vld [vmem:[#allocation17 + $0x188] sm:$0xff]
    %v2564 = vld [vmem:[#allocation17 + $0x190] sm:$0xff]
    %v2565 = vld [vmem:[#allocation17 + $0x198] sm:$0xff]
    %v2566 = vld [vmem:[#allocation17 + $0x1a0] sm:$0xff]
    %v2567 = vld [vmem:[#allocation17 + $0x1a8] sm:$0xff]
    %v2568 = vld [vmem:[#allocation17 + $0x1b0] sm:$0xff]
    %v2569 = vld [vmem:[#allocation17 + $0x1b8] sm:$0xff]
    %v2570 = vld [vmem:[#allocation17 + $0x1c0] sm:$0xff]
    %v2571 = vld [vmem:[#allocation17 + $0x1c8] sm:$0xff]
    %v2572 = vld [vmem:[#allocation17 + $0x1d0] sm:$0xff]
    %v2573 = vld [vmem:[#allocation17 + $0x1d8] sm:$0xff]
    %v2574 = vld [vmem:[#allocation17 + $0x1e0] sm:$0xff]
    %v2575 = vld [vmem:[#allocation17 + $0x1e8] sm:$0xff]
    %v2576 = vld [vmem:[#allocation17 + $0x1f0] sm:$0xff]
    %v2577 = vld [vmem:[#allocation17 + $0x1f8] sm:$0xff]
    %v2578 = vld [vmem:[#allocation19] sm:$0x1]
    %v2579 = vstv %s2510
    %v2580 = vmul.f32 %v2579, %v2578
    %v2581 = vld [vmem:[#allocation19 + $0x1] sm:$0x1]
    %v2582 = vstv %s2511
    %v2583 = vmul.f32 %v2582, %v2581
    %v2584 = vadd.f32 %v2580, %v2583
    %v2585 = vld [vmem:[#allocation20] sm:$0x1]
    %v2587 = vlaneseq
    %v2588 = vshrl.u32 %v2587, 7
    %v2589 = vsub.s32 0, %v2588
    %v2590 = vrot.slane %v2585, %v2589
    %v2593 = vcombine.high %v2513, %v2513
    %v2595 = vunpack.c.l.s4 1983009808
    %v2596 = vunpack.c.0.s8 %v2595
    %v2597 = vlaneseq
    %v2598 = vshrl.u32 %v2597, 7
    %v2599 = vsub.s32 %v2596, %v2598
    %v2600 = vrot.slane %v2513, %v2599
    %v2602 = vunpack.c.l.s4 1983009808
    %v2603 = vunpack.c.0.s8 %v2602
    %v2604 = vlaneseq
    %v2605 = vshrl.u32 %v2604, 7
    %v2606 = vsub.s32 %v2603, %v2605
    %v2607 = vrot.slane %v2593, %v2606
    %v2608 = vcombine.high %v2600, %v2600
    %v2609 = vcombine.high %v2607, %v2607
    %2614 = vmatprep.subr.mxu0 0.0
    %2615 = vmatpush1.msra.mxu0 %v2514
    %2616 = vmatprep.subr.mxu0 0.0
    %2617 = vmatpush1.msra.mxu0 %v2515
    %2618 = vmatprep.subr.mxu0 0.0
    %2619 = vmatpush1.msra.mxu0 %v2516
    %2620 = vmatprep.subr.mxu0 0.0
    %2621 = vmatpush1.msra.mxu0 %v2517
    %2622 = vmatprep.subr.mxu0 0.0
    %2623 = vmatpush1.msra.mxu0 %v2518
    %2624 = vmatprep.subr.mxu0 0.0
    %2625 = vmatpush1.msra.mxu0 %v2519
    %2626 = vmatprep.subr.mxu0 0.0
    %2627 = vmatpush1.msra.mxu0 %v2520
    %2628 = vmatprep.subr.mxu0 0.0
    %2629 = vmatpush1.msra.mxu0 %v2521
    %2630 = vmatprep.subr.mxu0 0.0
    %2631 = vmatpush1.msra.mxu0 %v2522
    %2632 = vmatprep.subr.mxu0 0.0
    %2633 = vmatpush1.msra.mxu0 %v2523
    %2634 = vmatprep.subr.mxu0 0.0
    %2635 = vmatpush1.msra.mxu0 %v2524
    %2636 = vmatprep.subr.mxu0 0.0
    %2637 = vmatpush1.msra.mxu0 %v2525
    %2638 = vmatprep.subr.mxu0 0.0
    %2639 = vmatpush1.msra.mxu0 %v2526
    %2640 = vmatprep.subr.mxu0 0.0
    %2641 = vmatpush1.msra.mxu0 %v2527
    %2642 = vmatprep.subr.mxu0 0.0
    %2643 = vmatpush1.msra.mxu0 %v2528
    %2644 = vmatprep.subr.mxu0 0.0
    %2645 = vmatpush1.msra.mxu0 %v2529
    %2646 = vmatprep.subr.mxu0 0.0
    %2647 = vmatpush1.msra.mxu0 %v2530
    %2648 = vmatprep.subr.mxu0 0.0
    %2649 = vmatpush1.msra.mxu0 %v2531
    %2650 = vmatprep.subr.mxu0 0.0
    %2651 = vmatpush1.msra.mxu0 %v2532
    %2652 = vmatprep.subr.mxu0 0.0
    %2653 = vmatpush1.msra.mxu0 %v2533
    %2654 = vmatprep.subr.mxu0 0.0
    %2655 = vmatpush1.msra.mxu0 %v2534
    %2656 = vmatprep.subr.mxu0 0.0
    %2657 = vmatpush1.msra.mxu0 %v2535
    %2658 = vmatprep.subr.mxu0 0.0
    %2659 = vmatpush1.msra.mxu0 %v2536
    %2660 = vmatprep.subr.mxu0 0.0
    %2661 = vmatpush1.msra.mxu0 %v2537
    %2662 = vmatprep.subr.mxu0 0.0
    %2663 = vmatpush1.msra.mxu0 %v2538
    %2664 = vmatprep.subr.mxu0 0.0
    %2665 = vmatpush1.msra.mxu0 %v2539
    %2666 = vmatprep.subr.mxu0 0.0
    %2667 = vmatpush1.msra.mxu0 %v2540
    %2668 = vmatprep.subr.mxu0 0.0
    %2669 = vmatpush1.msra.mxu0 %v2541
    %2670 = vmatprep.subr.mxu0 0.0
    %2671 = vmatpush1.msra.mxu0 %v2542
    %2672 = vmatprep.subr.mxu0 0.0
    %2673 = vmatpush1.msra.mxu0 %v2543
    %2674 = vmatprep.subr.mxu0 0.0
    %2675 = vmatpush1.msra.mxu0 %v2544
    %2676 = vmatprep.subr.mxu0 0.0
    %2677 = vmatpush1.msra.mxu0 %v2545
    %2678 = vmatprep.mubr.f32.mxu0 %v2608
    %2679 = vmatmul.mubr.f32.gmra.mrb[0].mxu0 %v2600
    %v2680 = vpop.f32.mrb[0].mxu0
    %v2681 = vadd.f32 %v2590, %v2680
    %v2682 = vpop.f32.mrb[0].mxu0
    %2683 = vdwg.mxu0
    %2684 = vmatprep.subr.mxu0 0.0
    %2685 = vmatpush1.msra.mxu0 %v2546
    %2686 = vmatprep.subr.mxu0 0.0
    %2687 = vmatpush1.msra.mxu0 %v2547
    %2688 = vmatprep.subr.mxu0 0.0
    %2689 = vmatpush1.msra.mxu0 %v2548
    %2690 = vmatprep.subr.mxu0 0.0
    %2691 = vmatpush1.msra.mxu0 %v2549
    %2692 = vmatprep.subr.mxu0 0.0
    %2693 = vmatpush1.msra.mxu0 %v2550
    %2694 = vmatprep.subr.mxu0 0.0
    %2695 = vmatpush1.msra.mxu0 %v2551
    %2696 = vmatprep.subr.mxu0 0.0
    %2697 = vmatpush1.msra.mxu0 %v2552
    %2698 = vmatprep.subr.mxu0 0.0
    %2699 = vmatpush1.msra.mxu0 %v2553
    %2700 = vmatprep.subr.mxu0 0.0
    %2701 = vmatpush1.msra.mxu0 %v2554
    %2702 = vmatprep.subr.mxu0 0.0
    %2703 = vmatpush1.msra.mxu0 %v2555
    %2704 = vmatprep.subr.mxu0 0.0
    %2705 = vmatpush1.msra.mxu0 %v2556
    %2706 = vmatprep.subr.mxu0 0.0
    %2707 = vmatpush1.msra.mxu0 %v2557
    %2708 = vmatprep.subr.mxu0 0.0
    %2709 = vmatpush1.msra.mxu0 %v2558
    %2710 = vmatprep.subr.mxu0 0.0
    %2711 = vmatpush1.msra.mxu0 %v2559
    %2712 = vmatprep.subr.mxu0 0.0
    %2713 = vmatpush1.msra.mxu0 %v2560
    %2714 = vmatprep.subr.mxu0 0.0
    %2715 = vmatpush1.msra.mxu0 %v2561
    %2716 = vmatprep.subr.mxu0 0.0
    %2717 = vmatpush1.msra.mxu0 %v2562
    %2718 = vmatprep.subr.mxu0 0.0
    %2719 = vmatpush1.msra.mxu0 %v2563
    %2720 = vmatprep.subr.mxu0 0.0
    %2721 = vmatpush1.msra.mxu0 %v2564
    %2722 = vmatprep.subr.mxu0 0.0
    %2723 = vmatpush1.msra.mxu0 %v2565
    %2724 = vmatprep.subr.mxu0 0.0
    %2725 = vmatpush1.msra.mxu0 %v2566
    %2726 = vmatprep.subr.mxu0 0.0
    %2727 = vmatpush1.msra.mxu0 %v2567
    %2728 = vmatprep.subr.mxu0 0.0
    %2729 = vmatpush1.msra.mxu0 %v2568
    %2730 = vmatprep.subr.mxu0 0.0
    %2731 = vmatpush1.msra.mxu0 %v2569
    %2732 = vmatprep.subr.mxu0 0.0
    %2733 = vmatpush1.msra.mxu0 %v2570
    %2734 = vmatprep.subr.mxu0 0.0
    %2735 = vmatpush1.msra.mxu0 %v2571
    %2736 = vmatprep.subr.mxu0 0.0
    %2737 = vmatpush1.msra.mxu0 %v2572
    %2738 = vmatprep.subr.mxu0 0.0
    %2739 = vmatpush1.msra.mxu0 %v2573
    %2740 = vmatprep.subr.mxu0 0.0
    %2741 = vmatpush1.msra.mxu0 %v2574
    %2742 = vmatprep.subr.mxu0 0.0
    %2743 = vmatpush1.msra.mxu0 %v2575
    %2744 = vmatprep.subr.mxu0 0.0
    %2745 = vmatpush1.msra.mxu0 %v2576
    %2746 = vmatprep.subr.mxu0 0.0
    %2747 = vmatpush1.msra.mxu0 %v2577
    %2748 = vmatprep.mubr.f32.mxu0 %v2609
    %2749 = vmatmul.mubr.f32.gmra.mrb[0].mxu0 %v2607
    %v2750 = vpop.f32.mrb[0].mxu0
    %v2751 = vadd.f32 %v2681, %v2750
    %v2752 = vpop.f32.mrb[0].mxu0
    %2753 = vdwg.mxu0
    %v2754 = vlaneseq
    %v2755 = vshrl.u32 %v2754, 7
    %v2756 = vsub.s32 0, %v2755
    %v2757 = vrot.slane %v2584, %v2756
    %v2758 = vadd.f32 %v2751, %v2757
    %v2759 = vmax.f32 %v2758, 0.0
    %v2760 = vld [vmem:[#allocation22] sm:$0x1]
    %v2762 = vlaneseq
    %v2763 = vshrl.u32 %v2762, 7
    %v2764 = vsub.s32 0, %v2763
    %v2765 = vrot.slane %v2760, %v2764
    %v2767 = vmul.f32 %v2759, %v2765
    %vm2768 = vcmask 1041408
    %v2769 = vsel %vm2768, %v2767, 0.0
    %2770 = vadd.xlane.f32.xlu0 %v2769
    %v2771 = vpop.xlane.xlu0 %2770
    %v2772 = vld [vmem:[#allocation6] sm:$0x1]
    %v2774 = vlaneseq
    %v2775 = vshrl.u32 %v2774, 7
    %v2776 = vsub.s32 0, %v2775
    %v2777 = vrot.slane %v2772, %v2776
    %v2779 = vadd.f32 %v2771, %v2777
    %vm2780 = vcmask 1024
    %2781 = vst.msk [vmem:[%s11] sm:$0x3] %vm2780, %v2779
    // Predicated region
    $region86: #{tpu_custom_call.1} parent=1 // pred_check
      _
    $region87: #{tpu_custom_call.1} parent=1 // pred_check_branch
      %2783 = sbr.rel (0) target = $region89
    $region88: #{tpu_custom_call.1} parent=1 // pred_region
      _
    $region89: #{tpu_custom_call.1} parent=1 // pred_fallthru
      _
    // Predicated region
    $region90: #{tpu_custom_call.1} parent=1 // pred_check
      _
    $region91: #{tpu_custom_call.1} parent=1 // pred_check_branch
      %2785 = sbr.rel (0) target = $region93
    $region92: #{tpu_custom_call.1} parent=1 // pred_region
      _
    $region93: #{tpu_custom_call.1} parent=1 // pred_fallthru
      _
    %2786 = vsyncpa [#allocation8], 1
    %2787 = vsyncpa [#allocation12], 1
    %2788 = vsyncpa [#allocation15], 1
    %2789 = vsyncpa [#allocation18], 1
    %2790 = vsyncpa [#allocation21], 1
    %2791 = vsyncpa [#allocation9], 1

</llo_original>
